<compile_context>
chip_gen: v7x
topology: tpu7x:2x2x1
jax: 0.10.0
libtpu: 0.0.40
codegen_flags: <defaults>
</compile_context>

<pallas_src>
import functools

import jax
import jax.numpy as jnp
from jax import lax
from jax.experimental import pallas as pl
from jax.experimental.pallas import tpu as pltpu


# ----------------------------------------------------------------------------
# Kernel
# ----------------------------------------------------------------------------
def _bicond_kernel(Hp, Bb, T_txt, T_top, split_dirs,
                   text_ref, topic_ref, txt_mask_ref, top_mask_ref,
                   wt_ih_ref, wt_hh_ref, bt_ref,
                   wx_ih_ref, wx_hh_ref, bx_ref,
                   w_pred_ref, b_pred_ref,
                   out_ref,
                   xp_top_ref, xp_txt_ref):
    f32 = jnp.float32
    G2 = 2 * Hp           # width of one fused gate pair and of the h/c carries
    G4 = 4 * Hp

    # --- Hoisted input projections (bias folded in), off the serial path.
    xp_top_ref[...] = (
        jnp.dot(topic_ref[...], wt_ih_ref[...], preferred_element_type=f32)
        + bt_ref[...])
    xp_txt_ref[...] = (
        jnp.dot(text_ref[...], wx_ih_ref[...], preferred_element_type=f32)
        + bx_ref[...])

    def sigm(x):  # sigmoid via one tanh: single EUP op instead of exp+recip
        return 0.5 * jnp.tanh(0.5 * x) + 0.5

    def half_update(g, c_half):
        # g: (Bb, 4*Hp) gates [i|f|g|o] for one direction; c_half: (Bb, Hp)
        i_g = sigm(g[:, 0 * Hp:1 * Hp])
        f_g = sigm(g[:, 1 * Hp:2 * Hp])
        g_g = jnp.tanh(g[:, 2 * Hp:3 * Hp])
        o_g = sigm(g[:, 3 * Hp:4 * Hp])
        c_new = f_g * c_half + i_g * g_g
        return o_g * jnp.tanh(c_new), c_new

    def bidir_scan(T, xp_ref, mask_ref, w_hh_ref, h0, c0):
        """Fused fwd+rev length-masked LSTM recurrence. Carry layout [fwd|rev]."""

        def step(i, carry):
            h, c = carry                                   # (Bb, 2*Hp) f32 each
            r = pl.multiple_of(i * Bb, Bb)                 # sublane-aligned rows
            xp = xp_ref[pl.ds(r, Bb), :]                   # (Bb, 8*Hp) f32
            h_b = h.astype(jnp.bfloat16)                   # MXU is bf16-native
            if split_dirs:
                # Layout [i_f f_f g_f o_f | i_r f_r g_r o_r]; dense per-direction
                # recurrent matmuls (no zero-block FLOPs), all slices 128-aligned.
                g_f = xp[:, :G4] + jnp.dot(h_b[:, :Hp],
                                           w_hh_ref[pl.ds(0, Hp), :],
                                           preferred_element_type=f32)
                g_r = xp[:, G4:] + jnp.dot(h_b[:, Hp:],
                                           w_hh_ref[pl.ds(Hp, Hp), :],
                                           preferred_element_type=f32)
                hf, cf = half_update(g_f, c[:, :Hp])
                hr, cr = half_update(g_r, c[:, Hp:])
                h_new = jnp.concatenate([hf, hr], axis=-1)
                c_new = jnp.concatenate([cf, cr], axis=-1)
            else:
                # Interleaved layout [i_f|i_r | f_f|f_r | g_f|g_r | o_f|o_r];
                # one fused block-diagonal matmul (best latency for Hp=64).
                gates = xp + jnp.dot(h_b, w_hh_ref[...],
                                     preferred_element_type=f32)
                i_g = sigm(gates[:, 0 * G2:1 * G2])
                f_g = sigm(gates[:, 1 * G2:2 * G2])
                g_g = jnp.tanh(gates[:, 2 * G2:3 * G2])
                o_g = sigm(gates[:, 3 * G2:4 * G2])
                c_new = f_g * c + i_g * g_g
                h_new = o_g * jnp.tanh(c_new)
            # Precomputed {0,1} blend mask (bf16, exact): fwd half checks time i,
            # rev half checks time T-1-i. Leading-dim index -> no sublane slicing.
            m = mask_ref[i].astype(f32)                    # (Bb, 2*Hp)
            h = h + m * (h_new - h)
            c = c + m * (c_new - c)
            return h, c

        return lax.fori_loop(0, T, step, (h0, c0),
                             unroll=max(1, min(8, T)))     # bounded unroll

    zeros = jnp.zeros((Bb, G2), f32)
    # Topic bidirectional LSTM (zero initial state).
    h_top, c_top = bidir_scan(T_top, xp_top_ref, top_mask_ref, wt_hh_ref,
                              zeros, zeros)
    # Text bidirectional LSTM conditioned on topic final (h, c), per direction.
    h_txt, _ = bidir_scan(T_txt, xp_txt_ref, txt_mask_ref, wx_hh_ref,
                          h_top, c_top)

    # combo_fb_hm = [fwd | bwd] final hidden; padded hidden columns are exactly
    # zero and w_pred pads are zeroed, so they contribute nothing.
    out_ref[...] = (
        jnp.dot(h_txt, w_pred_ref[...], preferred_element_type=f32)
        + b_pred_ref[...])


# ----------------------------------------------------------------------------
# Wrapper-side packing helpers (plain XLA, one-time layout plumbing)
# ----------------------------------------------------------------------------
def _pack_bilstm(w_ih_f, w_hh_f, b_f, w_ih_r, w_hh_r, b_r, H, Hp, split_dirs):
    """Fuse the two directions of one bidirectional LSTM.

    The input weight expects the 'paired' input [x(t) | x(T-1-t)] (rows 0:E
    drive fwd gates, rows E:2E drive rev gates).

    split_dirs=False (Hp < 128): gate columns interleaved
        [i_f|i_r | f_f|f_r | g_f|g_r | o_f|o_r]  (each block Hp wide);
        W_hh is block-diagonal (2*Hp, 8*Hp) acting on [h_f | h_r].
    split_dirs=True (Hp >= 128): gate columns grouped
        [i_f f_f g_f o_f | i_r f_r g_r o_r];
        W_hh stacked dense (2*Hp, 4*Hp): rows 0:Hp = W_f, rows Hp:2*Hp = W_r.
    """
    E = w_ih_f.shape[0]
    G = 8 * Hp
    w_ih = jnp.zeros((2 * E, G), jnp.float32)
    b = jnp.zeros((1, G), jnp.float32)
    if split_dirs:
        w_hh = jnp.zeros((2 * Hp, 4 * Hp), jnp.float32)
    else:
        w_hh = jnp.zeros((2 * Hp, G), jnp.float32)
    for g in range(4):  # PyTorch gate order i, f, g, o
        if split_dirs:
            cf = g * Hp
            cr = 4 * Hp + g * Hp
            w_hh = w_hh.at[:H, cf:cf + H].set(w_hh_f[:, g * H:(g + 1) * H])
            w_hh = w_hh.at[Hp:Hp + H, cf:cf + H].set(w_hh_r[:, g * H:(g + 1) * H])
        else:
            cf = (2 * g) * Hp
            cr = (2 * g + 1) * Hp
            w_hh = w_hh.at[:H, cf:cf + H].set(w_hh_f[:, g * H:(g + 1) * H])
            w_hh = w_hh.at[Hp:Hp + H, cr:cr + H].set(w_hh_r[:, g * H:(g + 1) * H])
        w_ih = w_ih.at[:E, cf:cf + H].set(w_ih_f[:, g * H:(g + 1) * H])
        w_ih = w_ih.at[E:, cr:cr + H].set(w_ih_r[:, g * H:(g + 1) * H])
        b = b.at[:, cf:cf + H].set(b_f[:, g * H:(g + 1) * H])
        b = b.at[:, cr:cr + H].set(b_r[:, g * H:(g + 1) * H])
    return w_ih, w_hh, b


def _prep_sequence(x_bte, lengths, Bb, nb, Hp):
    """Paired time-major input + per-step bf16 blend masks, batch-blocked.

    x_bte: (B_pad, T, E) f32; lengths: (B_pad,) int32.
    Returns x_blk (nb, T*Bb, 2E) bf16 and mask_blk (nb, T, Bb, 2*Hp) bf16.
    """
    B_pad, T, E = x_bte.shape
    xt = jnp.transpose(x_bte, (1, 0, 2))                    # (T, B_pad, E)
    x_pair = jnp.concatenate([xt, xt[::-1]], axis=-1)       # [x(t) | x(T-1-t)]
    x_blk = (x_pair.reshape(T, nb, Bb, 2 * E)
                   .transpose(1, 0, 2, 3)
                   .reshape(nb, T * Bb, 2 * E)
                   .astype(jnp.bfloat16))

    steps = jnp.arange(T, dtype=jnp.int32)
    fwd = (steps[:, None] < lengths[None, :]).astype(jnp.float32)            # t=i
    rev = ((T - 1 - steps)[:, None] < lengths[None, :]).astype(jnp.float32)  # t=T-1-i
    mask = jnp.concatenate(
        [jnp.broadcast_to(fwd[:, :, None], (T, B_pad, Hp)),
         jnp.broadcast_to(rev[:, :, None], (T, B_pad, Hp))], axis=-1)
    mask_blk = (mask.reshape(T, nb, Bb, 2 * Hp)
                    .transpose(1, 0, 2, 3)
                    .astype(jnp.bfloat16))                   # {0,1} exact in bf16
    return x_blk, mask_blk


# ----------------------------------------------------------------------------
# Forward
# ----------------------------------------------------------------------------
def bicond_lstm_forward(params, text_embeddings, topic_embeddings,
                        text_length, topic_length, batch_block=64):
    """text/topic embeddings: (B, T, E) batch-first; lengths: (B,) int."""
    B, T_txt, E_txt = text_embeddings.shape
    _, T_top, E_top = topic_embeddings.shape
    H = params["wt_hh_f"].shape[0]
    Hp = ((H + 63) // 64) * 64            # pad hidden so gate slices are aligned
    O = params["w_pred"].shape[1]
    split_dirs = Hp >= 128                # dense per-direction matmuls for big H

    # Adaptive batch block: as large as possible (MXU M-utilization) up to cap.
    B8 = ((B + 7) // 8) * 8
    Bb = max(8, min(((batch_block + 7) // 8) * 8, B8))
    nb = -(-B // Bb)
    B_pad = nb * Bb

    def pad_b(a):
        return jnp.pad(a, ((0, B_pad - B),) + ((0, 0),) * (a.ndim - 1))

    text_p = pad_b(text_embeddings.astype(jnp.float32))
    topic_p = pad_b(topic_embeddings.astype(jnp.float32))
    txt_len = pad_b(text_length.astype(jnp.int32))
    top_len = pad_b(topic_length.astype(jnp.int32))

    text_blk, txt_mask = _prep_sequence(text_p, txt_len, Bb, nb, Hp)
    topic_blk, top_mask = _prep_sequence(topic_p, top_len, Bb, nb, Hp)

    wt_ih, wt_hh, bt = _pack_bilstm(
        params["wt_ih_f"], params["wt_hh_f"], params["bt_f"],
        params["wt_ih_r"], params["wt_hh_r"], params["bt_r"], H, Hp, split_dirs)
    wx_ih, wx_hh, bx = _pack_bilstm(
        params["wx_ih_f"], params["wx_hh_f"], params["bx_f"],
        params["wx_ih_r"], params["wx_hh_r"], params["bx_r"], H, Hp, split_dirs)

    w_pred = jnp.zeros((2 * Hp, O), jnp.float32)
    w_pred = w_pred.at[:H].set(params["w_pred"][:H])
    w_pred = w_pred.at[Hp:Hp + H].set(params["w_pred"][H:2 * H])
    b_pred = params["b_pred"].astype(jnp.float32).reshape(1, O)

    # bf16 MXU operands: hoisted input projection AND the serial recurrent
    # matmul (accumulation stays f32; gate/blend math stays f32).
    wt_ih = wt_ih.astype(jnp.bfloat16)
    wx_ih = wx_ih.astype(jnp.bfloat16)
    wt_hh = wt_hh.astype(jnp.bfloat16)
    wx_hh = wx_hh.astype(jnp.bfloat16)

    # Explicit scoped-VMEM limit (v5e default is only 16 MiB): actual buffer set
    # (double-buffered inputs, weights, scratches, output block) + 50% headroom.
    vmem_needed = 0
    for a in (text_blk, topic_blk, txt_mask, top_mask):
        vmem_needed += 2 * (a.size // nb) * a.dtype.itemsize
    for a in (wt_ih, wt_hh, bt, wx_ih, wx_hh, bx, w_pred, b_pred):
        vmem_needed += 2 * a.size * a.dtype.itemsize
    vmem_needed += (T_top * Bb + T_txt * Bb) * 8 * Hp * 4     # f32 xp scratches
    vmem_needed += 2 * Bb * O * 4                             # output block
    vmem_limit_bytes = int(min(max(vmem_needed * 3 // 2 + (4 << 20), 16 << 20),
                               128 << 20))

    kernel = functools.partial(_bicond_kernel, Hp, Bb, T_txt, T_top, split_dirs)

    out = pl.pallas_call(
        kernel,
        out_shape=jax.ShapeDtypeStruct((nb, Bb, O), jnp.float32),
        grid=(nb,),
        in_specs=[
            pl.BlockSpec((None, T_txt * Bb, 2 * E_txt), lambda g: (g, 0, 0)),
            pl.BlockSpec((None, T_top * Bb, 2 * E_top), lambda g: (g, 0, 0)),
            pl.BlockSpec((None, T_txt, Bb, 2 * Hp), lambda g: (g, 0, 0, 0)),
            pl.BlockSpec((None, T_top, Bb, 2 * Hp), lambda g: (g, 0, 0, 0)),
            pl.BlockSpec(wt_ih.shape, lambda g: (0, 0)),
            pl.BlockSpec(wt_hh.shape, lambda g: (0, 0)),
            pl.BlockSpec(bt.shape, lambda g: (0, 0)),
            pl.BlockSpec(wx_ih.shape, lambda g: (0, 0)),
            pl.BlockSpec(wx_hh.shape, lambda g: (0, 0)),
            pl.BlockSpec(bx.shape, lambda g: (0, 0)),
            pl.BlockSpec(w_pred.shape, lambda g: (0, 0)),
            pl.BlockSpec(b_pred.shape, lambda g: (0, 0)),
        ],
        out_specs=pl.BlockSpec((None, Bb, O), lambda g: (g, 0, 0)),
        scratch_shapes=[
            pltpu.VMEM((T_top * Bb, 8 * Hp), jnp.float32),   # topic input proj
            pltpu.VMEM((T_txt * Bb, 8 * Hp), jnp.float32),   # text input proj
        ],
        compiler_params=pltpu.CompilerParams(
            dimension_semantics=("parallel",),
            vmem_limit_bytes=vmem_limit_bytes),
    )(text_blk, topic_blk, txt_mask, top_mask,
      wt_ih, wt_hh, bt, wx_ih, wx_hh, bx, w_pred, b_pred)

    return out.reshape(B_pad, O)[:B]


# ----------------------------------------------------------------------------
# Parameter init (deterministic, mirrors PyTorch U(-1/sqrt(H), 1/sqrt(H)))
# ----------------------------------------------------------------------------
def init_params(key, hidden_dim, text_input_dim, topic_input_dim, num_labels=3):
    output_dim = 1 if num_labels == 2 else num_labels
    keys = jax.random.split(key, 18)
    kit = iter(keys)

    def u(k, shape, bound):
        return jax.random.uniform(k, shape, jnp.float32, -bound, bound)

    bound = 1.0 / (hidden_dim ** 0.5)

    def lstm_dir(in_dim):
        w_ih = u(next(kit), (in_dim, 4 * hidden_dim), bound)       # pre-transposed
        w_hh = u(next(kit), (hidden_dim, 4 * hidden_dim), bound)   # pre-transposed
        b_ih = u(next(kit), (1, 4 * hidden_dim), bound)
        b_hh = u(next(kit), (1, 4 * hidden_dim), bound)
        return w_ih, w_hh, b_ih + b_hh                             # biases combined

    params = {}
    params["wt_ih_f"], params["wt_hh_f"], params["bt_f"] = lstm_dir(topic_input_dim)
    params["wt_ih_r"], params["wt_hh_r"], params["bt_r"] = lstm_dir(topic_input_dim)
    params["wx_ih_f"], params["wx_hh_f"], params["bx_f"] = lstm_dir(text_input_dim)
    params["wx_ih_r"], params["wx_hh_r"], params["bx_r"] = lstm_dir(text_input_dim)

    bound_p = 1.0 / ((2 * hidden_dim) ** 0.5)
    params["w_pred"] = u(next(kit), (2 * hidden_dim, output_dim), bound_p)
    params["b_pred"] = u(next(kit), (1, output_dim), bound_p)
    return params


if __name__ == "__main__":
    hidden_dim = 32
    text_input_dim = 16
    topic_input_dim = 16
    num_labels = 3
    B, T_txt, T_top = 2, 8, 6

    key = jax.random.PRNGKey(0)
    k_param, k_text, k_topic = jax.random.split(key, 3)

    params = init_params(k_param, hidden_dim, text_input_dim, topic_input_dim,
                         num_labels)
    text = jax.random.normal(k_text, (B, T_txt, text_input_dim), jnp.float32)
    topic = jax.random.normal(k_topic, (B, T_top, topic_input_dim), jnp.float32)
    text_length = jnp.array([8, 5], dtype=jnp.int32)
    topic_length = jnp.array([6, 3], dtype=jnp.int32)

    y_pred = bicond_lstm_forward(params, text, topic, text_length, topic_length)
    jax.block_until_ready(y_pred)
    assert y_pred.shape == (B, num_labels), y_pred.shape
    print("KERNEL_OK")
</pallas_src>

<mosaic_0001>
module attributes {stable_mosaic.version = 11 : i64} {
  func.func @_bicond_kernel(%arg0: i32, %arg1: memref<1x64x32xbf16, #tpu.memory_space<vmem>>, %arg2: memref<1x48x32xbf16, #tpu.memory_space<vmem>>, %arg3: memref<1x8x8x128xbf16, #tpu.memory_space<vmem>>, %arg4: memref<1x6x8x128xbf16, #tpu.memory_space<vmem>>, %arg5: memref<32x512xbf16, #tpu.memory_space<vmem>>, %arg6: memref<128x512xbf16, #tpu.memory_space<vmem>>, %arg7: memref<1x512xf32, #tpu.memory_space<vmem>>, %arg8: memref<32x512xbf16, #tpu.memory_space<vmem>>, %arg9: memref<128x512xbf16, #tpu.memory_space<vmem>>, %arg10: memref<1x512xf32, #tpu.memory_space<vmem>>, %arg11: memref<128x3xf32, #tpu.memory_space<vmem>>, %arg12: memref<1x3xf32, #tpu.memory_space<vmem>>, %arg13: memref<1x8x3xf32, #tpu.memory_space<vmem>>, %arg14: memref<48x512xf32, #tpu.memory_space<vmem>>, %arg15: memref<64x512xf32, #tpu.memory_space<vmem>>) attributes {dimension_semantics = [#tpu.dimension_semantics<parallel>], iteration_bounds = array<i64: 1>, scalar_prefetch = 0 : i64, scratch_operands = 2 : i64, tpu.core_type = #tpu.core_type<tc>, window_params = [{transform_indices = @transform_0, window_bounds = array<i64: 1, 64, 32>}, {transform_indices = @transform_1, window_bounds = array<i64: 1, 48, 32>}, {transform_indices = @transform_2, window_bounds = array<i64: 1, 8, 8, 128>}, {transform_indices = @transform_3, window_bounds = array<i64: 1, 6, 8, 128>}, {pipeline_mode = #tpu.pipeline_mode<synchronous>, transform_indices = @transform_4, window_bounds = array<i64: 32, 512>}, {pipeline_mode = #tpu.pipeline_mode<synchronous>, transform_indices = @transform_5, window_bounds = array<i64: 128, 512>}, {pipeline_mode = #tpu.pipeline_mode<synchronous>, transform_indices = @transform_6, window_bounds = array<i64: 1, 512>}, {pipeline_mode = #tpu.pipeline_mode<synchronous>, transform_indices = @transform_7, window_bounds = array<i64: 32, 512>}, {pipeline_mode = #tpu.pipeline_mode<synchronous>, transform_indices = @transform_8, window_bounds = array<i64: 128, 512>}, {pipeline_mode = #tpu.pipeline_mode<synchronous>, transform_indices = @transform_9, window_bounds = array<i64: 1, 512>}, {pipeline_mode = #tpu.pipeline_mode<synchronous>, transform_indices = @transform_10, window_bounds = array<i64: 128, 3>}, {pipeline_mode = #tpu.pipeline_mode<synchronous>, transform_indices = @transform_11, window_bounds = array<i64: 1, 3>}, {transform_indices = @transform_12, window_bounds = array<i64: 1, 8, 3>}]} {
    %c0 = arith.constant 0 : index
    %c0_0 = arith.constant 0 : index
    %c0_1 = arith.constant 0 : index
    %0 = vector.load %arg2[%c0, %c0_0, %c0_1] : memref<1x48x32xbf16, #tpu.memory_space<vmem>>, vector<1x48x32xbf16>
    %1 = vector.shape_cast %0 : vector<1x48x32xbf16> to vector<48x32xbf16>
    %c0_2 = arith.constant 0 : index
    %c0_3 = arith.constant 0 : index
    %2 = vector.load %arg5[%c0_2, %c0_3] : memref<32x512xbf16, #tpu.memory_space<vmem>>, vector<32x512xbf16>
    %cst = arith.constant dense<0.000000e+00> : vector<48x512xf32>
    %3 = tpu.matmul %1, %2, %cst {dimension_numbers = #tpu.dot_dimension_numbers<[1], [0], [0], [1], [0, 0, 1, 1], [], []>} : vector<48x32xbf16>, vector<32x512xbf16>, vector<48x512xf32> -> vector<48x512xf32>
    %c0_4 = arith.constant 0 : index
    %c0_5 = arith.constant 0 : index
    %4 = vector.load %arg7[%c0_4, %c0_5] : memref<1x512xf32, #tpu.memory_space<vmem>>, vector<1x512xf32>
    %5 = vector.broadcast %4 : vector<1x512xf32> to vector<48x512xf32>
    %6 = arith.addf %3, %5 : vector<48x512xf32>
    %c0_6 = arith.constant 0 : index
    %c0_7 = arith.constant 0 : index
    %7 = vector.load %arg14[%c0_6, %c0_7] : memref<48x512xf32, #tpu.memory_space<vmem>>, vector<48x512xf32>
    tpu.vector_store %arg14[%c0_6, %c0_7], %6 {strides = array<i32>} : memref<48x512xf32, #tpu.memory_space<vmem>>, vector<48x512xf32>,
    %c0_8 = arith.constant 0 : index
    %c0_9 = arith.constant 0 : index
    %c0_10 = arith.constant 0 : index
    %8 = vector.load %arg1[%c0_8, %c0_9, %c0_10] : memref<1x64x32xbf16, #tpu.memory_space<vmem>>, vector<1x64x32xbf16>
    %9 = vector.shape_cast %8 : vector<1x64x32xbf16> to vector<64x32xbf16>
    %c0_11 = arith.constant 0 : index
    %c0_12 = arith.constant 0 : index
    %10 = vector.load %arg8[%c0_11, %c0_12] : memref<32x512xbf16, #tpu.memory_space<vmem>>, vector<32x512xbf16>
    %cst_13 = arith.constant dense<0.000000e+00> : vector<64x512xf32>
    %11 = tpu.matmul %9, %10, %cst_13 {dimension_numbers = #tpu.dot_dimension_numbers<[1], [0], [0], [1], [0, 0, 1, 1], [], []>} : vector<64x32xbf16>, vector<32x512xbf16>, vector<64x512xf32> -> vector<64x512xf32>
    %c0_14 = arith.constant 0 : index
    %c0_15 = arith.constant 0 : index
    %12 = vector.load %arg10[%c0_14, %c0_15] : memref<1x512xf32, #tpu.memory_space<vmem>>, vector<1x512xf32>
    %13 = vector.broadcast %12 : vector<1x512xf32> to vector<64x512xf32>
    %14 = arith.addf %11, %13 : vector<64x512xf32>
    %c0_16 = arith.constant 0 : index
    %c0_17 = arith.constant 0 : index
    %15 = vector.load %arg15[%c0_16, %c0_17] : memref<64x512xf32, #tpu.memory_space<vmem>>, vector<64x512xf32>
    tpu.vector_store %arg15[%c0_16, %c0_17], %14 {strides = array<i32>} : memref<64x512xf32, #tpu.memory_space<vmem>>, vector<64x512xf32>,
    %cst_18 = arith.constant 0.000000e+00 : f32
    %16 = vector.broadcast %cst_18 : f32 to vector<8x128xf32>
    %c0_i32 = arith.constant 0 : i32
    %c8_i32 = arith.constant 8 : i32
    %17 = arith.muli %c0_i32, %c8_i32 : i32
    %18 = tpu.assume_multiple %17, 8 : i32
    %19 = arith.index_cast %18 : i32 to index
    %c0_19 = arith.constant 0 : index
    %20 = vector.load %arg14[%19, %c0_19] : memref<48x512xf32, #tpu.memory_space<vmem>>, vector<8x512xf32>
    %21 = arith.truncf %16 : vector<8x128xf32> to vector<8x128xbf16>
    %c0_20 = arith.constant 0 : index
    %c0_21 = arith.constant 0 : index
    %22 = vector.load %arg6[%c0_20, %c0_21] : memref<128x512xbf16, #tpu.memory_space<vmem>>, vector<128x512xbf16>
    %cst_22 = arith.constant dense<0.000000e+00> : vector<8x512xf32>
    %23 = tpu.matmul %21, %22, %cst_22 {dimension_numbers = #tpu.dot_dimension_numbers<[1], [0], [0], [1], [0, 0, 1, 1], [], []>} : vector<8x128xbf16>, vector<128x512xbf16>, vector<8x512xf32> -> vector<8x512xf32>
    %24 = arith.addf %20, %23 : vector<8x512xf32>
    %25 = vector.extract_strided_slice %24 {offsets = [0, 0], sizes = [8, 128], strides = [1, 1]} : vector<8x512xf32> to vector<8x128xf32>
    %cst_23 = arith.constant 5.000000e-01 : f32
    %26 = vector.broadcast %cst_23 : f32 to vector<8x128xf32>
    %27 = arith.mulf %26, %25 : vector<8x128xf32>
    %28 = math.tanh %27 : vector<8x128xf32>
    %cst_24 = arith.constant 5.000000e-01 : f32
    %29 = vector.broadcast %cst_24 : f32 to vector<8x128xf32>
    %30 = arith.mulf %29, %28 : vector<8x128xf32>
    %cst_25 = arith.constant 5.000000e-01 : f32
    %31 = vector.broadcast %cst_25 : f32 to vector<8x128xf32>
    %32 = arith.addf %30, %31 : vector<8x128xf32>
    %33 = vector.extract_strided_slice %24 {offsets = [0, 128], sizes = [8, 128], strides = [1, 1]} : vector<8x512xf32> to vector<8x128xf32>
    %cst_26 = arith.constant 5.000000e-01 : f32
    %34 = vector.broadcast %cst_26 : f32 to vector<8x128xf32>
    %35 = arith.mulf %34, %33 : vector<8x128xf32>
    %36 = math.tanh %35 : vector<8x128xf32>
    %cst_27 = arith.constant 5.000000e-01 : f32
    %37 = vector.broadcast %cst_27 : f32 to vector<8x128xf32>
    %38 = arith.mulf %37, %36 : vector<8x128xf32>
    %cst_28 = arith.constant 5.000000e-01 : f32
    %39 = vector.broadcast %cst_28 : f32 to vector<8x128xf32>
    %40 = arith.addf %38, %39 : vector<8x128xf32>
    %41 = vector.extract_strided_slice %24 {offsets = [0, 256], sizes = [8, 128], strides = [1, 1]} : vector<8x512xf32> to vector<8x128xf32>
    %42 = math.tanh %41 : vector<8x128xf32>
    %43 = vector.extract_strided_slice %24 {offsets = [0, 384], sizes = [8, 128], strides = [1, 1]} : vector<8x512xf32> to vector<8x128xf32>
    %cst_29 = arith.constant 5.000000e-01 : f32
    %44 = vector.broadcast %cst_29 : f32 to vector<8x128xf32>
    %45 = arith.mulf %44, %43 : vector<8x128xf32>
    %46 = math.tanh %45 : vector<8x128xf32>
    %cst_30 = arith.constant 5.000000e-01 : f32
    %47 = vector.broadcast %cst_30 : f32 to vector<8x128xf32>
    %48 = arith.mulf %47, %46 : vector<8x128xf32>
    %cst_31 = arith.constant 5.000000e-01 : f32
    %49 = vector.broadcast %cst_31 : f32 to vector<8x128xf32>
    %50 = arith.addf %48, %49 : vector<8x128xf32>
    %51 = arith.mulf %40, %16 : vector<8x128xf32>
    %52 = arith.mulf %32, %42 : vector<8x128xf32>
    %53 = arith.addf %51, %52 : vector<8x128xf32>
    %54 = math.tanh %53 : vector<8x128xf32>
    %55 = arith.mulf %50, %54 : vector<8x128xf32>
    %c0_32 = arith.constant 0 : index
    %56 = arith.index_cast %c0_i32 : i32 to index
    %c0_33 = arith.constant 0 : index
    %c0_34 = arith.constant 0 : index
    %57 = vector.load %arg4[%c0_32, %56, %c0_33, %c0_34] : memref<1x6x8x128xbf16, #tpu.memory_space<vmem>>, vector<1x1x8x128xbf16>
    %58 = vector.shape_cast %57 : vector<1x1x8x128xbf16> to vector<8x128xbf16>
    %59 = arith.extf %58 : vector<8x128xbf16> to vector<8x128xf32>
    %60 = arith.subf %55, %16 : vector<8x128xf32>
    %61 = arith.mulf %59, %60 : vector<8x128xf32>
    %62 = arith.addf %16, %61 : vector<8x128xf32>
    %63 = arith.subf %53, %16 : vector<8x128xf32>
    %64 = arith.mulf %59, %63 : vector<8x128xf32>
    %65 = arith.addf %16, %64 : vector<8x128xf32>
    %c1_i32 = arith.constant 1 : i32
    %c8_i32_35 = arith.constant 8 : i32
    %66 = arith.muli %c1_i32, %c8_i32_35 : i32
    %67 = tpu.assume_multiple %66, 8 : i32
    %68 = arith.index_cast %67 : i32 to index
    %c0_36 = arith.constant 0 : index
    %69 = vector.load %arg14[%68, %c0_36] : memref<48x512xf32, #tpu.memory_space<vmem>>, vector<8x512xf32>
    %70 = arith.truncf %62 : vector<8x128xf32> to vector<8x128xbf16>
    %c0_37 = arith.constant 0 : index
    %c0_38 = arith.constant 0 : index
    %71 = vector.load %arg6[%c0_37, %c0_38] : memref<128x512xbf16, #tpu.memory_space<vmem>>, vector<128x512xbf16>
    %cst_39 = arith.constant dense<0.000000e+00> : vector<8x512xf32>
    %72 = tpu.matmul %70, %71, %cst_39 {dimension_numbers = #tpu.dot_dimension_numbers<[1], [0], [0], [1], [0, 0, 1, 1], [], []>} : vector<8x128xbf16>, vector<128x512xbf16>, vector<8x512xf32> -> vector<8x512xf32>
    %73 = arith.addf %69, %72 : vector<8x512xf32>
    %74 = vector.extract_strided_slice %73 {offsets = [0, 0], sizes = [8, 128], strides = [1, 1]} : vector<8x512xf32> to vector<8x128xf32>
    %cst_40 = arith.constant 5.000000e-01 : f32
    %75 = vector.broadcast %cst_40 : f32 to vector<8x128xf32>
    %76 = arith.mulf %75, %74 : vector<8x128xf32>
    %77 = math.tanh %76 : vector<8x128xf32>
    %cst_41 = arith.constant 5.000000e-01 : f32
    %78 = vector.broadcast %cst_41 : f32 to vector<8x128xf32>
    %79 = arith.mulf %78, %77 : vector<8x128xf32>
    %cst_42 = arith.constant 5.000000e-01 : f32
    %80 = vector.broadcast %cst_42 : f32 to vector<8x128xf32>
    %81 = arith.addf %79, %80 : vector<8x128xf32>
    %82 = vector.extract_strided_slice %73 {offsets = [0, 128], sizes = [8, 128], strides = [1, 1]} : vector<8x512xf32> to vector<8x128xf32>
    %cst_43 = arith.constant 5.000000e-01 : f32
    %83 = vector.broadcast %cst_43 : f32 to vector<8x128xf32>
    %84 = arith.mulf %83, %82 : vector<8x128xf32>
    %85 = math.tanh %84 : vector<8x128xf32>
    %cst_44 = arith.constant 5.000000e-01 : f32
    %86 = vector.broadcast %cst_44 : f32 to vector<8x128xf32>
    %87 = arith.mulf %86, %85 : vector<8x128xf32>
    %cst_45 = arith.constant 5.000000e-01 : f32
    %88 = vector.broadcast %cst_45 : f32 to vector<8x128xf32>
    %89 = arith.addf %87, %88 : vector<8x128xf32>
    %90 = vector.extract_strided_slice %73 {offsets = [0, 256], sizes = [8, 128], strides = [1, 1]} : vector<8x512xf32> to vector<8x128xf32>
    %91 = math.tanh %90 : vector<8x128xf32>
    %92 = vector.extract_strided_slice %73 {offsets = [0, 384], sizes = [8, 128], strides = [1, 1]} : vector<8x512xf32> to vector<8x128xf32>
    %cst_46 = arith.constant 5.000000e-01 : f32
    %93 = vector.broadcast %cst_46 : f32 to vector<8x128xf32>
    %94 = arith.mulf %93, %92 : vector<8x128xf32>
    %95 = math.tanh %94 : vector<8x128xf32>
    %cst_47 = arith.constant 5.000000e-01 : f32
    %96 = vector.broadcast %cst_47 : f32 to vector<8x128xf32>
    %97 = arith.mulf %96, %95 : vector<8x128xf32>
    %cst_48 = arith.constant 5.000000e-01 : f32
    %98 = vector.broadcast %cst_48 : f32 to vector<8x128xf32>
    %99 = arith.addf %97, %98 : vector<8x128xf32>
    %100 = arith.mulf %89, %65 : vector<8x128xf32>
    %101 = arith.mulf %81, %91 : vector<8x128xf32>
    %102 = arith.addf %100, %101 : vector<8x128xf32>
    %103 = math.tanh %102 : vector<8x128xf32>
    %104 = arith.mulf %99, %103 : vector<8x128xf32>
    %c0_49 = arith.constant 0 : index
    %105 = arith.index_cast %c1_i32 : i32 to index
    %c0_50 = arith.constant 0 : index
    %c0_51 = arith.constant 0 : index
    %106 = vector.load %arg4[%c0_49, %105, %c0_50, %c0_51] : memref<1x6x8x128xbf16, #tpu.memory_space<vmem>>, vector<1x1x8x128xbf16>
    %107 = vector.shape_cast %106 : vector<1x1x8x128xbf16> to vector<8x128xbf16>
    %108 = arith.extf %107 : vector<8x128xbf16> to vector<8x128xf32>
    %109 = arith.subf %104, %62 : vector<8x128xf32>
    %110 = arith.mulf %108, %109 : vector<8x128xf32>
    %111 = arith.addf %62, %110 : vector<8x128xf32>
    %112 = arith.subf %102, %65 : vector<8x128xf32>
    %113 = arith.mulf %108, %112 : vector<8x128xf32>
    %114 = arith.addf %65, %113 : vector<8x128xf32>
    %c2_i32 = arith.constant 2 : i32
    %c8_i32_52 = arith.constant 8 : i32
    %115 = arith.muli %c2_i32, %c8_i32_52 : i32
    %116 = tpu.assume_multiple %115, 8 : i32
    %117 = arith.index_cast %116 : i32 to index
    %c0_53 = arith.constant 0 : index
    %118 = vector.load %arg14[%117, %c0_53] : memref<48x512xf32, #tpu.memory_space<vmem>>, vector<8x512xf32>
    %119 = arith.truncf %111 : vector<8x128xf32> to vector<8x128xbf16>
    %c0_54 = arith.constant 0 : index
    %c0_55 = arith.constant 0 : index
    %120 = vector.load %arg6[%c0_54, %c0_55] : memref<128x512xbf16, #tpu.memory_space<vmem>>, vector<128x512xbf16>
    %cst_56 = arith.constant dense<0.000000e+00> : vector<8x512xf32>
    %121 = tpu.matmul %119, %120, %cst_56 {dimension_numbers = #tpu.dot_dimension_numbers<[1], [0], [0], [1], [0, 0, 1, 1], [], []>} : vector<8x128xbf16>, vector<128x512xbf16>, vector<8x512xf32> -> vector<8x512xf32>
    %122 = arith.addf %118, %121 : vector<8x512xf32>
    %123 = vector.extract_strided_slice %122 {offsets = [0, 0], sizes = [8, 128], strides = [1, 1]} : vector<8x512xf32> to vector<8x128xf32>
    %cst_57 = arith.constant 5.000000e-01 : f32
    %124 = vector.broadcast %cst_57 : f32 to vector<8x128xf32>
    %125 = arith.mulf %124, %123 : vector<8x128xf32>
    %126 = math.tanh %125 : vector<8x128xf32>
    %cst_58 = arith.constant 5.000000e-01 : f32
    %127 = vector.broadcast %cst_58 : f32 to vector<8x128xf32>
    %128 = arith.mulf %127, %126 : vector<8x128xf32>
    %cst_59 = arith.constant 5.000000e-01 : f32
    %129 = vector.broadcast %cst_59 : f32 to vector<8x128xf32>
    %130 = arith.addf %128, %129 : vector<8x128xf32>
    %131 = vector.extract_strided_slice %122 {offsets = [0, 128], sizes = [8, 128], strides = [1, 1]} : vector<8x512xf32> to vector<8x128xf32>
    %cst_60 = arith.constant 5.000000e-01 : f32
    %132 = vector.broadcast %cst_60 : f32 to vector<8x128xf32>
    %133 = arith.mulf %132, %131 : vector<8x128xf32>
    %134 = math.tanh %133 : vector<8x128xf32>
    %cst_61 = arith.constant 5.000000e-01 : f32
    %135 = vector.broadcast %cst_61 : f32 to vector<8x128xf32>
    %136 = arith.mulf %135, %134 : vector<8x128xf32>
    %cst_62 = arith.constant 5.000000e-01 : f32
    %137 = vector.broadcast %cst_62 : f32 to vector<8x128xf32>
    %138 = arith.addf %136, %137 : vector<8x128xf32>
    %139 = vector.extract_strided_slice %122 {offsets = [0, 256], sizes = [8, 128], strides = [1, 1]} : vector<8x512xf32> to vector<8x128xf32>
    %140 = math.tanh %139 : vector<8x128xf32>
    %141 = vector.extract_strided_slice %122 {offsets = [0, 384], sizes = [8, 128], strides = [1, 1]} : vector<8x512xf32> to vector<8x128xf32>
    %cst_63 = arith.constant 5.000000e-01 : f32
    %142 = vector.broadcast %cst_63 : f32 to vector<8x128xf32>
    %143 = arith.mulf %142, %141 : vector<8x128xf32>
    %144 = math.tanh %143 : vector<8x128xf32>
    %cst_64 = arith.constant 5.000000e-01 : f32
    %145 = vector.broadcast %cst_64 : f32 to vector<8x128xf32>
    %146 = arith.mulf %145, %144 : vector<8x128xf32>
    %cst_65 = arith.constant 5.000000e-01 : f32
    %147 = vector.broadcast %cst_65 : f32 to vector<8x128xf32>
    %148 = arith.addf %146, %147 : vector<8x128xf32>
    %149 = arith.mulf %138, %114 : vector<8x128xf32>
    %150 = arith.mulf %130, %140 : vector<8x128xf32>
    %151 = arith.addf %149, %150 : vector<8x128xf32>
    %152 = math.tanh %151 : vector<8x128xf32>
    %153 = arith.mulf %148, %152 : vector<8x128xf32>
    %c0_66 = arith.constant 0 : index
    %154 = arith.index_cast %c2_i32 : i32 to index
    %c0_67 = arith.constant 0 : index
    %c0_68 = arith.constant 0 : index
    %155 = vector.load %arg4[%c0_66, %154, %c0_67, %c0_68] : memref<1x6x8x128xbf16, #tpu.memory_space<vmem>>, vector<1x1x8x128xbf16>
    %156 = vector.shape_cast %155 : vector<1x1x8x128xbf16> to vector<8x128xbf16>
    %157 = arith.extf %156 : vector<8x128xbf16> to vector<8x128xf32>
    %158 = arith.subf %153, %111 : vector<8x128xf32>
    %159 = arith.mulf %157, %158 : vector<8x128xf32>
    %160 = arith.addf %111, %159 : vector<8x128xf32>
    %161 = arith.subf %151, %114 : vector<8x128xf32>
    %162 = arith.mulf %157, %161 : vector<8x128xf32>
    %163 = arith.addf %114, %162 : vector<8x128xf32>
    %c3_i32 = arith.constant 3 : i32
    %c8_i32_69 = arith.constant 8 : i32
    %164 = arith.muli %c3_i32, %c8_i32_69 : i32
    %165 = tpu.assume_multiple %164, 8 : i32
    %166 = arith.index_cast %165 : i32 to index
    %c0_70 = arith.constant 0 : index
    %167 = vector.load %arg14[%166, %c0_70] : memref<48x512xf32, #tpu.memory_space<vmem>>, vector<8x512xf32>
    %168 = arith.truncf %160 : vector<8x128xf32> to vector<8x128xbf16>
    %c0_71 = arith.constant 0 : index
    %c0_72 = arith.constant 0 : index
    %169 = vector.load %arg6[%c0_71, %c0_72] : memref<128x512xbf16, #tpu.memory_space<vmem>>, vector<128x512xbf16>
    %cst_73 = arith.constant dense<0.000000e+00> : vector<8x512xf32>
    %170 = tpu.matmul %168, %169, %cst_73 {dimension_numbers = #tpu.dot_dimension_numbers<[1], [0], [0], [1], [0, 0, 1, 1], [], []>} : vector<8x128xbf16>, vector<128x512xbf16>, vector<8x512xf32> -> vector<8x512xf32>
    %171 = arith.addf %167, %170 : vector<8x512xf32>
    %172 = vector.extract_strided_slice %171 {offsets = [0, 0], sizes = [8, 128], strides = [1, 1]} : vector<8x512xf32> to vector<8x128xf32>
    %cst_74 = arith.constant 5.000000e-01 : f32
    %173 = vector.broadcast %cst_74 : f32 to vector<8x128xf32>
    %174 = arith.mulf %173, %172 : vector<8x128xf32>
    %175 = math.tanh %174 : vector<8x128xf32>
    %cst_75 = arith.constant 5.000000e-01 : f32
    %176 = vector.broadcast %cst_75 : f32 to vector<8x128xf32>
    %177 = arith.mulf %176, %175 : vector<8x128xf32>
    %cst_76 = arith.constant 5.000000e-01 : f32
    %178 = vector.broadcast %cst_76 : f32 to vector<8x128xf32>
    %179 = arith.addf %177, %178 : vector<8x128xf32>
    %180 = vector.extract_strided_slice %171 {offsets = [0, 128], sizes = [8, 128], strides = [1, 1]} : vector<8x512xf32> to vector<8x128xf32>
    %cst_77 = arith.constant 5.000000e-01 : f32
    %181 = vector.broadcast %cst_77 : f32 to vector<8x128xf32>
    %182 = arith.mulf %181, %180 : vector<8x128xf32>
    %183 = math.tanh %182 : vector<8x128xf32>
    %cst_78 = arith.constant 5.000000e-01 : f32
    %184 = vector.broadcast %cst_78 : f32 to vector<8x128xf32>
    %185 = arith.mulf %184, %183 : vector<8x128xf32>
    %cst_79 = arith.constant 5.000000e-01 : f32
    %186 = vector.broadcast %cst_79 : f32 to vector<8x128xf32>
    %187 = arith.addf %185, %186 : vector<8x128xf32>
    %188 = vector.extract_strided_slice %171 {offsets = [0, 256], sizes = [8, 128], strides = [1, 1]} : vector<8x512xf32> to vector<8x128xf32>
    %189 = math.tanh %188 : vector<8x128xf32>
    %190 = vector.extract_strided_slice %171 {offsets = [0, 384], sizes = [8, 128], strides = [1, 1]} : vector<8x512xf32> to vector<8x128xf32>
    %cst_80 = arith.constant 5.000000e-01 : f32
    %191 = vector.broadcast %cst_80 : f32 to vector<8x128xf32>
    %192 = arith.mulf %191, %190 : vector<8x128xf32>
    %193 = math.tanh %192 : vector<8x128xf32>
    %cst_81 = arith.constant 5.000000e-01 : f32
    %194 = vector.broadcast %cst_81 : f32 to vector<8x128xf32>
    %195 = arith.mulf %194, %193 : vector<8x128xf32>
    %cst_82 = arith.constant 5.000000e-01 : f32
    %196 = vector.broadcast %cst_82 : f32 to vector<8x128xf32>
    %197 = arith.addf %195, %196 : vector<8x128xf32>
    %198 = arith.mulf %187, %163 : vector<8x128xf32>
    %199 = arith.mulf %179, %189 : vector<8x128xf32>
    %200 = arith.addf %198, %199 : vector<8x128xf32>
    %201 = math.tanh %200 : vector<8x128xf32>
    %202 = arith.mulf %197, %201 : vector<8x128xf32>
    %c0_83 = arith.constant 0 : index
    %203 = arith.index_cast %c3_i32 : i32 to index
    %c0_84 = arith.constant 0 : index
    %c0_85 = arith.constant 0 : index
    %204 = vector.load %arg4[%c0_83, %203, %c0_84, %c0_85] : memref<1x6x8x128xbf16, #tpu.memory_space<vmem>>, vector<1x1x8x128xbf16>
    %205 = vector.shape_cast %204 : vector<1x1x8x128xbf16> to vector<8x128xbf16>
    %206 = arith.extf %205 : vector<8x128xbf16> to vector<8x128xf32>
    %207 = arith.subf %202, %160 : vector<8x128xf32>
    %208 = arith.mulf %206, %207 : vector<8x128xf32>
    %209 = arith.addf %160, %208 : vector<8x128xf32>
    %210 = arith.subf %200, %163 : vector<8x128xf32>
    %211 = arith.mulf %206, %210 : vector<8x128xf32>
    %212 = arith.addf %163, %211 : vector<8x128xf32>
    %c4_i32 = arith.constant 4 : i32
    %c8_i32_86 = arith.constant 8 : i32
    %213 = arith.muli %c4_i32, %c8_i32_86 : i32
    %214 = tpu.assume_multiple %213, 8 : i32
    %215 = arith.index_cast %214 : i32 to index
    %c0_87 = arith.constant 0 : index
    %216 = vector.load %arg14[%215, %c0_87] : memref<48x512xf32, #tpu.memory_space<vmem>>, vector<8x512xf32>
    %217 = arith.truncf %209 : vector<8x128xf32> to vector<8x128xbf16>
    %c0_88 = arith.constant 0 : index
    %c0_89 = arith.constant 0 : index
    %218 = vector.load %arg6[%c0_88, %c0_89] : memref<128x512xbf16, #tpu.memory_space<vmem>>, vector<128x512xbf16>
    %cst_90 = arith.constant dense<0.000000e+00> : vector<8x512xf32>
    %219 = tpu.matmul %217, %218, %cst_90 {dimension_numbers = #tpu.dot_dimension_numbers<[1], [0], [0], [1], [0, 0, 1, 1], [], []>} : vector<8x128xbf16>, vector<128x512xbf16>, vector<8x512xf32> -> vector<8x512xf32>
    %220 = arith.addf %216, %219 : vector<8x512xf32>
    %221 = vector.extract_strided_slice %220 {offsets = [0, 0], sizes = [8, 128], strides = [1, 1]} : vector<8x512xf32> to vector<8x128xf32>
    %cst_91 = arith.constant 5.000000e-01 : f32
    %222 = vector.broadcast %cst_91 : f32 to vector<8x128xf32>
    %223 = arith.mulf %222, %221 : vector<8x128xf32>
    %224 = math.tanh %223 : vector<8x128xf32>
    %cst_92 = arith.constant 5.000000e-01 : f32
    %225 = vector.broadcast %cst_92 : f32 to vector<8x128xf32>
    %226 = arith.mulf %225, %224 : vector<8x128xf32>
    %cst_93 = arith.constant 5.000000e-01 : f32
    %227 = vector.broadcast %cst_93 : f32 to vector<8x128xf32>
    %228 = arith.addf %226, %227 : vector<8x128xf32>
    %229 = vector.extract_strided_slice %220 {offsets = [0, 128], sizes = [8, 128], strides = [1, 1]} : vector<8x512xf32> to vector<8x128xf32>
    %cst_94 = arith.constant 5.000000e-01 : f32
    %230 = vector.broadcast %cst_94 : f32 to vector<8x128xf32>
    %231 = arith.mulf %230, %229 : vector<8x128xf32>
    %232 = math.tanh %231 : vector<8x128xf32>
    %cst_95 = arith.constant 5.000000e-01 : f32
    %233 = vector.broadcast %cst_95 : f32 to vector<8x128xf32>
    %234 = arith.mulf %233, %232 : vector<8x128xf32>
    %cst_96 = arith.constant 5.000000e-01 : f32
    %235 = vector.broadcast %cst_96 : f32 to vector<8x128xf32>
    %236 = arith.addf %234, %235 : vector<8x128xf32>
    %237 = vector.extract_strided_slice %220 {offsets = [0, 256], sizes = [8, 128], strides = [1, 1]} : vector<8x512xf32> to vector<8x128xf32>
    %238 = math.tanh %237 : vector<8x128xf32>
    %239 = vector.extract_strided_slice %220 {offsets = [0, 384], sizes = [8, 128], strides = [1, 1]} : vector<8x512xf32> to vector<8x128xf32>
    %cst_97 = arith.constant 5.000000e-01 : f32
    %240 = vector.broadcast %cst_97 : f32 to vector<8x128xf32>
    %241 = arith.mulf %240, %239 : vector<8x128xf32>
    %242 = math.tanh %241 : vector<8x128xf32>
    %cst_98 = arith.constant 5.000000e-01 : f32
    %243 = vector.broadcast %cst_98 : f32 to vector<8x128xf32>
    %244 = arith.mulf %243, %242 : vector<8x128xf32>
    %cst_99 = arith.constant 5.000000e-01 : f32
    %245 = vector.broadcast %cst_99 : f32 to vector<8x128xf32>
    %246 = arith.addf %244, %245 : vector<8x128xf32>
    %247 = arith.mulf %236, %212 : vector<8x128xf32>
    %248 = arith.mulf %228, %238 : vector<8x128xf32>
    %249 = arith.addf %247, %248 : vector<8x128xf32>
    %250 = math.tanh %249 : vector<8x128xf32>
    %251 = arith.mulf %246, %250 : vector<8x128xf32>
    %c0_100 = arith.constant 0 : index
    %252 = arith.index_cast %c4_i32 : i32 to index
    %c0_101 = arith.constant 0 : index
    %c0_102 = arith.constant 0 : index
    %253 = vector.load %arg4[%c0_100, %252, %c0_101, %c0_102] : memref<1x6x8x128xbf16, #tpu.memory_space<vmem>>, vector<1x1x8x128xbf16>
    %254 = vector.shape_cast %253 : vector<1x1x8x128xbf16> to vector<8x128xbf16>
    %255 = arith.extf %254 : vector<8x128xbf16> to vector<8x128xf32>
    %256 = arith.subf %251, %209 : vector<8x128xf32>
    %257 = arith.mulf %255, %256 : vector<8x128xf32>
    %258 = arith.addf %209, %257 : vector<8x128xf32>
    %259 = arith.subf %249, %212 : vector<8x128xf32>
    %260 = arith.mulf %255, %259 : vector<8x128xf32>
    %261 = arith.addf %212, %260 : vector<8x128xf32>
    %c5_i32 = arith.constant 5 : i32
    %c8_i32_103 = arith.constant 8 : i32
    %262 = arith.muli %c5_i32, %c8_i32_103 : i32
    %263 = tpu.assume_multiple %262, 8 : i32
    %264 = arith.index_cast %263 : i32 to index
    %c0_104 = arith.constant 0 : index
    %265 = vector.load %arg14[%264, %c0_104] : memref<48x512xf32, #tpu.memory_space<vmem>>, vector<8x512xf32>
    %266 = arith.truncf %258 : vector<8x128xf32> to vector<8x128xbf16>
    %c0_105 = arith.constant 0 : index
    %c0_106 = arith.constant 0 : index
    %267 = vector.load %arg6[%c0_105, %c0_106] : memref<128x512xbf16, #tpu.memory_space<vmem>>, vector<128x512xbf16>
    %cst_107 = arith.constant dense<0.000000e+00> : vector<8x512xf32>
    %268 = tpu.matmul %266, %267, %cst_107 {dimension_numbers = #tpu.dot_dimension_numbers<[1], [0], [0], [1], [0, 0, 1, 1], [], []>} : vector<8x128xbf16>, vector<128x512xbf16>, vector<8x512xf32> -> vector<8x512xf32>
    %269 = arith.addf %265, %268 : vector<8x512xf32>
    %270 = vector.extract_strided_slice %269 {offsets = [0, 0], sizes = [8, 128], strides = [1, 1]} : vector<8x512xf32> to vector<8x128xf32>
    %cst_108 = arith.constant 5.000000e-01 : f32
    %271 = vector.broadcast %cst_108 : f32 to vector<8x128xf32>
    %272 = arith.mulf %271, %270 : vector<8x128xf32>
    %273 = math.tanh %272 : vector<8x128xf32>
    %cst_109 = arith.constant 5.000000e-01 : f32
    %274 = vector.broadcast %cst_109 : f32 to vector<8x128xf32>
    %275 = arith.mulf %274, %273 : vector<8x128xf32>
    %cst_110 = arith.constant 5.000000e-01 : f32
    %276 = vector.broadcast %cst_110 : f32 to vector<8x128xf32>
    %277 = arith.addf %275, %276 : vector<8x128xf32>
    %278 = vector.extract_strided_slice %269 {offsets = [0, 128], sizes = [8, 128], strides = [1, 1]} : vector<8x512xf32> to vector<8x128xf32>
    %cst_111 = arith.constant 5.000000e-01 : f32
    %279 = vector.broadcast %cst_111 : f32 to vector<8x128xf32>
    %280 = arith.mulf %279, %278 : vector<8x128xf32>
    %281 = math.tanh %280 : vector<8x128xf32>
    %cst_112 = arith.constant 5.000000e-01 : f32
    %282 = vector.broadcast %cst_112 : f32 to vector<8x128xf32>
    %283 = arith.mulf %282, %281 : vector<8x128xf32>
    %cst_113 = arith.constant 5.000000e-01 : f32
    %284 = vector.broadcast %cst_113 : f32 to vector<8x128xf32>
    %285 = arith.addf %283, %284 : vector<8x128xf32>
    %286 = vector.extract_strided_slice %269 {offsets = [0, 256], sizes = [8, 128], strides = [1, 1]} : vector<8x512xf32> to vector<8x128xf32>
    %287 = math.tanh %286 : vector<8x128xf32>
    %288 = vector.extract_strided_slice %269 {offsets = [0, 384], sizes = [8, 128], strides = [1, 1]} : vector<8x512xf32> to vector<8x128xf32>
    %cst_114 = arith.constant 5.000000e-01 : f32
    %289 = vector.broadcast %cst_114 : f32 to vector<8x128xf32>
    %290 = arith.mulf %289, %288 : vector<8x128xf32>
    %291 = math.tanh %290 : vector<8x128xf32>
    %cst_115 = arith.constant 5.000000e-01 : f32
    %292 = vector.broadcast %cst_115 : f32 to vector<8x128xf32>
    %293 = arith.mulf %292, %291 : vector<8x128xf32>
    %cst_116 = arith.constant 5.000000e-01 : f32
    %294 = vector.broadcast %cst_116 : f32 to vector<8x128xf32>
    %295 = arith.addf %293, %294 : vector<8x128xf32>
    %296 = arith.mulf %285, %261 : vector<8x128xf32>
    %297 = arith.mulf %277, %287 : vector<8x128xf32>
    %298 = arith.addf %296, %297 : vector<8x128xf32>
    %299 = math.tanh %298 : vector<8x128xf32>
    %300 = arith.mulf %295, %299 : vector<8x128xf32>
    %c0_117 = arith.constant 0 : index
    %301 = arith.index_cast %c5_i32 : i32 to index
    %c0_118 = arith.constant 0 : index
    %c0_119 = arith.constant 0 : index
    %302 = vector.load %arg4[%c0_117, %301, %c0_118, %c0_119] : memref<1x6x8x128xbf16, #tpu.memory_space<vmem>>, vector<1x1x8x128xbf16>
    %303 = vector.shape_cast %302 : vector<1x1x8x128xbf16> to vector<8x128xbf16>
    %304 = arith.extf %303 : vector<8x128xbf16> to vector<8x128xf32>
    %305 = arith.subf %300, %258 : vector<8x128xf32>
    %306 = arith.mulf %304, %305 : vector<8x128xf32>
    %307 = arith.addf %258, %306 : vector<8x128xf32>
    %308 = arith.subf %298, %261 : vector<8x128xf32>
    %309 = arith.mulf %304, %308 : vector<8x128xf32>
    %310 = arith.addf %261, %309 : vector<8x128xf32>
    %c6_i32 = arith.constant 6 : i32
    %c0_i32_120 = arith.constant 0 : i32
    %c8_i32_121 = arith.constant 8 : i32
    %311 = arith.muli %c0_i32_120, %c8_i32_121 : i32
    %312 = tpu.assume_multiple %311, 8 : i32
    %313 = arith.index_cast %312 : i32 to index
    %c0_122 = arith.constant 0 : index
    %314 = vector.load %arg15[%313, %c0_122] : memref<64x512xf32, #tpu.memory_space<vmem>>, vector<8x512xf32>
    %315 = arith.truncf %307 : vector<8x128xf32> to vector<8x128xbf16>
    %c0_123 = arith.constant 0 : index
    %c0_124 = arith.constant 0 : index
    %316 = vector.load %arg9[%c0_123, %c0_124] : memref<128x512xbf16, #tpu.memory_space<vmem>>, vector<128x512xbf16>
    %cst_125 = arith.constant dense<0.000000e+00> : vector<8x512xf32>
    %317 = tpu.matmul %315, %316, %cst_125 {dimension_numbers = #tpu.dot_dimension_numbers<[1], [0], [0], [1], [0, 0, 1, 1], [], []>} : vector<8x128xbf16>, vector<128x512xbf16>, vector<8x512xf32> -> vector<8x512xf32>
    %318 = arith.addf %314, %317 : vector<8x512xf32>
    %319 = vector.extract_strided_slice %318 {offsets = [0, 0], sizes = [8, 128], strides = [1, 1]} : vector<8x512xf32> to vector<8x128xf32>
    %cst_126 = arith.constant 5.000000e-01 : f32
    %320 = vector.broadcast %cst_126 : f32 to vector<8x128xf32>
    %321 = arith.mulf %320, %319 : vector<8x128xf32>
    %322 = math.tanh %321 : vector<8x128xf32>
    %cst_127 = arith.constant 5.000000e-01 : f32
    %323 = vector.broadcast %cst_127 : f32 to vector<8x128xf32>
    %324 = arith.mulf %323, %322 : vector<8x128xf32>
    %cst_128 = arith.constant 5.000000e-01 : f32
    %325 = vector.broadcast %cst_128 : f32 to vector<8x128xf32>
    %326 = arith.addf %324, %325 : vector<8x128xf32>
    %327 = vector.extract_strided_slice %318 {offsets = [0, 128], sizes = [8, 128], strides = [1, 1]} : vector<8x512xf32> to vector<8x128xf32>
    %cst_129 = arith.constant 5.000000e-01 : f32
    %328 = vector.broadcast %cst_129 : f32 to vector<8x128xf32>
    %329 = arith.mulf %328, %327 : vector<8x128xf32>
    %330 = math.tanh %329 : vector<8x128xf32>
    %cst_130 = arith.constant 5.000000e-01 : f32
    %331 = vector.broadcast %cst_130 : f32 to vector<8x128xf32>
    %332 = arith.mulf %331, %330 : vector<8x128xf32>
    %cst_131 = arith.constant 5.000000e-01 : f32
    %333 = vector.broadcast %cst_131 : f32 to vector<8x128xf32>
    %334 = arith.addf %332, %333 : vector<8x128xf32>
    %335 = vector.extract_strided_slice %318 {offsets = [0, 256], sizes = [8, 128], strides = [1, 1]} : vector<8x512xf32> to vector<8x128xf32>
    %336 = math.tanh %335 : vector<8x128xf32>
    %337 = vector.extract_strided_slice %318 {offsets = [0, 384], sizes = [8, 128], strides = [1, 1]} : vector<8x512xf32> to vector<8x128xf32>
    %cst_132 = arith.constant 5.000000e-01 : f32
    %338 = vector.broadcast %cst_132 : f32 to vector<8x128xf32>
    %339 = arith.mulf %338, %337 : vector<8x128xf32>
    %340 = math.tanh %339 : vector<8x128xf32>
    %cst_133 = arith.constant 5.000000e-01 : f32
    %341 = vector.broadcast %cst_133 : f32 to vector<8x128xf32>
    %342 = arith.mulf %341, %340 : vector<8x128xf32>
    %cst_134 = arith.constant 5.000000e-01 : f32
    %343 = vector.broadcast %cst_134 : f32 to vector<8x128xf32>
    %344 = arith.addf %342, %343 : vector<8x128xf32>
    %345 = arith.mulf %334, %310 : vector<8x128xf32>
    %346 = arith.mulf %326, %336 : vector<8x128xf32>
    %347 = arith.addf %345, %346 : vector<8x128xf32>
    %348 = math.tanh %347 : vector<8x128xf32>
    %349 = arith.mulf %344, %348 : vector<8x128xf32>
    %c0_135 = arith.constant 0 : index
    %350 = arith.index_cast %c0_i32_120 : i32 to index
    %c0_136 = arith.constant 0 : index
    %c0_137 = arith.constant 0 : index
    %351 = vector.load %arg3[%c0_135, %350, %c0_136, %c0_137] : memref<1x8x8x128xbf16, #tpu.memory_space<vmem>>, vector<1x1x8x128xbf16>
    %352 = vector.shape_cast %351 : vector<1x1x8x128xbf16> to vector<8x128xbf16>
    %353 = arith.extf %352 : vector<8x128xbf16> to vector<8x128xf32>
    %354 = arith.subf %349, %307 : vector<8x128xf32>
    %355 = arith.mulf %353, %354 : vector<8x128xf32>
    %356 = arith.addf %307, %355 : vector<8x128xf32>
    %357 = arith.subf %347, %310 : vector<8x128xf32>
    %358 = arith.mulf %353, %357 : vector<8x128xf32>
    %359 = arith.addf %310, %358 : vector<8x128xf32>
    %c1_i32_138 = arith.constant 1 : i32
    %c8_i32_139 = arith.constant 8 : i32
    %360 = arith.muli %c1_i32_138, %c8_i32_139 : i32
    %361 = tpu.assume_multiple %360, 8 : i32
    %362 = arith.index_cast %361 : i32 to index
    %c0_140 = arith.constant 0 : index
    %363 = vector.load %arg15[%362, %c0_140] : memref<64x512xf32, #tpu.memory_space<vmem>>, vector<8x512xf32>
    %364 = arith.truncf %356 : vector<8x128xf32> to vector<8x128xbf16>
    %c0_141 = arith.constant 0 : index
    %c0_142 = arith.constant 0 : index
    %365 = vector.load %arg9[%c0_141, %c0_142] : memref<128x512xbf16, #tpu.memory_space<vmem>>, vector<128x512xbf16>
    %cst_143 = arith.constant dense<0.000000e+00> : vector<8x512xf32>
    %366 = tpu.matmul %364, %365, %cst_143 {dimension_numbers = #tpu.dot_dimension_numbers<[1], [0], [0], [1], [0, 0, 1, 1], [], []>} : vector<8x128xbf16>, vector<128x512xbf16>, vector<8x512xf32> -> vector<8x512xf32>
    %367 = arith.addf %363, %366 : vector<8x512xf32>
    %368 = vector.extract_strided_slice %367 {offsets = [0, 0], sizes = [8, 128], strides = [1, 1]} : vector<8x512xf32> to vector<8x128xf32>
    %cst_144 = arith.constant 5.000000e-01 : f32
    %369 = vector.broadcast %cst_144 : f32 to vector<8x128xf32>
    %370 = arith.mulf %369, %368 : vector<8x128xf32>
    %371 = math.tanh %370 : vector<8x128xf32>
    %cst_145 = arith.constant 5.000000e-01 : f32
    %372 = vector.broadcast %cst_145 : f32 to vector<8x128xf32>
    %373 = arith.mulf %372, %371 : vector<8x128xf32>
    %cst_146 = arith.constant 5.000000e-01 : f32
    %374 = vector.broadcast %cst_146 : f32 to vector<8x128xf32>
    %375 = arith.addf %373, %374 : vector<8x128xf32>
    %376 = vector.extract_strided_slice %367 {offsets = [0, 128], sizes = [8, 128], strides = [1, 1]} : vector<8x512xf32> to vector<8x128xf32>
    %cst_147 = arith.constant 5.000000e-01 : f32
    %377 = vector.broadcast %cst_147 : f32 to vector<8x128xf32>
    %378 = arith.mulf %377, %376 : vector<8x128xf32>
    %379 = math.tanh %378 : vector<8x128xf32>
    %cst_148 = arith.constant 5.000000e-01 : f32
    %380 = vector.broadcast %cst_148 : f32 to vector<8x128xf32>
    %381 = arith.mulf %380, %379 : vector<8x128xf32>
    %cst_149 = arith.constant 5.000000e-01 : f32
    %382 = vector.broadcast %cst_149 : f32 to vector<8x128xf32>
    %383 = arith.addf %381, %382 : vector<8x128xf32>
    %384 = vector.extract_strided_slice %367 {offsets = [0, 256], sizes = [8, 128], strides = [1, 1]} : vector<8x512xf32> to vector<8x128xf32>
    %385 = math.tanh %384 : vector<8x128xf32>
    %386 = vector.extract_strided_slice %367 {offsets = [0, 384], sizes = [8, 128], strides = [1, 1]} : vector<8x512xf32> to vector<8x128xf32>
    %cst_150 = arith.constant 5.000000e-01 : f32
    %387 = vector.broadcast %cst_150 : f32 to vector<8x128xf32>
    %388 = arith.mulf %387, %386 : vector<8x128xf32>
    %389 = math.tanh %388 : vector<8x128xf32>
    %cst_151 = arith.constant 5.000000e-01 : f32
    %390 = vector.broadcast %cst_151 : f32 to vector<8x128xf32>
    %391 = arith.mulf %390, %389 : vector<8x128xf32>
    %cst_152 = arith.constant 5.000000e-01 : f32
    %392 = vector.broadcast %cst_152 : f32 to vector<8x128xf32>
    %393 = arith.addf %391, %392 : vector<8x128xf32>
    %394 = arith.mulf %383, %359 : vector<8x128xf32>
    %395 = arith.mulf %375, %385 : vector<8x128xf32>
    %396 = arith.addf %394, %395 : vector<8x128xf32>
    %397 = math.tanh %396 : vector<8x128xf32>
    %398 = arith.mulf %393, %397 : vector<8x128xf32>
    %c0_153 = arith.constant 0 : index
    %399 = arith.index_cast %c1_i32_138 : i32 to index
    %c0_154 = arith.constant 0 : index
    %c0_155 = arith.constant 0 : index
    %400 = vector.load %arg3[%c0_153, %399, %c0_154, %c0_155] : memref<1x8x8x128xbf16, #tpu.memory_space<vmem>>, vector<1x1x8x128xbf16>
    %401 = vector.shape_cast %400 : vector<1x1x8x128xbf16> to vector<8x128xbf16>
    %402 = arith.extf %401 : vector<8x128xbf16> to vector<8x128xf32>
    %403 = arith.subf %398, %356 : vector<8x128xf32>
    %404 = arith.mulf %402, %403 : vector<8x128xf32>
    %405 = arith.addf %356, %404 : vector<8x128xf32>
    %406 = arith.subf %396, %359 : vector<8x128xf32>
    %407 = arith.mulf %402, %406 : vector<8x128xf32>
    %408 = arith.addf %359, %407 : vector<8x128xf32>
    %c2_i32_156 = arith.constant 2 : i32
    %c8_i32_157 = arith.constant 8 : i32
    %409 = arith.muli %c2_i32_156, %c8_i32_157 : i32
    %410 = tpu.assume_multiple %409, 8 : i32
    %411 = arith.index_cast %410 : i32 to index
    %c0_158 = arith.constant 0 : index
    %412 = vector.load %arg15[%411, %c0_158] : memref<64x512xf32, #tpu.memory_space<vmem>>, vector<8x512xf32>
    %413 = arith.truncf %405 : vector<8x128xf32> to vector<8x128xbf16>
    %c0_159 = arith.constant 0 : index
    %c0_160 = arith.constant 0 : index
    %414 = vector.load %arg9[%c0_159, %c0_160] : memref<128x512xbf16, #tpu.memory_space<vmem>>, vector<128x512xbf16>
    %cst_161 = arith.constant dense<0.000000e+00> : vector<8x512xf32>
    %415 = tpu.matmul %413, %414, %cst_161 {dimension_numbers = #tpu.dot_dimension_numbers<[1], [0], [0], [1], [0, 0, 1, 1], [], []>} : vector<8x128xbf16>, vector<128x512xbf16>, vector<8x512xf32> -> vector<8x512xf32>
    %416 = arith.addf %412, %415 : vector<8x512xf32>
    %417 = vector.extract_strided_slice %416 {offsets = [0, 0], sizes = [8, 128], strides = [1, 1]} : vector<8x512xf32> to vector<8x128xf32>
    %cst_162 = arith.constant 5.000000e-01 : f32
    %418 = vector.broadcast %cst_162 : f32 to vector<8x128xf32>
    %419 = arith.mulf %418, %417 : vector<8x128xf32>
    %420 = math.tanh %419 : vector<8x128xf32>
    %cst_163 = arith.constant 5.000000e-01 : f32
    %421 = vector.broadcast %cst_163 : f32 to vector<8x128xf32>
    %422 = arith.mulf %421, %420 : vector<8x128xf32>
    %cst_164 = arith.constant 5.000000e-01 : f32
    %423 = vector.broadcast %cst_164 : f32 to vector<8x128xf32>
    %424 = arith.addf %422, %423 : vector<8x128xf32>
    %425 = vector.extract_strided_slice %416 {offsets = [0, 128], sizes = [8, 128], strides = [1, 1]} : vector<8x512xf32> to vector<8x128xf32>
    %cst_165 = arith.constant 5.000000e-01 : f32
    %426 = vector.broadcast %cst_165 : f32 to vector<8x128xf32>
    %427 = arith.mulf %426, %425 : vector<8x128xf32>
    %428 = math.tanh %427 : vector<8x128xf32>
    %cst_166 = arith.constant 5.000000e-01 : f32
    %429 = vector.broadcast %cst_166 : f32 to vector<8x128xf32>
    %430 = arith.mulf %429, %428 : vector<8x128xf32>
    %cst_167 = arith.constant 5.000000e-01 : f32
    %431 = vector.broadcast %cst_167 : f32 to vector<8x128xf32>
    %432 = arith.addf %430, %431 : vector<8x128xf32>
    %433 = vector.extract_strided_slice %416 {offsets = [0, 256], sizes = [8, 128], strides = [1, 1]} : vector<8x512xf32> to vector<8x128xf32>
    %434 = math.tanh %433 : vector<8x128xf32>
    %435 = vector.extract_strided_slice %416 {offsets = [0, 384], sizes = [8, 128], strides = [1, 1]} : vector<8x512xf32> to vector<8x128xf32>
    %cst_168 = arith.constant 5.000000e-01 : f32
    %436 = vector.broadcast %cst_168 : f32 to vector<8x128xf32>
    %437 = arith.mulf %436, %435 : vector<8x128xf32>
    %438 = math.tanh %437 : vector<8x128xf32>
    %cst_169 = arith.constant 5.000000e-01 : f32
    %439 = vector.broadcast %cst_169 : f32 to vector<8x128xf32>
    %440 = arith.mulf %439, %438 : vector<8x128xf32>
    %cst_170 = arith.constant 5.000000e-01 : f32
    %441 = vector.broadcast %cst_170 : f32 to vector<8x128xf32>
    %442 = arith.addf %440, %441 : vector<8x128xf32>
    %443 = arith.mulf %432, %408 : vector<8x128xf32>
    %444 = arith.mulf %424, %434 : vector<8x128xf32>
    %445 = arith.addf %443, %444 : vector<8x128xf32>
    %446 = math.tanh %445 : vector<8x128xf32>
    %447 = arith.mulf %442, %446 : vector<8x128xf32>
    %c0_171 = arith.constant 0 : index
    %448 = arith.index_cast %c2_i32_156 : i32 to index
    %c0_172 = arith.constant 0 : index
    %c0_173 = arith.constant 0 : index
    %449 = vector.load %arg3[%c0_171, %448, %c0_172, %c0_173] : memref<1x8x8x128xbf16, #tpu.memory_space<vmem>>, vector<1x1x8x128xbf16>
    %450 = vector.shape_cast %449 : vector<1x1x8x128xbf16> to vector<8x128xbf16>
    %451 = arith.extf %450 : vector<8x128xbf16> to vector<8x128xf32>
    %452 = arith.subf %447, %405 : vector<8x128xf32>
    %453 = arith.mulf %451, %452 : vector<8x128xf32>
    %454 = arith.addf %405, %453 : vector<8x128xf32>
    %455 = arith.subf %445, %408 : vector<8x128xf32>
    %456 = arith.mulf %451, %455 : vector<8x128xf32>
    %457 = arith.addf %408, %456 : vector<8x128xf32>
    %c3_i32_174 = arith.constant 3 : i32
    %c8_i32_175 = arith.constant 8 : i32
    %458 = arith.muli %c3_i32_174, %c8_i32_175 : i32
    %459 = tpu.assume_multiple %458, 8 : i32
    %460 = arith.index_cast %459 : i32 to index
    %c0_176 = arith.constant 0 : index
    %461 = vector.load %arg15[%460, %c0_176] : memref<64x512xf32, #tpu.memory_space<vmem>>, vector<8x512xf32>
    %462 = arith.truncf %454 : vector<8x128xf32> to vector<8x128xbf16>
    %c0_177 = arith.constant 0 : index
    %c0_178 = arith.constant 0 : index
    %463 = vector.load %arg9[%c0_177, %c0_178] : memref<128x512xbf16, #tpu.memory_space<vmem>>, vector<128x512xbf16>
    %cst_179 = arith.constant dense<0.000000e+00> : vector<8x512xf32>
    %464 = tpu.matmul %462, %463, %cst_179 {dimension_numbers = #tpu.dot_dimension_numbers<[1], [0], [0], [1], [0, 0, 1, 1], [], []>} : vector<8x128xbf16>, vector<128x512xbf16>, vector<8x512xf32> -> vector<8x512xf32>
    %465 = arith.addf %461, %464 : vector<8x512xf32>
    %466 = vector.extract_strided_slice %465 {offsets = [0, 0], sizes = [8, 128], strides = [1, 1]} : vector<8x512xf32> to vector<8x128xf32>
    %cst_180 = arith.constant 5.000000e-01 : f32
    %467 = vector.broadcast %cst_180 : f32 to vector<8x128xf32>
    %468 = arith.mulf %467, %466 : vector<8x128xf32>
    %469 = math.tanh %468 : vector<8x128xf32>
    %cst_181 = arith.constant 5.000000e-01 : f32
    %470 = vector.broadcast %cst_181 : f32 to vector<8x128xf32>
    %471 = arith.mulf %470, %469 : vector<8x128xf32>
    %cst_182 = arith.constant 5.000000e-01 : f32
    %472 = vector.broadcast %cst_182 : f32 to vector<8x128xf32>
    %473 = arith.addf %471, %472 : vector<8x128xf32>
    %474 = vector.extract_strided_slice %465 {offsets = [0, 128], sizes = [8, 128], strides = [1, 1]} : vector<8x512xf32> to vector<8x128xf32>
    %cst_183 = arith.constant 5.000000e-01 : f32
    %475 = vector.broadcast %cst_183 : f32 to vector<8x128xf32>
    %476 = arith.mulf %475, %474 : vector<8x128xf32>
    %477 = math.tanh %476 : vector<8x128xf32>
    %cst_184 = arith.constant 5.000000e-01 : f32
    %478 = vector.broadcast %cst_184 : f32 to vector<8x128xf32>
    %479 = arith.mulf %478, %477 : vector<8x128xf32>
    %cst_185 = arith.constant 5.000000e-01 : f32
    %480 = vector.broadcast %cst_185 : f32 to vector<8x128xf32>
    %481 = arith.addf %479, %480 : vector<8x128xf32>
    %482 = vector.extract_strided_slice %465 {offsets = [0, 256], sizes = [8, 128], strides = [1, 1]} : vector<8x512xf32> to vector<8x128xf32>
    %483 = math.tanh %482 : vector<8x128xf32>
    %484 = vector.extract_strided_slice %465 {offsets = [0, 384], sizes = [8, 128], strides = [1, 1]} : vector<8x512xf32> to vector<8x128xf32>
    %cst_186 = arith.constant 5.000000e-01 : f32
    %485 = vector.broadcast %cst_186 : f32 to vector<8x128xf32>
    %486 = arith.mulf %485, %484 : vector<8x128xf32>
    %487 = math.tanh %486 : vector<8x128xf32>
    %cst_187 = arith.constant 5.000000e-01 : f32
    %488 = vector.broadcast %cst_187 : f32 to vector<8x128xf32>
    %489 = arith.mulf %488, %487 : vector<8x128xf32>
    %cst_188 = arith.constant 5.000000e-01 : f32
    %490 = vector.broadcast %cst_188 : f32 to vector<8x128xf32>
    %491 = arith.addf %489, %490 : vector<8x128xf32>
    %492 = arith.mulf %481, %457 : vector<8x128xf32>
    %493 = arith.mulf %473, %483 : vector<8x128xf32>
    %494 = arith.addf %492, %493 : vector<8x128xf32>
    %495 = math.tanh %494 : vector<8x128xf32>
    %496 = arith.mulf %491, %495 : vector<8x128xf32>
    %c0_189 = arith.constant 0 : index
    %497 = arith.index_cast %c3_i32_174 : i32 to index
    %c0_190 = arith.constant 0 : index
    %c0_191 = arith.constant 0 : index
    %498 = vector.load %arg3[%c0_189, %497, %c0_190, %c0_191] : memref<1x8x8x128xbf16, #tpu.memory_space<vmem>>, vector<1x1x8x128xbf16>
    %499 = vector.shape_cast %498 : vector<1x1x8x128xbf16> to vector<8x128xbf16>
    %500 = arith.extf %499 : vector<8x128xbf16> to vector<8x128xf32>
    %501 = arith.subf %496, %454 : vector<8x128xf32>
    %502 = arith.mulf %500, %501 : vector<8x128xf32>
    %503 = arith.addf %454, %502 : vector<8x128xf32>
    %504 = arith.subf %494, %457 : vector<8x128xf32>
    %505 = arith.mulf %500, %504 : vector<8x128xf32>
    %506 = arith.addf %457, %505 : vector<8x128xf32>
    %c4_i32_192 = arith.constant 4 : i32
    %c8_i32_193 = arith.constant 8 : i32
    %507 = arith.muli %c4_i32_192, %c8_i32_193 : i32
    %508 = tpu.assume_multiple %507, 8 : i32
    %509 = arith.index_cast %508 : i32 to index
    %c0_194 = arith.constant 0 : index
    %510 = vector.load %arg15[%509, %c0_194] : memref<64x512xf32, #tpu.memory_space<vmem>>, vector<8x512xf32>
    %511 = arith.truncf %503 : vector<8x128xf32> to vector<8x128xbf16>
    %c0_195 = arith.constant 0 : index
    %c0_196 = arith.constant 0 : index
    %512 = vector.load %arg9[%c0_195, %c0_196] : memref<128x512xbf16, #tpu.memory_space<vmem>>, vector<128x512xbf16>
    %cst_197 = arith.constant dense<0.000000e+00> : vector<8x512xf32>
    %513 = tpu.matmul %511, %512, %cst_197 {dimension_numbers = #tpu.dot_dimension_numbers<[1], [0], [0], [1], [0, 0, 1, 1], [], []>} : vector<8x128xbf16>, vector<128x512xbf16>, vector<8x512xf32> -> vector<8x512xf32>
    %514 = arith.addf %510, %513 : vector<8x512xf32>
    %515 = vector.extract_strided_slice %514 {offsets = [0, 0], sizes = [8, 128], strides = [1, 1]} : vector<8x512xf32> to vector<8x128xf32>
    %cst_198 = arith.constant 5.000000e-01 : f32
    %516 = vector.broadcast %cst_198 : f32 to vector<8x128xf32>
    %517 = arith.mulf %516, %515 : vector<8x128xf32>
    %518 = math.tanh %517 : vector<8x128xf32>
    %cst_199 = arith.constant 5.000000e-01 : f32
    %519 = vector.broadcast %cst_199 : f32 to vector<8x128xf32>
    %520 = arith.mulf %519, %518 : vector<8x128xf32>
    %cst_200 = arith.constant 5.000000e-01 : f32
    %521 = vector.broadcast %cst_200 : f32 to vector<8x128xf32>
    %522 = arith.addf %520, %521 : vector<8x128xf32>
    %523 = vector.extract_strided_slice %514 {offsets = [0, 128], sizes = [8, 128], strides = [1, 1]} : vector<8x512xf32> to vector<8x128xf32>
    %cst_201 = arith.constant 5.000000e-01 : f32
    %524 = vector.broadcast %cst_201 : f32 to vector<8x128xf32>
    %525 = arith.mulf %524, %523 : vector<8x128xf32>
    %526 = math.tanh %525 : vector<8x128xf32>
    %cst_202 = arith.constant 5.000000e-01 : f32
    %527 = vector.broadcast %cst_202 : f32 to vector<8x128xf32>
    %528 = arith.mulf %527, %526 : vector<8x128xf32>
    %cst_203 = arith.constant 5.000000e-01 : f32
    %529 = vector.broadcast %cst_203 : f32 to vector<8x128xf32>
    %530 = arith.addf %528, %529 : vector<8x128xf32>
    %531 = vector.extract_strided_slice %514 {offsets = [0, 256], sizes = [8, 128], strides = [1, 1]} : vector<8x512xf32> to vector<8x128xf32>
    %532 = math.tanh %531 : vector<8x128xf32>
    %533 = vector.extract_strided_slice %514 {offsets = [0, 384], sizes = [8, 128], strides = [1, 1]} : vector<8x512xf32> to vector<8x128xf32>
    %cst_204 = arith.constant 5.000000e-01 : f32
    %534 = vector.broadcast %cst_204 : f32 to vector<8x128xf32>
    %535 = arith.mulf %534, %533 : vector<8x128xf32>
    %536 = math.tanh %535 : vector<8x128xf32>
    %cst_205 = arith.constant 5.000000e-01 : f32
    %537 = vector.broadcast %cst_205 : f32 to vector<8x128xf32>
    %538 = arith.mulf %537, %536 : vector<8x128xf32>
    %cst_206 = arith.constant 5.000000e-01 : f32
    %539 = vector.broadcast %cst_206 : f32 to vector<8x128xf32>
    %540 = arith.addf %538, %539 : vector<8x128xf32>
    %541 = arith.mulf %530, %506 : vector<8x128xf32>
    %542 = arith.mulf %522, %532 : vector<8x128xf32>
    %543 = arith.addf %541, %542 : vector<8x128xf32>
    %544 = math.tanh %543 : vector<8x128xf32>
    %545 = arith.mulf %540, %544 : vector<8x128xf32>
    %c0_207 = arith.constant 0 : index
    %546 = arith.index_cast %c4_i32_192 : i32 to index
    %c0_208 = arith.constant 0 : index
    %c0_209 = arith.constant 0 : index
    %547 = vector.load %arg3[%c0_207, %546, %c0_208, %c0_209] : memref<1x8x8x128xbf16, #tpu.memory_space<vmem>>, vector<1x1x8x128xbf16>
    %548 = vector.shape_cast %547 : vector<1x1x8x128xbf16> to vector<8x128xbf16>
    %549 = arith.extf %548 : vector<8x128xbf16> to vector<8x128xf32>
    %550 = arith.subf %545, %503 : vector<8x128xf32>
    %551 = arith.mulf %549, %550 : vector<8x128xf32>
    %552 = arith.addf %503, %551 : vector<8x128xf32>
    %553 = arith.subf %543, %506 : vector<8x128xf32>
    %554 = arith.mulf %549, %553 : vector<8x128xf32>
    %555 = arith.addf %506, %554 : vector<8x128xf32>
    %c5_i32_210 = arith.constant 5 : i32
    %c8_i32_211 = arith.constant 8 : i32
    %556 = arith.muli %c5_i32_210, %c8_i32_211 : i32
    %557 = tpu.assume_multiple %556, 8 : i32
    %558 = arith.index_cast %557 : i32 to index
    %c0_212 = arith.constant 0 : index
    %559 = vector.load %arg15[%558, %c0_212] : memref<64x512xf32, #tpu.memory_space<vmem>>, vector<8x512xf32>
    %560 = arith.truncf %552 : vector<8x128xf32> to vector<8x128xbf16>
    %c0_213 = arith.constant 0 : index
    %c0_214 = arith.constant 0 : index
    %561 = vector.load %arg9[%c0_213, %c0_214] : memref<128x512xbf16, #tpu.memory_space<vmem>>, vector<128x512xbf16>
    %cst_215 = arith.constant dense<0.000000e+00> : vector<8x512xf32>
    %562 = tpu.matmul %560, %561, %cst_215 {dimension_numbers = #tpu.dot_dimension_numbers<[1], [0], [0], [1], [0, 0, 1, 1], [], []>} : vector<8x128xbf16>, vector<128x512xbf16>, vector<8x512xf32> -> vector<8x512xf32>
    %563 = arith.addf %559, %562 : vector<8x512xf32>
    %564 = vector.extract_strided_slice %563 {offsets = [0, 0], sizes = [8, 128], strides = [1, 1]} : vector<8x512xf32> to vector<8x128xf32>
    %cst_216 = arith.constant 5.000000e-01 : f32
    %565 = vector.broadcast %cst_216 : f32 to vector<8x128xf32>
    %566 = arith.mulf %565, %564 : vector<8x128xf32>
    %567 = math.tanh %566 : vector<8x128xf32>
    %cst_217 = arith.constant 5.000000e-01 : f32
    %568 = vector.broadcast %cst_217 : f32 to vector<8x128xf32>
    %569 = arith.mulf %568, %567 : vector<8x128xf32>
    %cst_218 = arith.constant 5.000000e-01 : f32
    %570 = vector.broadcast %cst_218 : f32 to vector<8x128xf32>
    %571 = arith.addf %569, %570 : vector<8x128xf32>
    %572 = vector.extract_strided_slice %563 {offsets = [0, 128], sizes = [8, 128], strides = [1, 1]} : vector<8x512xf32> to vector<8x128xf32>
    %cst_219 = arith.constant 5.000000e-01 : f32
    %573 = vector.broadcast %cst_219 : f32 to vector<8x128xf32>
    %574 = arith.mulf %573, %572 : vector<8x128xf32>
    %575 = math.tanh %574 : vector<8x128xf32>
    %cst_220 = arith.constant 5.000000e-01 : f32
    %576 = vector.broadcast %cst_220 : f32 to vector<8x128xf32>
    %577 = arith.mulf %576, %575 : vector<8x128xf32>
    %cst_221 = arith.constant 5.000000e-01 : f32
    %578 = vector.broadcast %cst_221 : f32 to vector<8x128xf32>
    %579 = arith.addf %577, %578 : vector<8x128xf32>
    %580 = vector.extract_strided_slice %563 {offsets = [0, 256], sizes = [8, 128], strides = [1, 1]} : vector<8x512xf32> to vector<8x128xf32>
    %581 = math.tanh %580 : vector<8x128xf32>
    %582 = vector.extract_strided_slice %563 {offsets = [0, 384], sizes = [8, 128], strides = [1, 1]} : vector<8x512xf32> to vector<8x128xf32>
    %cst_222 = arith.constant 5.000000e-01 : f32
    %583 = vector.broadcast %cst_222 : f32 to vector<8x128xf32>
    %584 = arith.mulf %583, %582 : vector<8x128xf32>
    %585 = math.tanh %584 : vector<8x128xf32>
    %cst_223 = arith.constant 5.000000e-01 : f32
    %586 = vector.broadcast %cst_223 : f32 to vector<8x128xf32>
    %587 = arith.mulf %586, %585 : vector<8x128xf32>
    %cst_224 = arith.constant 5.000000e-01 : f32
    %588 = vector.broadcast %cst_224 : f32 to vector<8x128xf32>
    %589 = arith.addf %587, %588 : vector<8x128xf32>
    %590 = arith.mulf %579, %555 : vector<8x128xf32>
    %591 = arith.mulf %571, %581 : vector<8x128xf32>
    %592 = arith.addf %590, %591 : vector<8x128xf32>
    %593 = math.tanh %592 : vector<8x128xf32>
    %594 = arith.mulf %589, %593 : vector<8x128xf32>
    %c0_225 = arith.constant 0 : index
    %595 = arith.index_cast %c5_i32_210 : i32 to index
    %c0_226 = arith.constant 0 : index
    %c0_227 = arith.constant 0 : index
    %596 = vector.load %arg3[%c0_225, %595, %c0_226, %c0_227] : memref<1x8x8x128xbf16, #tpu.memory_space<vmem>>, vector<1x1x8x128xbf16>
    %597 = vector.shape_cast %596 : vector<1x1x8x128xbf16> to vector<8x128xbf16>
    %598 = arith.extf %597 : vector<8x128xbf16> to vector<8x128xf32>
    %599 = arith.subf %594, %552 : vector<8x128xf32>
    %600 = arith.mulf %598, %599 : vector<8x128xf32>
    %601 = arith.addf %552, %600 : vector<8x128xf32>
    %602 = arith.subf %592, %555 : vector<8x128xf32>
    %603 = arith.mulf %598, %602 : vector<8x128xf32>
    %604 = arith.addf %555, %603 : vector<8x128xf32>
    %c6_i32_228 = arith.constant 6 : i32
    %c8_i32_229 = arith.constant 8 : i32
    %605 = arith.muli %c6_i32_228, %c8_i32_229 : i32
    %606 = tpu.assume_multiple %605, 8 : i32
    %607 = arith.index_cast %606 : i32 to index
    %c0_230 = arith.constant 0 : index
    %608 = vector.load %arg15[%607, %c0_230] : memref<64x512xf32, #tpu.memory_space<vmem>>, vector<8x512xf32>
    %609 = arith.truncf %601 : vector<8x128xf32> to vector<8x128xbf16>
    %c0_231 = arith.constant 0 : index
    %c0_232 = arith.constant 0 : index
    %610 = vector.load %arg9[%c0_231, %c0_232] : memref<128x512xbf16, #tpu.memory_space<vmem>>, vector<128x512xbf16>
    %cst_233 = arith.constant dense<0.000000e+00> : vector<8x512xf32>
    %611 = tpu.matmul %609, %610, %cst_233 {dimension_numbers = #tpu.dot_dimension_numbers<[1], [0], [0], [1], [0, 0, 1, 1], [], []>} : vector<8x128xbf16>, vector<128x512xbf16>, vector<8x512xf32> -> vector<8x512xf32>
    %612 = arith.addf %608, %611 : vector<8x512xf32>
    %613 = vector.extract_strided_slice %612 {offsets = [0, 0], sizes = [8, 128], strides = [1, 1]} : vector<8x512xf32> to vector<8x128xf32>
    %cst_234 = arith.constant 5.000000e-01 : f32
    %614 = vector.broadcast %cst_234 : f32 to vector<8x128xf32>
    %615 = arith.mulf %614, %613 : vector<8x128xf32>
    %616 = math.tanh %615 : vector<8x128xf32>
    %cst_235 = arith.constant 5.000000e-01 : f32
    %617 = vector.broadcast %cst_235 : f32 to vector<8x128xf32>
    %618 = arith.mulf %617, %616 : vector<8x128xf32>
    %cst_236 = arith.constant 5.000000e-01 : f32
    %619 = vector.broadcast %cst_236 : f32 to vector<8x128xf32>
    %620 = arith.addf %618, %619 : vector<8x128xf32>
    %621 = vector.extract_strided_slice %612 {offsets = [0, 128], sizes = [8, 128], strides = [1, 1]} : vector<8x512xf32> to vector<8x128xf32>
    %cst_237 = arith.constant 5.000000e-01 : f32
    %622 = vector.broadcast %cst_237 : f32 to vector<8x128xf32>
    %623 = arith.mulf %622, %621 : vector<8x128xf32>
    %624 = math.tanh %623 : vector<8x128xf32>
    %cst_238 = arith.constant 5.000000e-01 : f32
    %625 = vector.broadcast %cst_238 : f32 to vector<8x128xf32>
    %626 = arith.mulf %625, %624 : vector<8x128xf32>
    %cst_239 = arith.constant 5.000000e-01 : f32
    %627 = vector.broadcast %cst_239 : f32 to vector<8x128xf32>
    %628 = arith.addf %626, %627 : vector<8x128xf32>
    %629 = vector.extract_strided_slice %612 {offsets = [0, 256], sizes = [8, 128], strides = [1, 1]} : vector<8x512xf32> to vector<8x128xf32>
    %630 = math.tanh %629 : vector<8x128xf32>
    %631 = vector.extract_strided_slice %612 {offsets = [0, 384], sizes = [8, 128], strides = [1, 1]} : vector<8x512xf32> to vector<8x128xf32>
    %cst_240 = arith.constant 5.000000e-01 : f32
    %632 = vector.broadcast %cst_240 : f32 to vector<8x128xf32>
    %633 = arith.mulf %632, %631 : vector<8x128xf32>
    %634 = math.tanh %633 : vector<8x128xf32>
    %cst_241 = arith.constant 5.000000e-01 : f32
    %635 = vector.broadcast %cst_241 : f32 to vector<8x128xf32>
    %636 = arith.mulf %635, %634 : vector<8x128xf32>
    %cst_242 = arith.constant 5.000000e-01 : f32
    %637 = vector.broadcast %cst_242 : f32 to vector<8x128xf32>
    %638 = arith.addf %636, %637 : vector<8x128xf32>
    %639 = arith.mulf %628, %604 : vector<8x128xf32>
    %640 = arith.mulf %620, %630 : vector<8x128xf32>
    %641 = arith.addf %639, %640 : vector<8x128xf32>
    %642 = math.tanh %641 : vector<8x128xf32>
    %643 = arith.mulf %638, %642 : vector<8x128xf32>
    %c0_243 = arith.constant 0 : index
    %644 = arith.index_cast %c6_i32_228 : i32 to index
    %c0_244 = arith.constant 0 : index
    %c0_245 = arith.constant 0 : index
    %645 = vector.load %arg3[%c0_243, %644, %c0_244, %c0_245] : memref<1x8x8x128xbf16, #tpu.memory_space<vmem>>, vector<1x1x8x128xbf16>
    %646 = vector.shape_cast %645 : vector<1x1x8x128xbf16> to vector<8x128xbf16>
    %647 = arith.extf %646 : vector<8x128xbf16> to vector<8x128xf32>
    %648 = arith.subf %643, %601 : vector<8x128xf32>
    %649 = arith.mulf %647, %648 : vector<8x128xf32>
    %650 = arith.addf %601, %649 : vector<8x128xf32>
    %651 = arith.subf %641, %604 : vector<8x128xf32>
    %652 = arith.mulf %647, %651 : vector<8x128xf32>
    %653 = arith.addf %604, %652 : vector<8x128xf32>
    %c7_i32 = arith.constant 7 : i32
    %c8_i32_246 = arith.constant 8 : i32
    %654 = arith.muli %c7_i32, %c8_i32_246 : i32
    %655 = tpu.assume_multiple %654, 8 : i32
    %656 = arith.index_cast %655 : i32 to index
    %c0_247 = arith.constant 0 : index
    %657 = vector.load %arg15[%656, %c0_247] : memref<64x512xf32, #tpu.memory_space<vmem>>, vector<8x512xf32>
    %658 = arith.truncf %650 : vector<8x128xf32> to vector<8x128xbf16>
    %c0_248 = arith.constant 0 : index
    %c0_249 = arith.constant 0 : index
    %659 = vector.load %arg9[%c0_248, %c0_249] : memref<128x512xbf16, #tpu.memory_space<vmem>>, vector<128x512xbf16>
    %cst_250 = arith.constant dense<0.000000e+00> : vector<8x512xf32>
    %660 = tpu.matmul %658, %659, %cst_250 {dimension_numbers = #tpu.dot_dimension_numbers<[1], [0], [0], [1], [0, 0, 1, 1], [], []>} : vector<8x128xbf16>, vector<128x512xbf16>, vector<8x512xf32> -> vector<8x512xf32>
    %661 = arith.addf %657, %660 : vector<8x512xf32>
    %662 = vector.extract_strided_slice %661 {offsets = [0, 0], sizes = [8, 128], strides = [1, 1]} : vector<8x512xf32> to vector<8x128xf32>
    %cst_251 = arith.constant 5.000000e-01 : f32
    %663 = vector.broadcast %cst_251 : f32 to vector<8x128xf32>
    %664 = arith.mulf %663, %662 : vector<8x128xf32>
    %665 = math.tanh %664 : vector<8x128xf32>
    %cst_252 = arith.constant 5.000000e-01 : f32
    %666 = vector.broadcast %cst_252 : f32 to vector<8x128xf32>
    %667 = arith.mulf %666, %665 : vector<8x128xf32>
    %cst_253 = arith.constant 5.000000e-01 : f32
    %668 = vector.broadcast %cst_253 : f32 to vector<8x128xf32>
    %669 = arith.addf %667, %668 : vector<8x128xf32>
    %670 = vector.extract_strided_slice %661 {offsets = [0, 128], sizes = [8, 128], strides = [1, 1]} : vector<8x512xf32> to vector<8x128xf32>
    %cst_254 = arith.constant 5.000000e-01 : f32
    %671 = vector.broadcast %cst_254 : f32 to vector<8x128xf32>
    %672 = arith.mulf %671, %670 : vector<8x128xf32>
    %673 = math.tanh %672 : vector<8x128xf32>
    %cst_255 = arith.constant 5.000000e-01 : f32
    %674 = vector.broadcast %cst_255 : f32 to vector<8x128xf32>
    %675 = arith.mulf %674, %673 : vector<8x128xf32>
    %cst_256 = arith.constant 5.000000e-01 : f32
    %676 = vector.broadcast %cst_256 : f32 to vector<8x128xf32>
    %677 = arith.addf %675, %676 : vector<8x128xf32>
    %678 = vector.extract_strided_slice %661 {offsets = [0, 256], sizes = [8, 128], strides = [1, 1]} : vector<8x512xf32> to vector<8x128xf32>
    %679 = math.tanh %678 : vector<8x128xf32>
    %680 = vector.extract_strided_slice %661 {offsets = [0, 384], sizes = [8, 128], strides = [1, 1]} : vector<8x512xf32> to vector<8x128xf32>
    %cst_257 = arith.constant 5.000000e-01 : f32
    %681 = vector.broadcast %cst_257 : f32 to vector<8x128xf32>
    %682 = arith.mulf %681, %680 : vector<8x128xf32>
    %683 = math.tanh %682 : vector<8x128xf32>
    %cst_258 = arith.constant 5.000000e-01 : f32
    %684 = vector.broadcast %cst_258 : f32 to vector<8x128xf32>
    %685 = arith.mulf %684, %683 : vector<8x128xf32>
    %cst_259 = arith.constant 5.000000e-01 : f32
    %686 = vector.broadcast %cst_259 : f32 to vector<8x128xf32>
    %687 = arith.addf %685, %686 : vector<8x128xf32>
    %688 = arith.mulf %677, %653 : vector<8x128xf32>
    %689 = arith.mulf %669, %679 : vector<8x128xf32>
    %690 = arith.addf %688, %689 : vector<8x128xf32>
    %691 = math.tanh %690 : vector<8x128xf32>
    %692 = arith.mulf %687, %691 : vector<8x128xf32>
    %c0_260 = arith.constant 0 : index
    %693 = arith.index_cast %c7_i32 : i32 to index
    %c0_261 = arith.constant 0 : index
    %c0_262 = arith.constant 0 : index
    %694 = vector.load %arg3[%c0_260, %693, %c0_261, %c0_262] : memref<1x8x8x128xbf16, #tpu.memory_space<vmem>>, vector<1x1x8x128xbf16>
    %695 = vector.shape_cast %694 : vector<1x1x8x128xbf16> to vector<8x128xbf16>
    %696 = arith.extf %695 : vector<8x128xbf16> to vector<8x128xf32>
    %697 = arith.subf %692, %650 : vector<8x128xf32>
    %698 = arith.mulf %696, %697 : vector<8x128xf32>
    %699 = arith.addf %650, %698 : vector<8x128xf32>
    %700 = arith.subf %690, %653 : vector<8x128xf32>
    %701 = arith.mulf %696, %700 : vector<8x128xf32>
    %702 = arith.addf %653, %701 : vector<8x128xf32>
    %c8_i32_263 = arith.constant 8 : i32
    %c0_264 = arith.constant 0 : index
    %c0_265 = arith.constant 0 : index
    %703 = vector.load %arg11[%c0_264, %c0_265] : memref<128x3xf32, #tpu.memory_space<vmem>>, vector<128x3xf32>
    %cst_266 = arith.constant dense<0.000000e+00> : vector<8x3xf32>
    %704 = tpu.matmul %699, %703, %cst_266 {dimension_numbers = #tpu.dot_dimension_numbers<[1], [0], [0], [1], [0, 0, 1, 1], [], []>} : vector<8x128xf32>, vector<128x3xf32>, vector<8x3xf32> -> vector<8x3xf32>
    %c0_267 = arith.constant 0 : index
    %c0_268 = arith.constant 0 : index
    %705 = vector.load %arg12[%c0_267, %c0_268] : memref<1x3xf32, #tpu.memory_space<vmem>>, vector<1x3xf32>
    %706 = vector.broadcast %705 : vector<1x3xf32> to vector<8x3xf32>
    %707 = arith.addf %704, %706 : vector<8x3xf32>
    %c0_269 = arith.constant 0 : index
    %c0_270 = arith.constant 0 : index
    %c0_271 = arith.constant 0 : index
    %708 = vector.load %arg13[%c0_269, %c0_270, %c0_271] : memref<1x8x3xf32, #tpu.memory_space<vmem>>, vector<1x8x3xf32>
    %709 = vector.shape_cast %708 : vector<1x8x3xf32> to vector<8x3xf32>
    %710 = vector.shape_cast %707 : vector<8x3xf32> to vector<1x8x3xf32>
    tpu.vector_store %arg13[%c0_269, %c0_270, %c0_271], %710 {strides = array<i32>} : memref<1x8x3xf32, #tpu.memory_space<vmem>>, vector<1x8x3xf32>,
    return
  }
  func.func @transform_0(%arg0: i32) -> (i32, i32, i32) {
    %c0_i32 = arith.constant 0 : i32
    %c0_i32_0 = arith.constant 0 : i32
    %c0_i32_1 = arith.constant 0 : i32
    return %arg0, %c0_i32, %c0_i32_0 : i32, i32, i32
  }
  func.func @transform_1(%arg0: i32) -> (i32, i32, i32) {
    %c0_i32 = arith.constant 0 : i32
    %c0_i32_0 = arith.constant 0 : i32
    %c0_i32_1 = arith.constant 0 : i32
    return %arg0, %c0_i32, %c0_i32_0 : i32, i32, i32
  }
  func.func @transform_2(%arg0: i32) -> (i32, i32, i32, i32) {
    %c0_i32 = arith.constant 0 : i32
    %c0_i32_0 = arith.constant 0 : i32
    %c0_i32_1 = arith.constant 0 : i32
    %c0_i32_2 = arith.constant 0 : i32
    return %arg0, %c0_i32, %c0_i32_0, %c0_i32_1 : i32, i32, i32, i32
  }
  func.func @transform_3(%arg0: i32) -> (i32, i32, i32, i32) {
    %c0_i32 = arith.constant 0 : i32
    %c0_i32_0 = arith.constant 0 : i32
    %c0_i32_1 = arith.constant 0 : i32
    %c0_i32_2 = arith.constant 0 : i32
    return %arg0, %c0_i32, %c0_i32_0, %c0_i32_1 : i32, i32, i32, i32
  }
  func.func @transform_4(%arg0: i32) -> (i32, i32) {
    %c0_i32 = arith.constant 0 : i32
    %c0_i32_0 = arith.constant 0 : i32
    %c0_i32_1 = arith.constant 0 : i32
    return %c0_i32, %c0_i32_0 : i32, i32
  }
  func.func @transform_5(%arg0: i32) -> (i32, i32) {
    %c0_i32 = arith.constant 0 : i32
    %c0_i32_0 = arith.constant 0 : i32
    %c0_i32_1 = arith.constant 0 : i32
    return %c0_i32, %c0_i32_0 : i32, i32
  }
  func.func @transform_6(%arg0: i32) -> (i32, i32) {
    %c0_i32 = arith.constant 0 : i32
    %c0_i32_0 = arith.constant 0 : i32
    %c0_i32_1 = arith.constant 0 : i32
    return %c0_i32, %c0_i32_0 : i32, i32
  }
  func.func @transform_7(%arg0: i32) -> (i32, i32) {
    %c0_i32 = arith.constant 0 : i32
    %c0_i32_0 = arith.constant 0 : i32
    %c0_i32_1 = arith.constant 0 : i32
    return %c0_i32, %c0_i32_0 : i32, i32
  }
  func.func @transform_8(%arg0: i32) -> (i32, i32) {
    %c0_i32 = arith.constant 0 : i32
    %c0_i32_0 = arith.constant 0 : i32
    %c0_i32_1 = arith.constant 0 : i32
    return %c0_i32, %c0_i32_0 : i32, i32
  }
  func.func @transform_9(%arg0: i32) -> (i32, i32) {
    %c0_i32 = arith.constant 0 : i32
    %c0_i32_0 = arith.constant 0 : i32
    %c0_i32_1 = arith.constant 0 : i32
    return %c0_i32, %c0_i32_0 : i32, i32
  }
  func.func @transform_10(%arg0: i32) -> (i32, i32) {
    %c0_i32 = arith.constant 0 : i32
    %c0_i32_0 = arith.constant 0 : i32
    %c0_i32_1 = arith.constant 0 : i32
    return %c0_i32, %c0_i32_0 : i32, i32
  }
  func.func @transform_11(%arg0: i32) -> (i32, i32) {
    %c0_i32 = arith.constant 0 : i32
    %c0_i32_0 = arith.constant 0 : i32
    %c0_i32_1 = arith.constant 0 : i32
    return %c0_i32, %c0_i32_0 : i32, i32
  }
  func.func @transform_12(%arg0: i32) -> (i32, i32, i32) {
    %c0_i32 = arith.constant 0 : i32
    %c0_i32_0 = arith.constant 0 : i32
    %c0_i32_1 = arith.constant 0 : i32
    return %arg0, %c0_i32, %c0_i32_0 : i32, i32, i32
  }
}

</mosaic_0001>

<llo_original>
// kernel: tpu_custom_call.1
$region0: #{tpu_custom_call.1}
  #allocation0 [shape = 'u32[]', space=smem, size = 0x4, offset = 0x4, fixed_abs, tag = 'smem constant byte address 0x4 - core index']
  #allocation1 [shape = 'u32[144,128]{1,0:T(1,128)}', space=vmem, size = 0x12000, scoped, tag = 'internal scratch']
  #allocation2 [shape = 'f32[48,512]{1,0:T(8,128)}', space=vmem, size = 0x18000, scoped, tag = 'scratch operand']
  #allocation3 [shape = 'f32[64,512]{1,0:T(8,128)}', space=vmem, size = 0x20000, scoped, tag = 'scratch operand']
  %s0 = inlined_call_operand.vmem [shape: bf16[1,64,32], index: 0, kind: input, shape index: {}]
  %s1 = inlined_call_operand.vmem [shape: bf16[1,48,32], index: 1, kind: input, shape index: {}]
  %s2 = inlined_call_operand.vmem [shape: bf16[1,8,8,128], index: 2, kind: input, shape index: {}]
  %s3 = inlined_call_operand.vmem [shape: bf16[1,6,8,128], index: 3, kind: input, shape index: {}]
  %s4 = inlined_call_operand.vmem [shape: bf16[32,512], index: 4, kind: input, shape index: {}]
  %s5 = inlined_call_operand.hbm [shape: bf16[128,512], index: 5, kind: input, shape index: {}]
  %s6 = inlined_call_operand.vmem [shape: f32[1,512], index: 6, kind: input, shape index: {}]
  %s7 = inlined_call_operand.vmem [shape: bf16[32,512], index: 7, kind: input, shape index: {}]
  %s8 = inlined_call_operand.hbm [shape: bf16[128,512], index: 8, kind: input, shape index: {}]
  %s9 = inlined_call_operand.vmem [shape: f32[1,512], index: 9, kind: input, shape index: {}]
  %s10 = inlined_call_operand.vmem [shape: f32[128,3], index: 10, kind: input, shape index: {}]
  %s11 = inlined_call_operand.vmem [shape: f32[1,3], index: 11, kind: input, shape index: {}]
  %s12 = inlined_call_operand.vmem [shape: f32[1,8,3], index: 12, kind: output, shape index: {}]
  %s13 = sld [smem:[#allocation0]]
  $region66: #{tpu_custom_call.1} parent=0
    _
  %s15 = ssub.s32 1, %s13
  %s16 = scalar_select 0, %s15, %s13
  $region1: #{tpu_custom_call.1} parent=0
    #allocation4 [shape = 'u8[131072]{0}', space=vmem, size = 0x20000, scoped, tag = 'input window, operand 5, single buffered']
    #allocation5 [shape = 's32[1]{0}', space=sflag, size = 0x4, scoped, tag = 'scoped memory for tpu_custom_call.1']
    #allocation6 [shape = 'u8[131072]{0}', space=vmem, size = 0x20000, scoped, tag = 'input window, operand 8, single buffered']
    #allocation7 [shape = 's32[1]{0}', space=sflag, size = 0x4, scoped, tag = 'scoped memory for tpu_custom_call.1']
    %17 = vsyncpa [#allocation5], 0
    %18 = vsyncpa [#allocation7], 0
    // Predicated region
    $region2: #{tpu_custom_call.1} parent=1 // pred_check
      _
    $region3: #{tpu_custom_call.1} parent=1 // pred_check_branch
      %20 = sbr.rel (0) target = $region5
    $region4: #{tpu_custom_call.1} parent=1 // pred_region
      _
    $region5: #{tpu_custom_call.1} parent=1 // pred_fallthru
      _
    // Predicated region
    $region6: #{tpu_custom_call.1} parent=1 // pred_check
      _
    $region7: #{tpu_custom_call.1} parent=1 // pred_check_branch
      %22 = sbr.rel (0) target = $region9
    $region8: #{tpu_custom_call.1} parent=1 // pred_region
      _
    $region9: #{tpu_custom_call.1} parent=1 // pred_fallthru
      _
    // Predicated region
    $region10: #{tpu_custom_call.1} parent=1 // pred_check
      _
    $region11: #{tpu_custom_call.1} parent=1 // pred_check_branch
      %24 = sbr.rel (0) target = $region13
    $region12: #{tpu_custom_call.1} parent=1 // pred_region
      _
    $region13: #{tpu_custom_call.1} parent=1 // pred_fallthru
      _
    // Predicated region
    $region14: #{tpu_custom_call.1} parent=1 // pred_check
      _
    $region15: #{tpu_custom_call.1} parent=1 // pred_check_branch
      %26 = sbr.rel (0) target = $region17
    $region16: #{tpu_custom_call.1} parent=1 // pred_region
      _
    $region17: #{tpu_custom_call.1} parent=1 // pred_fallthru
      _
    // Predicated region
    $region18: #{tpu_custom_call.1} parent=1 // pred_check
      _
    $region19: #{tpu_custom_call.1} parent=1 // pred_check_branch
      %28 = sbr.rel (0) target = $region21
    $region20: #{tpu_custom_call.1} parent=1 // pred_region
      _
    $region21: #{tpu_custom_call.1} parent=1 // pred_fallthru
      _
    // Predicated region
    $region22: #{tpu_custom_call.1} parent=1 // pred_check
      _
    $region23: #{tpu_custom_call.1} parent=1 // pred_check_branch
      %30 = sbr.rel (0) target = $region25
    $region24: #{tpu_custom_call.1} parent=1 // pred_region
      %s32 = ssub.s32 4096, 4096
      %33 = vsyncadd [#allocation5], %s32
      %s34 = sshll.u32 [#allocation4], 4
      %s35 = int_to_ptr.vmem [resolvable:$true] %s34
      %40 = dma.hbm_to_vmem [thread:$0]  %s5, 4096, %s35, [#allocation5], 256, 256, 16
    $region25: #{tpu_custom_call.1} parent=1 // pred_fallthru
      _
    // Predicated region
    $region26: #{tpu_custom_call.1} parent=1 // pred_check
      _
    $region27: #{tpu_custom_call.1} parent=1 // pred_check_branch
      %42 = sbr.rel (0) target = $region29
    $region28: #{tpu_custom_call.1} parent=1 // pred_region
      _
    $region29: #{tpu_custom_call.1} parent=1 // pred_fallthru
      _
    // Predicated region
    $region30: #{tpu_custom_call.1} parent=1 // pred_check
      _
    $region31: #{tpu_custom_call.1} parent=1 // pred_check_branch
      %44 = sbr.rel (0) target = $region33
    $region32: #{tpu_custom_call.1} parent=1 // pred_region
      _
    $region33: #{tpu_custom_call.1} parent=1 // pred_fallthru
      _
    // Predicated region
    $region34: #{tpu_custom_call.1} parent=1 // pred_check
      _
    $region35: #{tpu_custom_call.1} parent=1 // pred_check_branch
      %46 = sbr.rel (0) target = $region37
    $region36: #{tpu_custom_call.1} parent=1 // pred_region
      %s48 = ssub.s32 4096, 4096
      %49 = vsyncadd [#allocation7], %s48
      %s50 = sshll.u32 [#allocation6], 4
      %s51 = int_to_ptr.vmem [resolvable:$true] %s50
      %56 = dma.hbm_to_vmem [thread:$0]  %s8, 4096, %s51, [#allocation7], 256, 256, 16
    $region37: #{tpu_custom_call.1} parent=1 // pred_fallthru
      _
    // Predicated region
    $region38: #{tpu_custom_call.1} parent=1 // pred_check
      _
    $region39: #{tpu_custom_call.1} parent=1 // pred_check_branch
      %58 = sbr.rel (0) target = $region41
    $region40: #{tpu_custom_call.1} parent=1 // pred_region
      _
    $region41: #{tpu_custom_call.1} parent=1 // pred_fallthru
      _
    // Predicated region
    $region42: #{tpu_custom_call.1} parent=1 // pred_check
      _
    $region43: #{tpu_custom_call.1} parent=1 // pred_check_branch
      %60 = sbr.rel (0) target = $region45
    $region44: #{tpu_custom_call.1} parent=1 // pred_region
      _
    $region45: #{tpu_custom_call.1} parent=1 // pred_fallthru
      _
    // Predicated region
    $region46: #{tpu_custom_call.1} parent=1 // pred_check
      _
    $region47: #{tpu_custom_call.1} parent=1 // pred_check_branch
      %62 = sbr.rel (0) target = $region49
    $region48: #{tpu_custom_call.1} parent=1 // pred_region
      _
    $region49: #{tpu_custom_call.1} parent=1 // pred_fallthru
      _
    // Predicated region
    $region50: #{tpu_custom_call.1} parent=1 // pred_check
      _
    $region51: #{tpu_custom_call.1} parent=1 // pred_check_branch
      %64 = sbr.rel (0) target = $region53
    $region52: #{tpu_custom_call.1} parent=1 // pred_region
      %65 = dma.done [#allocation5], 4096
    $region53: #{tpu_custom_call.1} parent=1 // pred_fallthru
      _
    // Predicated region
    $region54: #{tpu_custom_call.1} parent=1 // pred_check
      _
    $region55: #{tpu_custom_call.1} parent=1 // pred_check_branch
      %67 = sbr.rel (0) target = $region57
    $region56: #{tpu_custom_call.1} parent=1 // pred_region
      %68 = dma.done [#allocation7], 4096
    $region57: #{tpu_custom_call.1} parent=1 // pred_fallthru
      _
    %v70 = vld [vmem:[%s1] sm:$0xf]
    %v71 = vld [vmem:[%s1 + $0x4] sm:$0xf]
    %v72 = vld [vmem:[%s1 + $0x8] sm:$0xf]
    %v73 = vld [vmem:[%s1 + $0xc] sm:$0xf]
    %v74 = vld [vmem:[%s1 + $0x10] sm:$0xf]
    %v75 = vld [vmem:[%s1 + $0x14] sm:$0xf]
    %v76 = vld [vmem:[%s4] sm:$0xff]
    %v77 = vld [vmem:[%s4 + $0x8] sm:$0xff]
    %v78 = vld [vmem:[%s4 + $0x10] sm:$0xff]
    %v79 = vld [vmem:[%s4 + $0x18] sm:$0xff]
    %v80 = vld [vmem:[%s4 + $0x20] sm:$0xff]
    %v81 = vld [vmem:[%s4 + $0x28] sm:$0xff]
    %v82 = vld [vmem:[%s4 + $0x30] sm:$0xff]
    %v83 = vld [vmem:[%s4 + $0x38] sm:$0xff]
    %v84 = vld [vmem:[%s6] sm:$0xf]
    %v86 = vlaneseq
    %v87 = vshrl.u32 %v86, 7
    %v88 = vsub.s32 0, %v87
    %v89 = vrot.slane %v84, %v88
    %v90 = vlaneseq
    %v91 = vshrl.u32 %v90, 7
    %v92 = vsub.s32 1, %v91
    %v93 = vrot.slane %v84, %v92
    %v94 = vlaneseq
    %v95 = vshrl.u32 %v94, 7
    %v96 = vsub.s32 2, %v95
    %v97 = vrot.slane %v84, %v96
    %v98 = vlaneseq
    %v99 = vshrl.u32 %v98, 7
    %v100 = vsub.s32 3, %v99
    %v101 = vrot.slane %v84, %v100
    %v112 = vunpack.c.l.b16 %v70
    %v113 = vunpack.c.l.b16 %v71
    %v114 = vunpack.c.l.b16 %v72
    %v115 = vunpack.c.l.b16 %v73
    %v116 = vunpack.c.l.b16 %v74
    %v117 = vunpack.c.l.b16 %v75
    %v118 = vpack.c.b16 %v113, %v112
    %v119 = vpack.c.b16 %v115, %v114
    %v120 = vpack.c.b16 %v117, %v116
    %v129 = vunpack.c.l.b16 %v76
    %v130 = vunpack.c.h.b16 %v76
    %v131 = vunpack.c.l.b16 %v77
    %v132 = vunpack.c.h.b16 %v77
    %v133 = vunpack.c.l.b16 %v78
    %v134 = vunpack.c.h.b16 %v78
    %v135 = vunpack.c.l.b16 %v79
    %v136 = vunpack.c.h.b16 %v79
    %v137 = vunpack.c.l.b16 %v80
    %v138 = vunpack.c.h.b16 %v80
    %v139 = vunpack.c.l.b16 %v81
    %v140 = vunpack.c.h.b16 %v81
    %v141 = vunpack.c.l.b16 %v82
    %v142 = vunpack.c.h.b16 %v82
    %v143 = vunpack.c.l.b16 %v83
    %v144 = vunpack.c.h.b16 %v83
    %v145 = vpack.c.b16 %v133, %v129
    %v146 = vpack.c.b16 %v134, %v130
    %v147 = vpack.c.b16 %v135, %v131
    %v148 = vpack.c.b16 %v136, %v132
    %v149 = vpack.c.b16 %v141, %v137
    %v150 = vpack.c.b16 %v142, %v138
    %v151 = vpack.c.b16 %v143, %v139
    %v152 = vpack.c.b16 %v144, %v140
    %vm161 = vcmask 261120
    %v163 = vsel %vm161, %v118, 0
    %v166 = vsel %vm161, %v119, 0
    %v169 = vsel %vm161, %v120, 0
    %171 = vmatprep.subr.bf16.mxu0 %v146
    %172 = vmatpush1.bf16.msra.mxu0 %v145
    %173 = vmatprep.subr.bf16.mxu0 %v150
    %174 = vmatpush1.bf16.msra.mxu0 %v149
    %175 = vmatprep.subr.bf16.mxu0 0
    %176 = vmatpush1.bf16.msra.mxu0 0
    %177 = vmatprep.subr.bf16.mxu0 0
    %178 = vmatpush1.bf16.msra.mxu0 0
    %179 = vmatprep.subr.bf16.mxu0 0
    %180 = vmatpush1.bf16.msra.mxu0 0
    %181 = vmatprep.subr.bf16.mxu0 0
    %182 = vmatpush1.bf16.msra.mxu0 0
    %183 = vmatprep.subr.bf16.mxu0 0
    %184 = vmatpush1.bf16.msra.mxu0 0
    %185 = vmatprep.subr.bf16.mxu0 0
    %186 = vmatpush1.bf16.msra.mxu0 0
    %187 = vmatprep.subr.bf16.mxu0 0
    %188 = vmatpush1.bf16.msra.mxu0 0
    %189 = vmatprep.subr.bf16.mxu0 0
    %190 = vmatpush1.bf16.msra.mxu0 0
    %191 = vmatprep.subr.bf16.mxu0 0
    %192 = vmatpush1.bf16.msra.mxu0 0
    %193 = vmatprep.subr.bf16.mxu0 0
    %194 = vmatpush1.bf16.msra.mxu0 0
    %195 = vmatprep.subr.bf16.mxu0 0
    %196 = vmatpush1.bf16.msra.mxu0 0
    %197 = vmatprep.subr.bf16.mxu0 0
    %198 = vmatpush1.bf16.msra.mxu0 0
    %199 = vmatprep.subr.bf16.mxu0 0
    %200 = vmatpush1.bf16.msra.mxu0 0
    %201 = vmatprep.subr.bf16.mxu0 0
    %202 = vmatpush1.bf16.msra.mxu0 0
    %203 = vmatprep.mubr.bf16.mxu0 0
    %204 = vmatmul.mubr.bf16.gmra.mrb[0].mxu0 %v163
    %v205 = vpop.f32.mrb[0].mxu0
    %v206 = vadd.f32 %v89, %v205
    %v207 = vpop.f32.mrb[0].mxu0
    %v208 = vadd.f32 %v93, %v207
    %v209 = vpop.f32.mrb[0].mxu0
    %v210 = vadd.f32 %v89, %v209
    %v211 = vpop.f32.mrb[0].mxu0
    %v212 = vadd.f32 %v93, %v211
    %213 = vmatprep.mubr.bf16.mxu0 0
    %214 = vmatmul.mubr.bf16.gmra.mrb[0].mxu0 %v166
    %v215 = vpop.f32.mrb[0].mxu0
    %v216 = vadd.f32 %v89, %v215
    %v217 = vpop.f32.mrb[0].mxu0
    %v218 = vadd.f32 %v93, %v217
    %v219 = vpop.f32.mrb[0].mxu0
    %v220 = vadd.f32 %v89, %v219
    %v221 = vpop.f32.mrb[0].mxu0
    %v222 = vadd.f32 %v93, %v221
    %223 = vmatprep.mubr.bf16.mxu0 0
    %224 = vmatmul.mubr.bf16.gmra.mrb[0].mxu0 %v169
    %v225 = vpop.f32.mrb[0].mxu0
    %v226 = vadd.f32 %v89, %v225
    %v227 = vpop.f32.mrb[0].mxu0
    %v228 = vadd.f32 %v93, %v227
    %v229 = vpop.f32.mrb[0].mxu0
    %v230 = vadd.f32 %v89, %v229
    %v231 = vpop.f32.mrb[0].mxu0
    %v232 = vadd.f32 %v93, %v231
    %233 = vdwg.mxu0
    %234 = vmatprep.subr.bf16.mxu0 %v148
    %235 = vmatpush1.bf16.msra.mxu0 %v147
    %236 = vmatprep.subr.bf16.mxu0 %v152
    %237 = vmatpush1.bf16.msra.mxu0 %v151
    %238 = vmatprep.subr.bf16.mxu0 0
    %239 = vmatpush1.bf16.msra.mxu0 0
    %240 = vmatprep.subr.bf16.mxu0 0
    %241 = vmatpush1.bf16.msra.mxu0 0
    %242 = vmatprep.subr.bf16.mxu0 0
    %243 = vmatpush1.bf16.msra.mxu0 0
    %244 = vmatprep.subr.bf16.mxu0 0
    %245 = vmatpush1.bf16.msra.mxu0 0
    %246 = vmatprep.subr.bf16.mxu0 0
    %247 = vmatpush1.bf16.msra.mxu0 0
    %248 = vmatprep.subr.bf16.mxu0 0
    %249 = vmatpush1.bf16.msra.mxu0 0
    %250 = vmatprep.subr.bf16.mxu0 0
    %251 = vmatpush1.bf16.msra.mxu0 0
    %252 = vmatprep.subr.bf16.mxu0 0
    %253 = vmatpush1.bf16.msra.mxu0 0
    %254 = vmatprep.subr.bf16.mxu0 0
    %255 = vmatpush1.bf16.msra.mxu0 0
    %256 = vmatprep.subr.bf16.mxu0 0
    %257 = vmatpush1.bf16.msra.mxu0 0
    %258 = vmatprep.subr.bf16.mxu0 0
    %259 = vmatpush1.bf16.msra.mxu0 0
    %260 = vmatprep.subr.bf16.mxu0 0
    %261 = vmatpush1.bf16.msra.mxu0 0
    %262 = vmatprep.subr.bf16.mxu0 0
    %263 = vmatpush1.bf16.msra.mxu0 0
    %264 = vmatprep.subr.bf16.mxu0 0
    %265 = vmatpush1.bf16.msra.mxu0 0
    %266 = vmatprep.mubr.bf16.mxu0 0
    %267 = vmatmul.mubr.bf16.gmra.mrb[0].mxu0 %v163
    %v268 = vpop.f32.mrb[0].mxu0
    %v269 = vadd.f32 %v97, %v268
    %v270 = vpop.f32.mrb[0].mxu0
    %v271 = vadd.f32 %v101, %v270
    %v272 = vpop.f32.mrb[0].mxu0
    %v273 = vadd.f32 %v97, %v272
    %v274 = vpop.f32.mrb[0].mxu0
    %v275 = vadd.f32 %v101, %v274
    %276 = vmatprep.mubr.bf16.mxu0 0
    %277 = vmatmul.mubr.bf16.gmra.mrb[0].mxu0 %v166
    %v278 = vpop.f32.mrb[0].mxu0
    %v279 = vadd.f32 %v97, %v278
    %v280 = vpop.f32.mrb[0].mxu0
    %v281 = vadd.f32 %v101, %v280
    %v282 = vpop.f32.mrb[0].mxu0
    %v283 = vadd.f32 %v97, %v282
    %v284 = vpop.f32.mrb[0].mxu0
    %v285 = vadd.f32 %v101, %v284
    %286 = vmatprep.mubr.bf16.mxu0 0
    %287 = vmatmul.mubr.bf16.gmra.mrb[0].mxu0 %v169
    %v288 = vpop.f32.mrb[0].mxu0
    %v289 = vadd.f32 %v97, %v288
    %v290 = vpop.f32.mrb[0].mxu0
    %v291 = vadd.f32 %v101, %v290
    %v292 = vpop.f32.mrb[0].mxu0
    %v293 = vadd.f32 %v97, %v292
    %v294 = vpop.f32.mrb[0].mxu0
    %v295 = vadd.f32 %v101, %v294
    %296 = vdwg.mxu0
    %297 = vst [vmem:[#allocation2] sm:$0xff] %v206
    %298 = vst [vmem:[#allocation2 + $0x8] sm:$0xff] %v208
    %299 = vst [vmem:[#allocation2 + $0x10] sm:$0xff] %v269
    %300 = vst [vmem:[#allocation2 + $0x18] sm:$0xff] %v271
    %301 = vst [vmem:[#allocation2 + $0x20] sm:$0xff] %v210
    %302 = vst [vmem:[#allocation2 + $0x28] sm:$0xff] %v212
    %303 = vst [vmem:[#allocation2 + $0x30] sm:$0xff] %v273
    %304 = vst [vmem:[#allocation2 + $0x38] sm:$0xff] %v275
    %305 = vst [vmem:[#allocation2 + $0x40] sm:$0xff] %v216
    %306 = vst [vmem:[#allocation2 + $0x48] sm:$0xff] %v218
    %307 = vst [vmem:[#allocation2 + $0x50] sm:$0xff] %v279
    %308 = vst [vmem:[#allocation2 + $0x58] sm:$0xff] %v281
    %309 = vst [vmem:[#allocation2 + $0x60] sm:$0xff] %v220
    %310 = vst [vmem:[#allocation2 + $0x68] sm:$0xff] %v222
    %311 = vst [vmem:[#allocation2 + $0x70] sm:$0xff] %v283
    %312 = vst [vmem:[#allocation2 + $0x78] sm:$0xff] %v285
    %313 = vst [vmem:[#allocation2 + $0x80] sm:$0xff] %v226
    %314 = vst [vmem:[#allocation2 + $0x88] sm:$0xff] %v228
    %315 = vst [vmem:[#allocation2 + $0x90] sm:$0xff] %v289
    %316 = vst [vmem:[#allocation2 + $0x98] sm:$0xff] %v291
    %317 = vst [vmem:[#allocation2 + $0xa0] sm:$0xff] %v230
    %318 = vst [vmem:[#allocation2 + $0xa8] sm:$0xff] %v232
    %319 = vst [vmem:[#allocation2 + $0xb0] sm:$0xff] %v293
    %320 = vst [vmem:[#allocation2 + $0xb8] sm:$0xff] %v295
    %v321 = vld [vmem:[%s0] sm:$0xf]
    %v322 = vld [vmem:[%s0 + $0x4] sm:$0xf]
    %v323 = vld [vmem:[%s0 + $0x8] sm:$0xf]
    %v324 = vld [vmem:[%s0 + $0xc] sm:$0xf]
    %v325 = vld [vmem:[%s0 + $0x10] sm:$0xf]
    %v326 = vld [vmem:[%s0 + $0x14] sm:$0xf]
    %v327 = vld [vmem:[%s0 + $0x18] sm:$0xf]
    %v328 = vld [vmem:[%s0 + $0x1c] sm:$0xf]
    %v329 = vld [vmem:[%s7] sm:$0xff]
    %v330 = vld [vmem:[%s7 + $0x8] sm:$0xff]
    %v331 = vld [vmem:[%s7 + $0x10] sm:$0xff]
    %v332 = vld [vmem:[%s7 + $0x18] sm:$0xff]
    %v333 = vld [vmem:[%s7 + $0x20] sm:$0xff]
    %v334 = vld [vmem:[%s7 + $0x28] sm:$0xff]
    %v335 = vld [vmem:[%s7 + $0x30] sm:$0xff]
    %v336 = vld [vmem:[%s7 + $0x38] sm:$0xff]
    %v337 = vld [vmem:[%s9] sm:$0xf]
    %v339 = vlaneseq
    %v340 = vshrl.u32 %v339, 7
    %v341 = vsub.s32 0, %v340
    %v342 = vrot.slane %v337, %v341
    %v343 = vlaneseq
    %v344 = vshrl.u32 %v343, 7
    %v345 = vsub.s32 1, %v344
    %v346 = vrot.slane %v337, %v345
    %v347 = vlaneseq
    %v348 = vshrl.u32 %v347, 7
    %v349 = vsub.s32 2, %v348
    %v350 = vrot.slane %v337, %v349
    %v351 = vlaneseq
    %v352 = vshrl.u32 %v351, 7
    %v353 = vsub.s32 3, %v352
    %v354 = vrot.slane %v337, %v353
    %v367 = vunpack.c.l.b16 %v321
    %v368 = vunpack.c.l.b16 %v322
    %v369 = vunpack.c.l.b16 %v323
    %v370 = vunpack.c.l.b16 %v324
    %v371 = vunpack.c.l.b16 %v325
    %v372 = vunpack.c.l.b16 %v326
    %v373 = vunpack.c.l.b16 %v327
    %v374 = vunpack.c.l.b16 %v328
    %v375 = vpack.c.b16 %v368, %v367
    %v376 = vpack.c.b16 %v370, %v369
    %v377 = vpack.c.b16 %v372, %v371
    %v378 = vpack.c.b16 %v374, %v373
    %v387 = vunpack.c.l.b16 %v329
    %v388 = vunpack.c.h.b16 %v329
    %v389 = vunpack.c.l.b16 %v330
    %v390 = vunpack.c.h.b16 %v330
    %v391 = vunpack.c.l.b16 %v331
    %v392 = vunpack.c.h.b16 %v331
    %v393 = vunpack.c.l.b16 %v332
    %v394 = vunpack.c.h.b16 %v332
    %v395 = vunpack.c.l.b16 %v333
    %v396 = vunpack.c.h.b16 %v333
    %v397 = vunpack.c.l.b16 %v334
    %v398 = vunpack.c.h.b16 %v334
    %v399 = vunpack.c.l.b16 %v335
    %v400 = vunpack.c.h.b16 %v335
    %v401 = vunpack.c.l.b16 %v336
    %v402 = vunpack.c.h.b16 %v336
    %v403 = vpack.c.b16 %v391, %v387
    %v404 = vpack.c.b16 %v392, %v388
    %v405 = vpack.c.b16 %v393, %v389
    %v406 = vpack.c.b16 %v394, %v390
    %v407 = vpack.c.b16 %v399, %v395
    %v408 = vpack.c.b16 %v400, %v396
    %v409 = vpack.c.b16 %v401, %v397
    %v410 = vpack.c.b16 %v402, %v398
    %v420 = vsel %vm161, %v375, 0
    %v423 = vsel %vm161, %v376, 0
    %v426 = vsel %vm161, %v377, 0
    %v429 = vsel %vm161, %v378, 0
    %431 = vmatprep.subr.bf16.mxu0 %v404
    %432 = vmatpush1.bf16.msra.mxu0 %v403
    %433 = vmatprep.subr.bf16.mxu0 %v408
    %434 = vmatpush1.bf16.msra.mxu0 %v407
    %435 = vmatprep.subr.bf16.mxu0 0
    %436 = vmatpush1.bf16.msra.mxu0 0
    %437 = vmatprep.subr.bf16.mxu0 0
    %438 = vmatpush1.bf16.msra.mxu0 0
    %439 = vmatprep.subr.bf16.mxu0 0
    %440 = vmatpush1.bf16.msra.mxu0 0
    %441 = vmatprep.subr.bf16.mxu0 0
    %442 = vmatpush1.bf16.msra.mxu0 0
    %443 = vmatprep.subr.bf16.mxu0 0
    %444 = vmatpush1.bf16.msra.mxu0 0
    %445 = vmatprep.subr.bf16.mxu0 0
    %446 = vmatpush1.bf16.msra.mxu0 0
    %447 = vmatprep.subr.bf16.mxu0 0
    %448 = vmatpush1.bf16.msra.mxu0 0
    %449 = vmatprep.subr.bf16.mxu0 0
    %450 = vmatpush1.bf16.msra.mxu0 0
    %451 = vmatprep.subr.bf16.mxu0 0
    %452 = vmatpush1.bf16.msra.mxu0 0
    %453 = vmatprep.subr.bf16.mxu0 0
    %454 = vmatpush1.bf16.msra.mxu0 0
    %455 = vmatprep.subr.bf16.mxu0 0
    %456 = vmatpush1.bf16.msra.mxu0 0
    %457 = vmatprep.subr.bf16.mxu0 0
    %458 = vmatpush1.bf16.msra.mxu0 0
    %459 = vmatprep.subr.bf16.mxu0 0
    %460 = vmatpush1.bf16.msra.mxu0 0
    %461 = vmatprep.subr.bf16.mxu0 0
    %462 = vmatpush1.bf16.msra.mxu0 0
    %463 = vmatprep.mubr.bf16.mxu0 0
    %464 = vmatmul.mubr.bf16.gmra.mrb[0].mxu0 %v420
    %v465 = vpop.f32.mrb[0].mxu0
    %v466 = vadd.f32 %v342, %v465
    %v467 = vpop.f32.mrb[0].mxu0
    %v468 = vadd.f32 %v346, %v467
    %v469 = vpop.f32.mrb[0].mxu0
    %v470 = vadd.f32 %v342, %v469
    %v471 = vpop.f32.mrb[0].mxu0
    %v472 = vadd.f32 %v346, %v471
    %473 = vmatprep.mubr.bf16.mxu0 0
    %474 = vmatmul.mubr.bf16.gmra.mrb[0].mxu0 %v423
    %v475 = vpop.f32.mrb[0].mxu0
    %v476 = vadd.f32 %v342, %v475
    %v477 = vpop.f32.mrb[0].mxu0
    %v478 = vadd.f32 %v346, %v477
    %v479 = vpop.f32.mrb[0].mxu0
    %v480 = vadd.f32 %v342, %v479
    %v481 = vpop.f32.mrb[0].mxu0
    %v482 = vadd.f32 %v346, %v481
    %483 = vmatprep.mubr.bf16.mxu0 0
    %484 = vmatmul.mubr.bf16.gmra.mrb[0].mxu0 %v426
    %v485 = vpop.f32.mrb[0].mxu0
    %v486 = vadd.f32 %v342, %v485
    %v487 = vpop.f32.mrb[0].mxu0
    %v488 = vadd.f32 %v346, %v487
    %v489 = vpop.f32.mrb[0].mxu0
    %v490 = vadd.f32 %v342, %v489
    %v491 = vpop.f32.mrb[0].mxu0
    %v492 = vadd.f32 %v346, %v491
    %493 = vmatprep.mubr.bf16.mxu0 0
    %494 = vmatmul.mubr.bf16.gmra.mrb[0].mxu0 %v429
    %v495 = vpop.f32.mrb[0].mxu0
    %v496 = vadd.f32 %v342, %v495
    %v497 = vpop.f32.mrb[0].mxu0
    %v498 = vadd.f32 %v346, %v497
    %v499 = vpop.f32.mrb[0].mxu0
    %v500 = vadd.f32 %v342, %v499
    %v501 = vpop.f32.mrb[0].mxu0
    %v502 = vadd.f32 %v346, %v501
    %503 = vdwg.mxu0
    %504 = vmatprep.subr.bf16.mxu0 %v406
    %505 = vmatpush1.bf16.msra.mxu0 %v405
    %506 = vmatprep.subr.bf16.mxu0 %v410
    %507 = vmatpush1.bf16.msra.mxu0 %v409
    %508 = vmatprep.subr.bf16.mxu0 0
    %509 = vmatpush1.bf16.msra.mxu0 0
    %510 = vmatprep.subr.bf16.mxu0 0
    %511 = vmatpush1.bf16.msra.mxu0 0
    %512 = vmatprep.subr.bf16.mxu0 0
    %513 = vmatpush1.bf16.msra.mxu0 0
    %514 = vmatprep.subr.bf16.mxu0 0
    %515 = vmatpush1.bf16.msra.mxu0 0
    %516 = vmatprep.subr.bf16.mxu0 0
    %517 = vmatpush1.bf16.msra.mxu0 0
    %518 = vmatprep.subr.bf16.mxu0 0
    %519 = vmatpush1.bf16.msra.mxu0 0
    %520 = vmatprep.subr.bf16.mxu0 0
    %521 = vmatpush1.bf16.msra.mxu0 0
    %522 = vmatprep.subr.bf16.mxu0 0
    %523 = vmatpush1.bf16.msra.mxu0 0
    %524 = vmatprep.subr.bf16.mxu0 0
    %525 = vmatpush1.bf16.msra.mxu0 0
    %526 = vmatprep.subr.bf16.mxu0 0
    %527 = vmatpush1.bf16.msra.mxu0 0
    %528 = vmatprep.subr.bf16.mxu0 0
    %529 = vmatpush1.bf16.msra.mxu0 0
    %530 = vmatprep.subr.bf16.mxu0 0
    %531 = vmatpush1.bf16.msra.mxu0 0
    %532 = vmatprep.subr.bf16.mxu0 0
    %533 = vmatpush1.bf16.msra.mxu0 0
    %534 = vmatprep.subr.bf16.mxu0 0
    %535 = vmatpush1.bf16.msra.mxu0 0
    %536 = vmatprep.mubr.bf16.mxu0 0
    %537 = vmatmul.mubr.bf16.gmra.mrb[0].mxu0 %v420
    %v538 = vpop.f32.mrb[0].mxu0
    %v539 = vadd.f32 %v350, %v538
    %v540 = vpop.f32.mrb[0].mxu0
    %v541 = vadd.f32 %v354, %v540
    %v542 = vpop.f32.mrb[0].mxu0
    %v543 = vadd.f32 %v350, %v542
    %v544 = vpop.f32.mrb[0].mxu0
    %v545 = vadd.f32 %v354, %v544
    %546 = vmatprep.mubr.bf16.mxu0 0
    %547 = vmatmul.mubr.bf16.gmra.mrb[0].mxu0 %v423
    %v548 = vpop.f32.mrb[0].mxu0
    %v549 = vadd.f32 %v350, %v548
    %v550 = vpop.f32.mrb[0].mxu0
    %v551 = vadd.f32 %v354, %v550
    %v552 = vpop.f32.mrb[0].mxu0
    %v553 = vadd.f32 %v350, %v552
    %v554 = vpop.f32.mrb[0].mxu0
    %v555 = vadd.f32 %v354, %v554
    %556 = vmatprep.mubr.bf16.mxu0 0
    %557 = vmatmul.mubr.bf16.gmra.mrb[0].mxu0 %v426
    %v558 = vpop.f32.mrb[0].mxu0
    %v559 = vadd.f32 %v350, %v558
    %v560 = vpop.f32.mrb[0].mxu0
    %v561 = vadd.f32 %v354, %v560
    %v562 = vpop.f32.mrb[0].mxu0
    %v563 = vadd.f32 %v350, %v562
    %v564 = vpop.f32.mrb[0].mxu0
    %v565 = vadd.f32 %v354, %v564
    %566 = vmatprep.mubr.bf16.mxu0 0
    %567 = vmatmul.mubr.bf16.gmra.mrb[0].mxu0 %v429
    %v568 = vpop.f32.mrb[0].mxu0
    %v569 = vadd.f32 %v350, %v568
    %v570 = vpop.f32.mrb[0].mxu0
    %v571 = vadd.f32 %v354, %v570
    %v572 = vpop.f32.mrb[0].mxu0
    %v573 = vadd.f32 %v350, %v572
    %v574 = vpop.f32.mrb[0].mxu0
    %v575 = vadd.f32 %v354, %v574
    %576 = vdwg.mxu0
    %577 = vst [vmem:[#allocation3] sm:$0xff] %v466
    %578 = vst [vmem:[#allocation3 + $0x8] sm:$0xff] %v468
    %579 = vst [vmem:[#allocation3 + $0x10] sm:$0xff] %v539
    %580 = vst [vmem:[#allocation3 + $0x18] sm:$0xff] %v541
    %581 = vst [vmem:[#allocation3 + $0x20] sm:$0xff] %v470
    %582 = vst [vmem:[#allocation3 + $0x28] sm:$0xff] %v472
    %583 = vst [vmem:[#allocation3 + $0x30] sm:$0xff] %v543
    %584 = vst [vmem:[#allocation3 + $0x38] sm:$0xff] %v545
    %585 = vst [vmem:[#allocation3 + $0x40] sm:$0xff] %v476
    %586 = vst [vmem:[#allocation3 + $0x48] sm:$0xff] %v478
    %587 = vst [vmem:[#allocation3 + $0x50] sm:$0xff] %v549
    %588 = vst [vmem:[#allocation3 + $0x58] sm:$0xff] %v551
    %589 = vst [vmem:[#allocation3 + $0x60] sm:$0xff] %v480
    %590 = vst [vmem:[#allocation3 + $0x68] sm:$0xff] %v482
    %591 = vst [vmem:[#allocation3 + $0x70] sm:$0xff] %v553
    %592 = vst [vmem:[#allocation3 + $0x78] sm:$0xff] %v555
    %593 = vst [vmem:[#allocation3 + $0x80] sm:$0xff] %v486
    %594 = vst [vmem:[#allocation3 + $0x88] sm:$0xff] %v488
    %595 = vst [vmem:[#allocation3 + $0x90] sm:$0xff] %v559
    %596 = vst [vmem:[#allocation3 + $0x98] sm:$0xff] %v561
    %597 = vst [vmem:[#allocation3 + $0xa0] sm:$0xff] %v490
    %598 = vst [vmem:[#allocation3 + $0xa8] sm:$0xff] %v492
    %599 = vst [vmem:[#allocation3 + $0xb0] sm:$0xff] %v563
    %600 = vst [vmem:[#allocation3 + $0xb8] sm:$0xff] %v565
    %601 = vst [vmem:[#allocation3 + $0xc0] sm:$0xff] %v496
    %602 = vst [vmem:[#allocation3 + $0xc8] sm:$0xff] %v498
    %603 = vst [vmem:[#allocation3 + $0xd0] sm:$0xff] %v569
    %604 = vst [vmem:[#allocation3 + $0xd8] sm:$0xff] %v571
    %605 = vst [vmem:[#allocation3 + $0xe0] sm:$0xff] %v500
    %606 = vst [vmem:[#allocation3 + $0xe8] sm:$0xff] %v502
    %607 = vst [vmem:[#allocation3 + $0xf0] sm:$0xff] %v573
    %608 = vst [vmem:[#allocation3 + $0xf8] sm:$0xff] %v575
    %s609 = smul.u32 0, 4
    %s610 = smul.addr %s609, 8
    %s611 = scalar_lea.vmem [#allocation2], %s610
    %v612 = vld [vmem:[%s611] sm:$0xff]
    %v613 = vld [vmem:[%s611 + $0x8] sm:$0xff]
    %v614 = vld [vmem:[%s611 + $0x10] sm:$0xff]
    %v615 = vld [vmem:[%s611 + $0x18] sm:$0xff]
    %v616 = vld [vmem:[#allocation4] sm:$0xff]
    %v617 = vld [vmem:[#allocation4 + $0x8] sm:$0xff]
    %v618 = vld [vmem:[#allocation4 + $0x10] sm:$0xff]
    %v619 = vld [vmem:[#allocation4 + $0x18] sm:$0xff]
    %v620 = vld [vmem:[#allocation4 + $0x20] sm:$0xff]
    %v621 = vld [vmem:[#allocation4 + $0x28] sm:$0xff]
    %v622 = vld [vmem:[#allocation4 + $0x30] sm:$0xff]
    %v623 = vld [vmem:[#allocation4 + $0x38] sm:$0xff]
    %v624 = vld [vmem:[#allocation4 + $0x40] sm:$0xff]
    %v625 = vld [vmem:[#allocation4 + $0x48] sm:$0xff]
    %v626 = vld [vmem:[#allocation4 + $0x50] sm:$0xff]
    %v627 = vld [vmem:[#allocation4 + $0x58] sm:$0xff]
    %v628 = vld [vmem:[#allocation4 + $0x60] sm:$0xff]
    %v629 = vld [vmem:[#allocation4 + $0x68] sm:$0xff]
    %v630 = vld [vmem:[#allocation4 + $0x70] sm:$0xff]
    %v631 = vld [vmem:[#allocation4 + $0x78] sm:$0xff]
    %v632 = vld [vmem:[#allocation4 + $0x80] sm:$0xff]
    %v633 = vld [vmem:[#allocation4 + $0x88] sm:$0xff]
    %v634 = vld [vmem:[#allocation4 + $0x90] sm:$0xff]
    %v635 = vld [vmem:[#allocation4 + $0x98] sm:$0xff]
    %v636 = vld [vmem:[#allocation4 + $0xa0] sm:$0xff]
    %v637 = vld [vmem:[#allocation4 + $0xa8] sm:$0xff]
    %v638 = vld [vmem:[#allocation4 + $0xb0] sm:$0xff]
    %v639 = vld [vmem:[#allocation4 + $0xb8] sm:$0xff]
    %v640 = vld [vmem:[#allocation4 + $0xc0] sm:$0xff]
    %v641 = vld [vmem:[#allocation4 + $0xc8] sm:$0xff]
    %v642 = vld [vmem:[#allocation4 + $0xd0] sm:$0xff]
    %v643 = vld [vmem:[#allocation4 + $0xd8] sm:$0xff]
    %v644 = vld [vmem:[#allocation4 + $0xe0] sm:$0xff]
    %v645 = vld [vmem:[#allocation4 + $0xe8] sm:$0xff]
    %v646 = vld [vmem:[#allocation4 + $0xf0] sm:$0xff]
    %v647 = vld [vmem:[#allocation4 + $0xf8] sm:$0xff]
    %v680 = vunpack.c.l.b16 %v616
    %v681 = vunpack.c.h.b16 %v616
    %v682 = vunpack.c.l.b16 %v617
    %v683 = vunpack.c.h.b16 %v617
    %v684 = vunpack.c.l.b16 %v618
    %v685 = vunpack.c.h.b16 %v618
    %v686 = vunpack.c.l.b16 %v619
    %v687 = vunpack.c.h.b16 %v619
    %v688 = vunpack.c.l.b16 %v620
    %v689 = vunpack.c.h.b16 %v620
    %v690 = vunpack.c.l.b16 %v621
    %v691 = vunpack.c.h.b16 %v621
    %v692 = vunpack.c.l.b16 %v622
    %v693 = vunpack.c.h.b16 %v622
    %v694 = vunpack.c.l.b16 %v623
    %v695 = vunpack.c.h.b16 %v623
    %v696 = vunpack.c.l.b16 %v624
    %v697 = vunpack.c.h.b16 %v624
    %v698 = vunpack.c.l.b16 %v625
    %v699 = vunpack.c.h.b16 %v625
    %v700 = vunpack.c.l.b16 %v626
    %v701 = vunpack.c.h.b16 %v626
    %v702 = vunpack.c.l.b16 %v627
    %v703 = vunpack.c.h.b16 %v627
    %v704 = vunpack.c.l.b16 %v628
    %v705 = vunpack.c.h.b16 %v628
    %v706 = vunpack.c.l.b16 %v629
    %v707 = vunpack.c.h.b16 %v629
    %v708 = vunpack.c.l.b16 %v630
    %v709 = vunpack.c.h.b16 %v630
    %v710 = vunpack.c.l.b16 %v631
    %v711 = vunpack.c.h.b16 %v631
    %v712 = vunpack.c.l.b16 %v632
    %v713 = vunpack.c.h.b16 %v632
    %v714 = vunpack.c.l.b16 %v633
    %v715 = vunpack.c.h.b16 %v633
    %v716 = vunpack.c.l.b16 %v634
    %v717 = vunpack.c.h.b16 %v634
    %v718 = vunpack.c.l.b16 %v635
    %v719 = vunpack.c.h.b16 %v635
    %v720 = vunpack.c.l.b16 %v636
    %v721 = vunpack.c.h.b16 %v636
    %v722 = vunpack.c.l.b16 %v637
    %v723 = vunpack.c.h.b16 %v637
    %v724 = vunpack.c.l.b16 %v638
    %v725 = vunpack.c.h.b16 %v638
    %v726 = vunpack.c.l.b16 %v639
    %v727 = vunpack.c.h.b16 %v639
    %v728 = vunpack.c.l.b16 %v640
    %v729 = vunpack.c.h.b16 %v640
    %v730 = vunpack.c.l.b16 %v641
    %v731 = vunpack.c.h.b16 %v641
    %v732 = vunpack.c.l.b16 %v642
    %v733 = vunpack.c.h.b16 %v642
    %v734 = vunpack.c.l.b16 %v643
    %v735 = vunpack.c.h.b16 %v643
    %v736 = vunpack.c.l.b16 %v644
    %v737 = vunpack.c.h.b16 %v644
    %v738 = vunpack.c.l.b16 %v645
    %v739 = vunpack.c.h.b16 %v645
    %v740 = vunpack.c.l.b16 %v646
    %v741 = vunpack.c.h.b16 %v646
    %v742 = vunpack.c.l.b16 %v647
    %v743 = vunpack.c.h.b16 %v647
    %v744 = vpack.c.b16 %v684, %v680
    %v745 = vpack.c.b16 %v685, %v681
    %v746 = vpack.c.b16 %v686, %v682
    %v747 = vpack.c.b16 %v687, %v683
    %v748 = vpack.c.b16 %v692, %v688
    %v749 = vpack.c.b16 %v693, %v689
    %v750 = vpack.c.b16 %v694, %v690
    %v751 = vpack.c.b16 %v695, %v691
    %v752 = vpack.c.b16 %v700, %v696
    %v753 = vpack.c.b16 %v701, %v697
    %v754 = vpack.c.b16 %v702, %v698
    %v755 = vpack.c.b16 %v703, %v699
    %v756 = vpack.c.b16 %v708, %v704
    %v757 = vpack.c.b16 %v709, %v705
    %v758 = vpack.c.b16 %v710, %v706
    %v759 = vpack.c.b16 %v711, %v707
    %v760 = vpack.c.b16 %v716, %v712
    %v761 = vpack.c.b16 %v717, %v713
    %v762 = vpack.c.b16 %v718, %v714
    %v763 = vpack.c.b16 %v719, %v715
    %v764 = vpack.c.b16 %v724, %v720
    %v765 = vpack.c.b16 %v725, %v721
    %v766 = vpack.c.b16 %v726, %v722
    %v767 = vpack.c.b16 %v727, %v723
    %v768 = vpack.c.b16 %v732, %v728
    %v769 = vpack.c.b16 %v733, %v729
    %v770 = vpack.c.b16 %v734, %v730
    %v771 = vpack.c.b16 %v735, %v731
    %v772 = vpack.c.b16 %v740, %v736
    %v773 = vpack.c.b16 %v741, %v737
    %v774 = vpack.c.b16 %v742, %v738
    %v775 = vpack.c.b16 %v743, %v739
    %808 = vmatprep.subr.bf16.mxu0 %v745
    %809 = vmatpush1.bf16.msra.mxu0 %v744
    %810 = vmatprep.subr.bf16.mxu0 %v749
    %811 = vmatpush1.bf16.msra.mxu0 %v748
    %812 = vmatprep.subr.bf16.mxu0 %v753
    %813 = vmatpush1.bf16.msra.mxu0 %v752
    %814 = vmatprep.subr.bf16.mxu0 %v757
    %815 = vmatpush1.bf16.msra.mxu0 %v756
    %816 = vmatprep.subr.bf16.mxu0 %v761
    %817 = vmatpush1.bf16.msra.mxu0 %v760
    %818 = vmatprep.subr.bf16.mxu0 %v765
    %819 = vmatpush1.bf16.msra.mxu0 %v764
    %820 = vmatprep.subr.bf16.mxu0 %v769
    %821 = vmatpush1.bf16.msra.mxu0 %v768
    %822 = vmatprep.subr.bf16.mxu0 %v773
    %823 = vmatpush1.bf16.msra.mxu0 %v772
    %824 = vmatprep.subr.bf16.mxu0 0
    %825 = vmatpush1.bf16.msra.mxu0 0
    %826 = vmatprep.subr.bf16.mxu0 0
    %827 = vmatpush1.bf16.msra.mxu0 0
    %828 = vmatprep.subr.bf16.mxu0 0
    %829 = vmatpush1.bf16.msra.mxu0 0
    %830 = vmatprep.subr.bf16.mxu0 0
    %831 = vmatpush1.bf16.msra.mxu0 0
    %832 = vmatprep.subr.bf16.mxu0 0
    %833 = vmatpush1.bf16.msra.mxu0 0
    %834 = vmatprep.subr.bf16.mxu0 0
    %835 = vmatpush1.bf16.msra.mxu0 0
    %836 = vmatprep.subr.bf16.mxu0 0
    %837 = vmatpush1.bf16.msra.mxu0 0
    %838 = vmatprep.subr.bf16.mxu0 0
    %839 = vmatpush1.bf16.msra.mxu0 0
    %840 = vmatprep.mubr.bf16.mxu0 0
    %841 = vmatmul.mubr.bf16.gmra.mrb[0].mxu0 0
    %v842 = vpop.f32.mrb[0].mxu0
    %v843 = vadd.f32 0.0, %v842
    %v844 = vpop.f32.mrb[0].mxu0
    %v845 = vadd.f32 0.0, %v844
    %v846 = vpop.f32.mrb[0].mxu0
    %v847 = vpop.f32.mrb[0].mxu0
    %848 = vdwg.mxu0
    %849 = vmatprep.subr.bf16.mxu0 %v747
    %850 = vmatpush1.bf16.msra.mxu0 %v746
    %851 = vmatprep.subr.bf16.mxu0 %v751
    %852 = vmatpush1.bf16.msra.mxu0 %v750
    %853 = vmatprep.subr.bf16.mxu0 %v755
    %854 = vmatpush1.bf16.msra.mxu0 %v754
    %855 = vmatprep.subr.bf16.mxu0 %v759
    %856 = vmatpush1.bf16.msra.mxu0 %v758
    %857 = vmatprep.subr.bf16.mxu0 %v763
    %858 = vmatpush1.bf16.msra.mxu0 %v762
    %859 = vmatprep.subr.bf16.mxu0 %v767
    %860 = vmatpush1.bf16.msra.mxu0 %v766
    %861 = vmatprep.subr.bf16.mxu0 %v771
    %862 = vmatpush1.bf16.msra.mxu0 %v770
    %863 = vmatprep.subr.bf16.mxu0 %v775
    %864 = vmatpush1.bf16.msra.mxu0 %v774
    %865 = vmatprep.subr.bf16.mxu0 0
    %866 = vmatpush1.bf16.msra.mxu0 0
    %867 = vmatprep.subr.bf16.mxu0 0
    %868 = vmatpush1.bf16.msra.mxu0 0
    %869 = vmatprep.subr.bf16.mxu0 0
    %870 = vmatpush1.bf16.msra.mxu0 0
    %871 = vmatprep.subr.bf16.mxu0 0
    %872 = vmatpush1.bf16.msra.mxu0 0
    %873 = vmatprep.subr.bf16.mxu0 0
    %874 = vmatpush1.bf16.msra.mxu0 0
    %875 = vmatprep.subr.bf16.mxu0 0
    %876 = vmatpush1.bf16.msra.mxu0 0
    %877 = vmatprep.subr.bf16.mxu0 0
    %878 = vmatpush1.bf16.msra.mxu0 0
    %879 = vmatprep.subr.bf16.mxu0 0
    %880 = vmatpush1.bf16.msra.mxu0 0
    %881 = vmatprep.mubr.bf16.mxu0 0
    %882 = vmatmul.mubr.bf16.gmra.mrb[0].mxu0 0
    %v883 = vpop.f32.mrb[0].mxu0
    %v884 = vadd.f32 0.0, %v883
    %v885 = vpop.f32.mrb[0].mxu0
    %v886 = vadd.f32 0.0, %v885
    %v887 = vpop.f32.mrb[0].mxu0
    %v888 = vpop.f32.mrb[0].mxu0
    %889 = vdwg.mxu0
    %v890 = vadd.f32 %v612, %v843
    %v891 = vadd.f32 %v613, %v845
    %v892 = vadd.f32 %v614, %v884
    %v893 = vadd.f32 %v615, %v886
    %v894 = vmul.f32 %v890, 0.5
    %v895 = vtanh.pop %v894
    %v896 = vmul.f32 %v895, 0.5
    %v897 = vadd.f32 %v896, 0.5
    %v898 = vmul.f32 %v891, 0.5
    %v899 = vtanh.pop %v898
    %v900 = vmul.f32 %v899, 0.5
    %v901 = vadd.f32 %v900, 0.5
    %v902 = vtanh.pop %v892
    %v903 = vmul.f32 %v893, 0.5
    %v904 = vtanh.pop %v903
    %v905 = vmul.f32 %v904, 0.5
    %v906 = vadd.f32 %v905, 0.5
    %v907 = vmul.f32 %v901, 0.0
    %v908 = vmul.f32 %v897, %v902
    %v909 = vadd.f32 %v907, %v908
    %v910 = vtanh.pop %v909
    %v911 = vmul.f32 %v906, %v910
    %v912 = vld [vmem:[%s3] sm:$0xf]
    %v913 = vunpack.c.l.bf16 %v912
    %v914 = vmul.f32 %v913, %v911
    %v915 = vadd.f32 %v914, 0.0
    %v916 = vmul.f32 %v913, %v909
    %v917 = vadd.f32 %v916, 0.0
    %s918 = smul.u32 1, 4
    %s919 = smul.addr %s918, 8
    %s920 = scalar_lea.vmem [#allocation2], %s919
    %v921 = vld [vmem:[%s920] sm:$0xff]
    %v922 = vld [vmem:[%s920 + $0x8] sm:$0xff]
    %v923 = vld [vmem:[%s920 + $0x10] sm:$0xff]
    %v924 = vld [vmem:[%s920 + $0x18] sm:$0xff]
    %v925 = vpack.c.bf16 %v915, %v915
    %926 = vmatprep.subr.bf16.mxu0 %v745
    %927 = vmatpush1.bf16.msra.mxu0 %v744
    %928 = vmatprep.subr.bf16.mxu0 %v749
    %929 = vmatpush1.bf16.msra.mxu0 %v748
    %930 = vmatprep.subr.bf16.mxu0 %v753
    %931 = vmatpush1.bf16.msra.mxu0 %v752
    %932 = vmatprep.subr.bf16.mxu0 %v757
    %933 = vmatpush1.bf16.msra.mxu0 %v756
    %934 = vmatprep.subr.bf16.mxu0 %v761
    %935 = vmatpush1.bf16.msra.mxu0 %v760
    %936 = vmatprep.subr.bf16.mxu0 %v765
    %937 = vmatpush1.bf16.msra.mxu0 %v764
    %938 = vmatprep.subr.bf16.mxu0 %v769
    %939 = vmatpush1.bf16.msra.mxu0 %v768
    %940 = vmatprep.subr.bf16.mxu0 %v773
    %941 = vmatpush1.bf16.msra.mxu0 %v772
    %942 = vmatprep.subr.bf16.mxu0 0
    %943 = vmatpush1.bf16.msra.mxu0 0
    %944 = vmatprep.subr.bf16.mxu0 0
    %945 = vmatpush1.bf16.msra.mxu0 0
    %946 = vmatprep.subr.bf16.mxu0 0
    %947 = vmatpush1.bf16.msra.mxu0 0
    %948 = vmatprep.subr.bf16.mxu0 0
    %949 = vmatpush1.bf16.msra.mxu0 0
    %950 = vmatprep.subr.bf16.mxu0 0
    %951 = vmatpush1.bf16.msra.mxu0 0
    %952 = vmatprep.subr.bf16.mxu0 0
    %953 = vmatpush1.bf16.msra.mxu0 0
    %954 = vmatprep.subr.bf16.mxu0 0
    %955 = vmatpush1.bf16.msra.mxu0 0
    %956 = vmatprep.subr.bf16.mxu0 0
    %957 = vmatpush1.bf16.msra.mxu0 0
    %958 = vmatprep.mubr.bf16.mxu0 0
    %959 = vmatmul.mubr.bf16.gmra.mrb[0].mxu0 %v925
    %v960 = vpop.f32.mrb[0].mxu0
    %v961 = vadd.f32 0.0, %v960
    %v962 = vpop.f32.mrb[0].mxu0
    %v963 = vadd.f32 0.0, %v962
    %v964 = vpop.f32.mrb[0].mxu0
    %v965 = vpop.f32.mrb[0].mxu0
    %966 = vdwg.mxu0
    %967 = vmatprep.subr.bf16.mxu0 %v747
    %968 = vmatpush1.bf16.msra.mxu0 %v746
    %969 = vmatprep.subr.bf16.mxu0 %v751
    %970 = vmatpush1.bf16.msra.mxu0 %v750
    %971 = vmatprep.subr.bf16.mxu0 %v755
    %972 = vmatpush1.bf16.msra.mxu0 %v754
    %973 = vmatprep.subr.bf16.mxu0 %v759
    %974 = vmatpush1.bf16.msra.mxu0 %v758
    %975 = vmatprep.subr.bf16.mxu0 %v763
    %976 = vmatpush1.bf16.msra.mxu0 %v762
    %977 = vmatprep.subr.bf16.mxu0 %v767
    %978 = vmatpush1.bf16.msra.mxu0 %v766
    %979 = vmatprep.subr.bf16.mxu0 %v771
    %980 = vmatpush1.bf16.msra.mxu0 %v770
    %981 = vmatprep.subr.bf16.mxu0 %v775
    %982 = vmatpush1.bf16.msra.mxu0 %v774
    %983 = vmatprep.subr.bf16.mxu0 0
    %984 = vmatpush1.bf16.msra.mxu0 0
    %985 = vmatprep.subr.bf16.mxu0 0
    %986 = vmatpush1.bf16.msra.mxu0 0
    %987 = vmatprep.subr.bf16.mxu0 0
    %988 = vmatpush1.bf16.msra.mxu0 0
    %989 = vmatprep.subr.bf16.mxu0 0
    %990 = vmatpush1.bf16.msra.mxu0 0
    %991 = vmatprep.subr.bf16.mxu0 0
    %992 = vmatpush1.bf16.msra.mxu0 0
    %993 = vmatprep.subr.bf16.mxu0 0
    %994 = vmatpush1.bf16.msra.mxu0 0
    %995 = vmatprep.subr.bf16.mxu0 0
    %996 = vmatpush1.bf16.msra.mxu0 0
    %997 = vmatprep.subr.bf16.mxu0 0
    %998 = vmatpush1.bf16.msra.mxu0 0
    %999 = vmatprep.mubr.bf16.mxu0 0
    %1000 = vmatmul.mubr.bf16.gmra.mrb[0].mxu0 %v925
    %v1001 = vpop.f32.mrb[0].mxu0
    %v1002 = vadd.f32 0.0, %v1001
    %v1003 = vpop.f32.mrb[0].mxu0
    %v1004 = vadd.f32 0.0, %v1003
    %v1005 = vpop.f32.mrb[0].mxu0
    %v1006 = vpop.f32.mrb[0].mxu0
    %1007 = vdwg.mxu0
    %v1008 = vadd.f32 %v921, %v961
    %v1009 = vadd.f32 %v922, %v963
    %v1010 = vadd.f32 %v923, %v1002
    %v1011 = vadd.f32 %v924, %v1004
    %v1012 = vmul.f32 %v1008, 0.5
    %v1013 = vtanh.pop %v1012
    %v1014 = vmul.f32 %v1013, 0.5
    %v1015 = vadd.f32 %v1014, 0.5
    %v1016 = vmul.f32 %v1009, 0.5
    %v1017 = vtanh.pop %v1016
    %v1018 = vmul.f32 %v1017, 0.5
    %v1019 = vadd.f32 %v1018, 0.5
    %v1020 = vtanh.pop %v1010
    %v1021 = vmul.f32 %v1011, 0.5
    %v1022 = vtanh.pop %v1021
    %v1023 = vmul.f32 %v1022, 0.5
    %v1024 = vadd.f32 %v1023, 0.5
    %v1025 = vmul.f32 %v1019, %v917
    %v1026 = vmul.f32 %v1015, %v1020
    %v1027 = vadd.f32 %v1025, %v1026
    %v1028 = vtanh.pop %v1027
    %v1029 = vmul.f32 %v1024, %v1028
    %s1030 = scalar_lea.vmem %s3, 4
    %v1031 = vld [vmem:[%s1030] sm:$0xf]
    %v1032 = vunpack.c.l.bf16 %v1031
    %v1033 = vsub.f32 %v1029, %v915
    %v1034 = vmul.f32 %v1032, %v1033
    %v1035 = vadd.f32 %v915, %v1034
    %v1036 = vsub.f32 %v1027, %v917
    %v1037 = vmul.f32 %v1032, %v1036
    %v1038 = vadd.f32 %v917, %v1037
    %s1039 = smul.u32 2, 4
    %s1040 = smul.addr %s1039, 8
    %s1041 = scalar_lea.vmem [#allocation2], %s1040
    %v1042 = vld [vmem:[%s1041] sm:$0xff]
    %v1043 = vld [vmem:[%s1041 + $0x8] sm:$0xff]
    %v1044 = vld [vmem:[%s1041 + $0x10] sm:$0xff]
    %v1045 = vld [vmem:[%s1041 + $0x18] sm:$0xff]
    %v1046 = vpack.c.bf16 %v1035, %v1035
    %1047 = vmatprep.subr.bf16.mxu0 %v745
    %1048 = vmatpush1.bf16.msra.mxu0 %v744
    %1049 = vmatprep.subr.bf16.mxu0 %v749
    %1050 = vmatpush1.bf16.msra.mxu0 %v748
    %1051 = vmatprep.subr.bf16.mxu0 %v753
    %1052 = vmatpush1.bf16.msra.mxu0 %v752
    %1053 = vmatprep.subr.bf16.mxu0 %v757
    %1054 = vmatpush1.bf16.msra.mxu0 %v756
    %1055 = vmatprep.subr.bf16.mxu0 %v761
    %1056 = vmatpush1.bf16.msra.mxu0 %v760
    %1057 = vmatprep.subr.bf16.mxu0 %v765
    %1058 = vmatpush1.bf16.msra.mxu0 %v764
    %1059 = vmatprep.subr.bf16.mxu0 %v769
    %1060 = vmatpush1.bf16.msra.mxu0 %v768
    %1061 = vmatprep.subr.bf16.mxu0 %v773
    %1062 = vmatpush1.bf16.msra.mxu0 %v772
    %1063 = vmatprep.subr.bf16.mxu0 0
    %1064 = vmatpush1.bf16.msra.mxu0 0
    %1065 = vmatprep.subr.bf16.mxu0 0
    %1066 = vmatpush1.bf16.msra.mxu0 0
    %1067 = vmatprep.subr.bf16.mxu0 0
    %1068 = vmatpush1.bf16.msra.mxu0 0
    %1069 = vmatprep.subr.bf16.mxu0 0
    %1070 = vmatpush1.bf16.msra.mxu0 0
    %1071 = vmatprep.subr.bf16.mxu0 0
    %1072 = vmatpush1.bf16.msra.mxu0 0
    %1073 = vmatprep.subr.bf16.mxu0 0
    %1074 = vmatpush1.bf16.msra.mxu0 0
    %1075 = vmatprep.subr.bf16.mxu0 0
    %1076 = vmatpush1.bf16.msra.mxu0 0
    %1077 = vmatprep.subr.bf16.mxu0 0
    %1078 = vmatpush1.bf16.msra.mxu0 0
    %1079 = vmatprep.mubr.bf16.mxu0 0
    %1080 = vmatmul.mubr.bf16.gmra.mrb[0].mxu0 %v1046
    %v1081 = vpop.f32.mrb[0].mxu0
    %v1082 = vadd.f32 0.0, %v1081
    %v1083 = vpop.f32.mrb[0].mxu0
    %v1084 = vadd.f32 0.0, %v1083
    %v1085 = vpop.f32.mrb[0].mxu0
    %v1086 = vpop.f32.mrb[0].mxu0
    %1087 = vdwg.mxu0
    %1088 = vmatprep.subr.bf16.mxu0 %v747
    %1089 = vmatpush1.bf16.msra.mxu0 %v746
    %1090 = vmatprep.subr.bf16.mxu0 %v751
    %1091 = vmatpush1.bf16.msra.mxu0 %v750
    %1092 = vmatprep.subr.bf16.mxu0 %v755
    %1093 = vmatpush1.bf16.msra.mxu0 %v754
    %1094 = vmatprep.subr.bf16.mxu0 %v759
    %1095 = vmatpush1.bf16.msra.mxu0 %v758
    %1096 = vmatprep.subr.bf16.mxu0 %v763
    %1097 = vmatpush1.bf16.msra.mxu0 %v762
    %1098 = vmatprep.subr.bf16.mxu0 %v767
    %1099 = vmatpush1.bf16.msra.mxu0 %v766
    %1100 = vmatprep.subr.bf16.mxu0 %v771
    %1101 = vmatpush1.bf16.msra.mxu0 %v770
    %1102 = vmatprep.subr.bf16.mxu0 %v775
    %1103 = vmatpush1.bf16.msra.mxu0 %v774
    %1104 = vmatprep.subr.bf16.mxu0 0
    %1105 = vmatpush1.bf16.msra.mxu0 0
    %1106 = vmatprep.subr.bf16.mxu0 0
    %1107 = vmatpush1.bf16.msra.mxu0 0
    %1108 = vmatprep.subr.bf16.mxu0 0
    %1109 = vmatpush1.bf16.msra.mxu0 0
    %1110 = vmatprep.subr.bf16.mxu0 0
    %1111 = vmatpush1.bf16.msra.mxu0 0
    %1112 = vmatprep.subr.bf16.mxu0 0
    %1113 = vmatpush1.bf16.msra.mxu0 0
    %1114 = vmatprep.subr.bf16.mxu0 0
    %1115 = vmatpush1.bf16.msra.mxu0 0
    %1116 = vmatprep.subr.bf16.mxu0 0
    %1117 = vmatpush1.bf16.msra.mxu0 0
    %1118 = vmatprep.subr.bf16.mxu0 0
    %1119 = vmatpush1.bf16.msra.mxu0 0
    %1120 = vmatprep.mubr.bf16.mxu0 0
    %1121 = vmatmul.mubr.bf16.gmra.mrb[0].mxu0 %v1046
    %v1122 = vpop.f32.mrb[0].mxu0
    %v1123 = vadd.f32 0.0, %v1122
    %v1124 = vpop.f32.mrb[0].mxu0
    %v1125 = vadd.f32 0.0, %v1124
    %v1126 = vpop.f32.mrb[0].mxu0
    %v1127 = vpop.f32.mrb[0].mxu0
    %1128 = vdwg.mxu0
    %v1129 = vadd.f32 %v1042, %v1082
    %v1130 = vadd.f32 %v1043, %v1084
    %v1131 = vadd.f32 %v1044, %v1123
    %v1132 = vadd.f32 %v1045, %v1125
    %v1133 = vmul.f32 %v1129, 0.5
    %v1134 = vtanh.pop %v1133
    %v1135 = vmul.f32 %v1134, 0.5
    %v1136 = vadd.f32 %v1135, 0.5
    %v1137 = vmul.f32 %v1130, 0.5
    %v1138 = vtanh.pop %v1137
    %v1139 = vmul.f32 %v1138, 0.5
    %v1140 = vadd.f32 %v1139, 0.5
    %v1141 = vtanh.pop %v1131
    %v1142 = vmul.f32 %v1132, 0.5
    %v1143 = vtanh.pop %v1142
    %v1144 = vmul.f32 %v1143, 0.5
    %v1145 = vadd.f32 %v1144, 0.5
    %v1146 = vmul.f32 %v1140, %v1038
    %v1147 = vmul.f32 %v1136, %v1141
    %v1148 = vadd.f32 %v1146, %v1147
    %v1149 = vtanh.pop %v1148
    %v1150 = vmul.f32 %v1145, %v1149
    %s1151 = scalar_lea.vmem %s3, 8
    %v1152 = vld [vmem:[%s1151] sm:$0xf]
    %v1153 = vunpack.c.l.bf16 %v1152
    %v1154 = vsub.f32 %v1150, %v1035
    %v1155 = vmul.f32 %v1153, %v1154
    %v1156 = vadd.f32 %v1035, %v1155
    %v1157 = vsub.f32 %v1148, %v1038
    %v1158 = vmul.f32 %v1153, %v1157
    %v1159 = vadd.f32 %v1038, %v1158
    %s1160 = smul.u32 3, 4
    %s1161 = smul.addr %s1160, 8
    %s1162 = scalar_lea.vmem [#allocation2], %s1161
    %v1163 = vld [vmem:[%s1162] sm:$0xff]
    %v1164 = vld [vmem:[%s1162 + $0x8] sm:$0xff]
    %v1165 = vld [vmem:[%s1162 + $0x10] sm:$0xff]
    %v1166 = vld [vmem:[%s1162 + $0x18] sm:$0xff]
    %v1167 = vpack.c.bf16 %v1156, %v1156
    %1168 = vmatprep.subr.bf16.mxu0 %v745
    %1169 = vmatpush1.bf16.msra.mxu0 %v744
    %1170 = vmatprep.subr.bf16.mxu0 %v749
    %1171 = vmatpush1.bf16.msra.mxu0 %v748
    %1172 = vmatprep.subr.bf16.mxu0 %v753
    %1173 = vmatpush1.bf16.msra.mxu0 %v752
    %1174 = vmatprep.subr.bf16.mxu0 %v757
    %1175 = vmatpush1.bf16.msra.mxu0 %v756
    %1176 = vmatprep.subr.bf16.mxu0 %v761
    %1177 = vmatpush1.bf16.msra.mxu0 %v760
    %1178 = vmatprep.subr.bf16.mxu0 %v765
    %1179 = vmatpush1.bf16.msra.mxu0 %v764
    %1180 = vmatprep.subr.bf16.mxu0 %v769
    %1181 = vmatpush1.bf16.msra.mxu0 %v768
    %1182 = vmatprep.subr.bf16.mxu0 %v773
    %1183 = vmatpush1.bf16.msra.mxu0 %v772
    %1184 = vmatprep.subr.bf16.mxu0 0
    %1185 = vmatpush1.bf16.msra.mxu0 0
    %1186 = vmatprep.subr.bf16.mxu0 0
    %1187 = vmatpush1.bf16.msra.mxu0 0
    %1188 = vmatprep.subr.bf16.mxu0 0
    %1189 = vmatpush1.bf16.msra.mxu0 0
    %1190 = vmatprep.subr.bf16.mxu0 0
    %1191 = vmatpush1.bf16.msra.mxu0 0
    %1192 = vmatprep.subr.bf16.mxu0 0
    %1193 = vmatpush1.bf16.msra.mxu0 0
    %1194 = vmatprep.subr.bf16.mxu0 0
    %1195 = vmatpush1.bf16.msra.mxu0 0
    %1196 = vmatprep.subr.bf16.mxu0 0
    %1197 = vmatpush1.bf16.msra.mxu0 0
    %1198 = vmatprep.subr.bf16.mxu0 0
    %1199 = vmatpush1.bf16.msra.mxu0 0
    %1200 = vmatprep.mubr.bf16.mxu0 0
    %1201 = vmatmul.mubr.bf16.gmra.mrb[0].mxu0 %v1167
    %v1202 = vpop.f32.mrb[0].mxu0
    %v1203 = vadd.f32 0.0, %v1202
    %v1204 = vpop.f32.mrb[0].mxu0
    %v1205 = vadd.f32 0.0, %v1204
    %v1206 = vpop.f32.mrb[0].mxu0
    %v1207 = vpop.f32.mrb[0].mxu0
    %1208 = vdwg.mxu0
    %1209 = vmatprep.subr.bf16.mxu0 %v747
    %1210 = vmatpush1.bf16.msra.mxu0 %v746
    %1211 = vmatprep.subr.bf16.mxu0 %v751
    %1212 = vmatpush1.bf16.msra.mxu0 %v750
    %1213 = vmatprep.subr.bf16.mxu0 %v755
    %1214 = vmatpush1.bf16.msra.mxu0 %v754
    %1215 = vmatprep.subr.bf16.mxu0 %v759
    %1216 = vmatpush1.bf16.msra.mxu0 %v758
    %1217 = vmatprep.subr.bf16.mxu0 %v763
    %1218 = vmatpush1.bf16.msra.mxu0 %v762
    %1219 = vmatprep.subr.bf16.mxu0 %v767
    %1220 = vmatpush1.bf16.msra.mxu0 %v766
    %1221 = vmatprep.subr.bf16.mxu0 %v771
    %1222 = vmatpush1.bf16.msra.mxu0 %v770
    %1223 = vmatprep.subr.bf16.mxu0 %v775
    %1224 = vmatpush1.bf16.msra.mxu0 %v774
    %1225 = vmatprep.subr.bf16.mxu0 0
    %1226 = vmatpush1.bf16.msra.mxu0 0
    %1227 = vmatprep.subr.bf16.mxu0 0
    %1228 = vmatpush1.bf16.msra.mxu0 0
    %1229 = vmatprep.subr.bf16.mxu0 0
    %1230 = vmatpush1.bf16.msra.mxu0 0
    %1231 = vmatprep.subr.bf16.mxu0 0
    %1232 = vmatpush1.bf16.msra.mxu0 0
    %1233 = vmatprep.subr.bf16.mxu0 0
    %1234 = vmatpush1.bf16.msra.mxu0 0
    %1235 = vmatprep.subr.bf16.mxu0 0
    %1236 = vmatpush1.bf16.msra.mxu0 0
    %1237 = vmatprep.subr.bf16.mxu0 0
    %1238 = vmatpush1.bf16.msra.mxu0 0
    %1239 = vmatprep.subr.bf16.mxu0 0
    %1240 = vmatpush1.bf16.msra.mxu0 0
    %1241 = vmatprep.mubr.bf16.mxu0 0
    %1242 = vmatmul.mubr.bf16.gmra.mrb[0].mxu0 %v1167
    %v1243 = vpop.f32.mrb[0].mxu0
    %v1244 = vadd.f32 0.0, %v1243
    %v1245 = vpop.f32.mrb[0].mxu0
    %v1246 = vadd.f32 0.0, %v1245
    %v1247 = vpop.f32.mrb[0].mxu0
    %v1248 = vpop.f32.mrb[0].mxu0
    %1249 = vdwg.mxu0
    %v1250 = vadd.f32 %v1163, %v1203
    %v1251 = vadd.f32 %v1164, %v1205
    %v1252 = vadd.f32 %v1165, %v1244
    %v1253 = vadd.f32 %v1166, %v1246
    %v1254 = vmul.f32 %v1250, 0.5
    %v1255 = vtanh.pop %v1254
    %v1256 = vmul.f32 %v1255, 0.5
    %v1257 = vadd.f32 %v1256, 0.5
    %v1258 = vmul.f32 %v1251, 0.5
    %v1259 = vtanh.pop %v1258
    %v1260 = vmul.f32 %v1259, 0.5
    %v1261 = vadd.f32 %v1260, 0.5
    %v1262 = vtanh.pop %v1252
    %v1263 = vmul.f32 %v1253, 0.5
    %v1264 = vtanh.pop %v1263
    %v1265 = vmul.f32 %v1264, 0.5
    %v1266 = vadd.f32 %v1265, 0.5
    %v1267 = vmul.f32 %v1261, %v1159
    %v1268 = vmul.f32 %v1257, %v1262
    %v1269 = vadd.f32 %v1267, %v1268
    %v1270 = vtanh.pop %v1269
    %v1271 = vmul.f32 %v1266, %v1270
    %s1272 = scalar_lea.vmem %s3, 12
    %v1273 = vld [vmem:[%s1272] sm:$0xf]
    %v1274 = vunpack.c.l.bf16 %v1273
    %v1275 = vsub.f32 %v1271, %v1156
    %v1276 = vmul.f32 %v1274, %v1275
    %v1277 = vadd.f32 %v1156, %v1276
    %v1278 = vsub.f32 %v1269, %v1159
    %v1279 = vmul.f32 %v1274, %v1278
    %v1280 = vadd.f32 %v1159, %v1279
    %s1281 = smul.u32 4, 4
    %s1282 = smul.addr %s1281, 8
    %s1283 = scalar_lea.vmem [#allocation2], %s1282
    %v1284 = vld [vmem:[%s1283] sm:$0xff]
    %v1285 = vld [vmem:[%s1283 + $0x8] sm:$0xff]
    %v1286 = vld [vmem:[%s1283 + $0x10] sm:$0xff]
    %v1287 = vld [vmem:[%s1283 + $0x18] sm:$0xff]
    %v1288 = vpack.c.bf16 %v1277, %v1277
    %1289 = vmatprep.subr.bf16.mxu0 %v745
    %1290 = vmatpush1.bf16.msra.mxu0 %v744
    %1291 = vmatprep.subr.bf16.mxu0 %v749
    %1292 = vmatpush1.bf16.msra.mxu0 %v748
    %1293 = vmatprep.subr.bf16.mxu0 %v753
    %1294 = vmatpush1.bf16.msra.mxu0 %v752
    %1295 = vmatprep.subr.bf16.mxu0 %v757
    %1296 = vmatpush1.bf16.msra.mxu0 %v756
    %1297 = vmatprep.subr.bf16.mxu0 %v761
    %1298 = vmatpush1.bf16.msra.mxu0 %v760
    %1299 = vmatprep.subr.bf16.mxu0 %v765
    %1300 = vmatpush1.bf16.msra.mxu0 %v764
    %1301 = vmatprep.subr.bf16.mxu0 %v769
    %1302 = vmatpush1.bf16.msra.mxu0 %v768
    %1303 = vmatprep.subr.bf16.mxu0 %v773
    %1304 = vmatpush1.bf16.msra.mxu0 %v772
    %1305 = vmatprep.subr.bf16.mxu0 0
    %1306 = vmatpush1.bf16.msra.mxu0 0
    %1307 = vmatprep.subr.bf16.mxu0 0
    %1308 = vmatpush1.bf16.msra.mxu0 0
    %1309 = vmatprep.subr.bf16.mxu0 0
    %1310 = vmatpush1.bf16.msra.mxu0 0
    %1311 = vmatprep.subr.bf16.mxu0 0
    %1312 = vmatpush1.bf16.msra.mxu0 0
    %1313 = vmatprep.subr.bf16.mxu0 0
    %1314 = vmatpush1.bf16.msra.mxu0 0
    %1315 = vmatprep.subr.bf16.mxu0 0
    %1316 = vmatpush1.bf16.msra.mxu0 0
    %1317 = vmatprep.subr.bf16.mxu0 0
    %1318 = vmatpush1.bf16.msra.mxu0 0
    %1319 = vmatprep.subr.bf16.mxu0 0
    %1320 = vmatpush1.bf16.msra.mxu0 0
    %1321 = vmatprep.mubr.bf16.mxu0 0
    %1322 = vmatmul.mubr.bf16.gmra.mrb[0].mxu0 %v1288
    %v1323 = vpop.f32.mrb[0].mxu0
    %v1324 = vadd.f32 0.0, %v1323
    %v1325 = vpop.f32.mrb[0].mxu0
    %v1326 = vadd.f32 0.0, %v1325
    %v1327 = vpop.f32.mrb[0].mxu0
    %v1328 = vpop.f32.mrb[0].mxu0
    %1329 = vdwg.mxu0
    %1330 = vmatprep.subr.bf16.mxu0 %v747
    %1331 = vmatpush1.bf16.msra.mxu0 %v746
    %1332 = vmatprep.subr.bf16.mxu0 %v751
    %1333 = vmatpush1.bf16.msra.mxu0 %v750
    %1334 = vmatprep.subr.bf16.mxu0 %v755
    %1335 = vmatpush1.bf16.msra.mxu0 %v754
    %1336 = vmatprep.subr.bf16.mxu0 %v759
    %1337 = vmatpush1.bf16.msra.mxu0 %v758
    %1338 = vmatprep.subr.bf16.mxu0 %v763
    %1339 = vmatpush1.bf16.msra.mxu0 %v762
    %1340 = vmatprep.subr.bf16.mxu0 %v767
    %1341 = vmatpush1.bf16.msra.mxu0 %v766
    %1342 = vmatprep.subr.bf16.mxu0 %v771
    %1343 = vmatpush1.bf16.msra.mxu0 %v770
    %1344 = vmatprep.subr.bf16.mxu0 %v775
    %1345 = vmatpush1.bf16.msra.mxu0 %v774
    %1346 = vmatprep.subr.bf16.mxu0 0
    %1347 = vmatpush1.bf16.msra.mxu0 0
    %1348 = vmatprep.subr.bf16.mxu0 0
    %1349 = vmatpush1.bf16.msra.mxu0 0
    %1350 = vmatprep.subr.bf16.mxu0 0
    %1351 = vmatpush1.bf16.msra.mxu0 0
    %1352 = vmatprep.subr.bf16.mxu0 0
    %1353 = vmatpush1.bf16.msra.mxu0 0
    %1354 = vmatprep.subr.bf16.mxu0 0
    %1355 = vmatpush1.bf16.msra.mxu0 0
    %1356 = vmatprep.subr.bf16.mxu0 0
    %1357 = vmatpush1.bf16.msra.mxu0 0
    %1358 = vmatprep.subr.bf16.mxu0 0
    %1359 = vmatpush1.bf16.msra.mxu0 0
    %1360 = vmatprep.subr.bf16.mxu0 0
    %1361 = vmatpush1.bf16.msra.mxu0 0
    %1362 = vmatprep.mubr.bf16.mxu0 0
    %1363 = vmatmul.mubr.bf16.gmra.mrb[0].mxu0 %v1288
    %v1364 = vpop.f32.mrb[0].mxu0
    %v1365 = vadd.f32 0.0, %v1364
    %v1366 = vpop.f32.mrb[0].mxu0
    %v1367 = vadd.f32 0.0, %v1366
    %v1368 = vpop.f32.mrb[0].mxu0
    %v1369 = vpop.f32.mrb[0].mxu0
    %1370 = vdwg.mxu0
    %v1371 = vadd.f32 %v1284, %v1324
    %v1372 = vadd.f32 %v1285, %v1326
    %v1373 = vadd.f32 %v1286, %v1365
    %v1374 = vadd.f32 %v1287, %v1367
    %v1375 = vmul.f32 %v1371, 0.5
    %v1376 = vtanh.pop %v1375
    %v1377 = vmul.f32 %v1376, 0.5
    %v1378 = vadd.f32 %v1377, 0.5
    %v1379 = vmul.f32 %v1372, 0.5
    %v1380 = vtanh.pop %v1379
    %v1381 = vmul.f32 %v1380, 0.5
    %v1382 = vadd.f32 %v1381, 0.5
    %v1383 = vtanh.pop %v1373
    %v1384 = vmul.f32 %v1374, 0.5
    %v1385 = vtanh.pop %v1384
    %v1386 = vmul.f32 %v1385, 0.5
    %v1387 = vadd.f32 %v1386, 0.5
    %v1388 = vmul.f32 %v1382, %v1280
    %v1389 = vmul.f32 %v1378, %v1383
    %v1390 = vadd.f32 %v1388, %v1389
    %v1391 = vtanh.pop %v1390
    %v1392 = vmul.f32 %v1387, %v1391
    %s1393 = scalar_lea.vmem %s3, 16
    %v1394 = vld [vmem:[%s1393] sm:$0xf]
    %v1395 = vunpack.c.l.bf16 %v1394
    %v1396 = vsub.f32 %v1392, %v1277
    %v1397 = vmul.f32 %v1395, %v1396
    %v1398 = vadd.f32 %v1277, %v1397
    %v1399 = vsub.f32 %v1390, %v1280
    %v1400 = vmul.f32 %v1395, %v1399
    %v1401 = vadd.f32 %v1280, %v1400
    %s1402 = smul.u32 5, 4
    %s1403 = smul.addr %s1402, 8
    %s1404 = scalar_lea.vmem [#allocation2], %s1403
    %v1405 = vld [vmem:[%s1404] sm:$0xff]
    %v1406 = vld [vmem:[%s1404 + $0x8] sm:$0xff]
    %v1407 = vld [vmem:[%s1404 + $0x10] sm:$0xff]
    %v1408 = vld [vmem:[%s1404 + $0x18] sm:$0xff]
    %v1409 = vpack.c.bf16 %v1398, %v1398
    %1410 = vmatprep.subr.bf16.mxu0 %v745
    %1411 = vmatpush1.bf16.msra.mxu0 %v744
    %1412 = vmatprep.subr.bf16.mxu0 %v749
    %1413 = vmatpush1.bf16.msra.mxu0 %v748
    %1414 = vmatprep.subr.bf16.mxu0 %v753
    %1415 = vmatpush1.bf16.msra.mxu0 %v752
    %1416 = vmatprep.subr.bf16.mxu0 %v757
    %1417 = vmatpush1.bf16.msra.mxu0 %v756
    %1418 = vmatprep.subr.bf16.mxu0 %v761
    %1419 = vmatpush1.bf16.msra.mxu0 %v760
    %1420 = vmatprep.subr.bf16.mxu0 %v765
    %1421 = vmatpush1.bf16.msra.mxu0 %v764
    %1422 = vmatprep.subr.bf16.mxu0 %v769
    %1423 = vmatpush1.bf16.msra.mxu0 %v768
    %1424 = vmatprep.subr.bf16.mxu0 %v773
    %1425 = vmatpush1.bf16.msra.mxu0 %v772
    %1426 = vmatprep.subr.bf16.mxu0 0
    %1427 = vmatpush1.bf16.msra.mxu0 0
    %1428 = vmatprep.subr.bf16.mxu0 0
    %1429 = vmatpush1.bf16.msra.mxu0 0
    %1430 = vmatprep.subr.bf16.mxu0 0
    %1431 = vmatpush1.bf16.msra.mxu0 0
    %1432 = vmatprep.subr.bf16.mxu0 0
    %1433 = vmatpush1.bf16.msra.mxu0 0
    %1434 = vmatprep.subr.bf16.mxu0 0
    %1435 = vmatpush1.bf16.msra.mxu0 0
    %1436 = vmatprep.subr.bf16.mxu0 0
    %1437 = vmatpush1.bf16.msra.mxu0 0
    %1438 = vmatprep.subr.bf16.mxu0 0
    %1439 = vmatpush1.bf16.msra.mxu0 0
    %1440 = vmatprep.subr.bf16.mxu0 0
    %1441 = vmatpush1.bf16.msra.mxu0 0
    %1442 = vmatprep.mubr.bf16.mxu0 0
    %1443 = vmatmul.mubr.bf16.gmra.mrb[0].mxu0 %v1409
    %v1444 = vpop.f32.mrb[0].mxu0
    %v1445 = vadd.f32 0.0, %v1444
    %v1446 = vpop.f32.mrb[0].mxu0
    %v1447 = vadd.f32 0.0, %v1446
    %v1448 = vpop.f32.mrb[0].mxu0
    %v1449 = vpop.f32.mrb[0].mxu0
    %1450 = vdwg.mxu0
    %1451 = vmatprep.subr.bf16.mxu0 %v747
    %1452 = vmatpush1.bf16.msra.mxu0 %v746
    %1453 = vmatprep.subr.bf16.mxu0 %v751
    %1454 = vmatpush1.bf16.msra.mxu0 %v750
    %1455 = vmatprep.subr.bf16.mxu0 %v755
    %1456 = vmatpush1.bf16.msra.mxu0 %v754
    %1457 = vmatprep.subr.bf16.mxu0 %v759
    %1458 = vmatpush1.bf16.msra.mxu0 %v758
    %1459 = vmatprep.subr.bf16.mxu0 %v763
    %1460 = vmatpush1.bf16.msra.mxu0 %v762
    %1461 = vmatprep.subr.bf16.mxu0 %v767
    %1462 = vmatpush1.bf16.msra.mxu0 %v766
    %1463 = vmatprep.subr.bf16.mxu0 %v771
    %1464 = vmatpush1.bf16.msra.mxu0 %v770
    %1465 = vmatprep.subr.bf16.mxu0 %v775
    %1466 = vmatpush1.bf16.msra.mxu0 %v774
    %1467 = vmatprep.subr.bf16.mxu0 0
    %1468 = vmatpush1.bf16.msra.mxu0 0
    %1469 = vmatprep.subr.bf16.mxu0 0
    %1470 = vmatpush1.bf16.msra.mxu0 0
    %1471 = vmatprep.subr.bf16.mxu0 0
    %1472 = vmatpush1.bf16.msra.mxu0 0
    %1473 = vmatprep.subr.bf16.mxu0 0
    %1474 = vmatpush1.bf16.msra.mxu0 0
    %1475 = vmatprep.subr.bf16.mxu0 0
    %1476 = vmatpush1.bf16.msra.mxu0 0
    %1477 = vmatprep.subr.bf16.mxu0 0
    %1478 = vmatpush1.bf16.msra.mxu0 0
    %1479 = vmatprep.subr.bf16.mxu0 0
    %1480 = vmatpush1.bf16.msra.mxu0 0
    %1481 = vmatprep.subr.bf16.mxu0 0
    %1482 = vmatpush1.bf16.msra.mxu0 0
    %1483 = vmatprep.mubr.bf16.mxu0 0
    %1484 = vmatmul.mubr.bf16.gmra.mrb[0].mxu0 %v1409
    %v1485 = vpop.f32.mrb[0].mxu0
    %v1486 = vadd.f32 0.0, %v1485
    %v1487 = vpop.f32.mrb[0].mxu0
    %v1488 = vadd.f32 0.0, %v1487
    %v1489 = vpop.f32.mrb[0].mxu0
    %v1490 = vpop.f32.mrb[0].mxu0
    %1491 = vdwg.mxu0
    %v1492 = vadd.f32 %v1405, %v1445
    %v1493 = vadd.f32 %v1406, %v1447
    %v1494 = vadd.f32 %v1407, %v1486
    %v1495 = vadd.f32 %v1408, %v1488
    %v1496 = vmul.f32 %v1492, 0.5
    %v1497 = vtanh.pop %v1496
    %v1498 = vmul.f32 %v1497, 0.5
    %v1499 = vadd.f32 %v1498, 0.5
    %v1500 = vmul.f32 %v1493, 0.5
    %v1501 = vtanh.pop %v1500
    %v1502 = vmul.f32 %v1501, 0.5
    %v1503 = vadd.f32 %v1502, 0.5
    %v1504 = vtanh.pop %v1494
    %v1505 = vmul.f32 %v1495, 0.5
    %v1506 = vtanh.pop %v1505
    %v1507 = vmul.f32 %v1506, 0.5
    %v1508 = vadd.f32 %v1507, 0.5
    %v1509 = vmul.f32 %v1503, %v1401
    %v1510 = vmul.f32 %v1499, %v1504
    %v1511 = vadd.f32 %v1509, %v1510
    %v1512 = vtanh.pop %v1511
    %v1513 = vmul.f32 %v1508, %v1512
    %s1514 = scalar_lea.vmem %s3, 20
    %v1515 = vld [vmem:[%s1514] sm:$0xf]
    %v1516 = vunpack.c.l.bf16 %v1515
    %v1517 = vsub.f32 %v1513, %v1398
    %v1518 = vmul.f32 %v1516, %v1517
    %v1519 = vadd.f32 %v1398, %v1518
    %v1520 = vsub.f32 %v1511, %v1401
    %v1521 = vmul.f32 %v1516, %v1520
    %v1522 = vadd.f32 %v1401, %v1521
    %s1523 = smul.addr %s609, 8
    %s1524 = scalar_lea.vmem [#allocation3], %s1523
    %v1525 = vld [vmem:[%s1524] sm:$0xff]
    %v1526 = vld [vmem:[%s1524 + $0x8] sm:$0xff]
    %v1527 = vld [vmem:[%s1524 + $0x10] sm:$0xff]
    %v1528 = vld [vmem:[%s1524 + $0x18] sm:$0xff]
    %v1529 = vpack.c.bf16 %v1519, %v1519
    %v1530 = vld [vmem:[#allocation6] sm:$0xff]
    %v1531 = vld [vmem:[#allocation6 + $0x8] sm:$0xff]
    %v1532 = vld [vmem:[#allocation6 + $0x10] sm:$0xff]
    %v1533 = vld [vmem:[#allocation6 + $0x18] sm:$0xff]
    %v1534 = vld [vmem:[#allocation6 + $0x20] sm:$0xff]
    %v1535 = vld [vmem:[#allocation6 + $0x28] sm:$0xff]
    %v1536 = vld [vmem:[#allocation6 + $0x30] sm:$0xff]
    %v1537 = vld [vmem:[#allocation6 + $0x38] sm:$0xff]
    %v1538 = vld [vmem:[#allocation6 + $0x40] sm:$0xff]
    %v1539 = vld [vmem:[#allocation6 + $0x48] sm:$0xff]
    %v1540 = vld [vmem:[#allocation6 + $0x50] sm:$0xff]
    %v1541 = vld [vmem:[#allocation6 + $0x58] sm:$0xff]
    %v1542 = vld [vmem:[#allocation6 + $0x60] sm:$0xff]
    %v1543 = vld [vmem:[#allocation6 + $0x68] sm:$0xff]
    %v1544 = vld [vmem:[#allocation6 + $0x70] sm:$0xff]
    %v1545 = vld [vmem:[#allocation6 + $0x78] sm:$0xff]
    %v1546 = vld [vmem:[#allocation6 + $0x80] sm:$0xff]
    %v1547 = vld [vmem:[#allocation6 + $0x88] sm:$0xff]
    %v1548 = vld [vmem:[#allocation6 + $0x90] sm:$0xff]
    %v1549 = vld [vmem:[#allocation6 + $0x98] sm:$0xff]
    %v1550 = vld [vmem:[#allocation6 + $0xa0] sm:$0xff]
    %v1551 = vld [vmem:[#allocation6 + $0xa8] sm:$0xff]
    %v1552 = vld [vmem:[#allocation6 + $0xb0] sm:$0xff]
    %v1553 = vld [vmem:[#allocation6 + $0xb8] sm:$0xff]
    %v1554 = vld [vmem:[#allocation6 + $0xc0] sm:$0xff]
    %v1555 = vld [vmem:[#allocation6 + $0xc8] sm:$0xff]
    %v1556 = vld [vmem:[#allocation6 + $0xd0] sm:$0xff]
    %v1557 = vld [vmem:[#allocation6 + $0xd8] sm:$0xff]
    %v1558 = vld [vmem:[#allocation6 + $0xe0] sm:$0xff]
    %v1559 = vld [vmem:[#allocation6 + $0xe8] sm:$0xff]
    %v1560 = vld [vmem:[#allocation6 + $0xf0] sm:$0xff]
    %v1561 = vld [vmem:[#allocation6 + $0xf8] sm:$0xff]
    %v1594 = vunpack.c.l.b16 %v1530
    %v1595 = vunpack.c.h.b16 %v1530
    %v1596 = vunpack.c.l.b16 %v1531
    %v1597 = vunpack.c.h.b16 %v1531
    %v1598 = vunpack.c.l.b16 %v1532
    %v1599 = vunpack.c.h.b16 %v1532
    %v1600 = vunpack.c.l.b16 %v1533
    %v1601 = vunpack.c.h.b16 %v1533
    %v1602 = vunpack.c.l.b16 %v1534
    %v1603 = vunpack.c.h.b16 %v1534
    %v1604 = vunpack.c.l.b16 %v1535
    %v1605 = vunpack.c.h.b16 %v1535
    %v1606 = vunpack.c.l.b16 %v1536
    %v1607 = vunpack.c.h.b16 %v1536
    %v1608 = vunpack.c.l.b16 %v1537
    %v1609 = vunpack.c.h.b16 %v1537
    %v1610 = vunpack.c.l.b16 %v1538
    %v1611 = vunpack.c.h.b16 %v1538
    %v1612 = vunpack.c.l.b16 %v1539
    %v1613 = vunpack.c.h.b16 %v1539
    %v1614 = vunpack.c.l.b16 %v1540
    %v1615 = vunpack.c.h.b16 %v1540
    %v1616 = vunpack.c.l.b16 %v1541
    %v1617 = vunpack.c.h.b16 %v1541
    %v1618 = vunpack.c.l.b16 %v1542
    %v1619 = vunpack.c.h.b16 %v1542
    %v1620 = vunpack.c.l.b16 %v1543
    %v1621 = vunpack.c.h.b16 %v1543
    %v1622 = vunpack.c.l.b16 %v1544
    %v1623 = vunpack.c.h.b16 %v1544
    %v1624 = vunpack.c.l.b16 %v1545
    %v1625 = vunpack.c.h.b16 %v1545
    %v1626 = vunpack.c.l.b16 %v1546
    %v1627 = vunpack.c.h.b16 %v1546
    %v1628 = vunpack.c.l.b16 %v1547
    %v1629 = vunpack.c.h.b16 %v1547
    %v1630 = vunpack.c.l.b16 %v1548
    %v1631 = vunpack.c.h.b16 %v1548
    %v1632 = vunpack.c.l.b16 %v1549
    %v1633 = vunpack.c.h.b16 %v1549
    %v1634 = vunpack.c.l.b16 %v1550
    %v1635 = vunpack.c.h.b16 %v1550
    %v1636 = vunpack.c.l.b16 %v1551
    %v1637 = vunpack.c.h.b16 %v1551
    %v1638 = vunpack.c.l.b16 %v1552
    %v1639 = vunpack.c.h.b16 %v1552
    %v1640 = vunpack.c.l.b16 %v1553
    %v1641 = vunpack.c.h.b16 %v1553
    %v1642 = vunpack.c.l.b16 %v1554
    %v1643 = vunpack.c.h.b16 %v1554
    %v1644 = vunpack.c.l.b16 %v1555
    %v1645 = vunpack.c.h.b16 %v1555
    %v1646 = vunpack.c.l.b16 %v1556
    %v1647 = vunpack.c.h.b16 %v1556
    %v1648 = vunpack.c.l.b16 %v1557
    %v1649 = vunpack.c.h.b16 %v1557
    %v1650 = vunpack.c.l.b16 %v1558
    %v1651 = vunpack.c.h.b16 %v1558
    %v1652 = vunpack.c.l.b16 %v1559
    %v1653 = vunpack.c.h.b16 %v1559
    %v1654 = vunpack.c.l.b16 %v1560
    %v1655 = vunpack.c.h.b16 %v1560
    %v1656 = vunpack.c.l.b16 %v1561
    %v1657 = vunpack.c.h.b16 %v1561
    %v1658 = vpack.c.b16 %v1598, %v1594
    %v1659 = vpack.c.b16 %v1599, %v1595
    %v1660 = vpack.c.b16 %v1600, %v1596
    %v1661 = vpack.c.b16 %v1601, %v1597
    %v1662 = vpack.c.b16 %v1606, %v1602
    %v1663 = vpack.c.b16 %v1607, %v1603
    %v1664 = vpack.c.b16 %v1608, %v1604
    %v1665 = vpack.c.b16 %v1609, %v1605
    %v1666 = vpack.c.b16 %v1614, %v1610
    %v1667 = vpack.c.b16 %v1615, %v1611
    %v1668 = vpack.c.b16 %v1616, %v1612
    %v1669 = vpack.c.b16 %v1617, %v1613
    %v1670 = vpack.c.b16 %v1622, %v1618
    %v1671 = vpack.c.b16 %v1623, %v1619
    %v1672 = vpack.c.b16 %v1624, %v1620
    %v1673 = vpack.c.b16 %v1625, %v1621
    %v1674 = vpack.c.b16 %v1630, %v1626
    %v1675 = vpack.c.b16 %v1631, %v1627
    %v1676 = vpack.c.b16 %v1632, %v1628
    %v1677 = vpack.c.b16 %v1633, %v1629
    %v1678 = vpack.c.b16 %v1638, %v1634
    %v1679 = vpack.c.b16 %v1639, %v1635
    %v1680 = vpack.c.b16 %v1640, %v1636
    %v1681 = vpack.c.b16 %v1641, %v1637
    %v1682 = vpack.c.b16 %v1646, %v1642
    %v1683 = vpack.c.b16 %v1647, %v1643
    %v1684 = vpack.c.b16 %v1648, %v1644
    %v1685 = vpack.c.b16 %v1649, %v1645
    %v1686 = vpack.c.b16 %v1654, %v1650
    %v1687 = vpack.c.b16 %v1655, %v1651
    %v1688 = vpack.c.b16 %v1656, %v1652
    %v1689 = vpack.c.b16 %v1657, %v1653
    %1722 = vmatprep.subr.bf16.mxu0 %v1659
    %1723 = vmatpush1.bf16.msra.mxu0 %v1658
    %1724 = vmatprep.subr.bf16.mxu0 %v1663
    %1725 = vmatpush1.bf16.msra.mxu0 %v1662
    %1726 = vmatprep.subr.bf16.mxu0 %v1667
    %1727 = vmatpush1.bf16.msra.mxu0 %v1666
    %1728 = vmatprep.subr.bf16.mxu0 %v1671
    %1729 = vmatpush1.bf16.msra.mxu0 %v1670
    %1730 = vmatprep.subr.bf16.mxu0 %v1675
    %1731 = vmatpush1.bf16.msra.mxu0 %v1674
    %1732 = vmatprep.subr.bf16.mxu0 %v1679
    %1733 = vmatpush1.bf16.msra.mxu0 %v1678
    %1734 = vmatprep.subr.bf16.mxu0 %v1683
    %1735 = vmatpush1.bf16.msra.mxu0 %v1682
    %1736 = vmatprep.subr.bf16.mxu0 %v1687
    %1737 = vmatpush1.bf16.msra.mxu0 %v1686
    %1738 = vmatprep.subr.bf16.mxu0 0
    %1739 = vmatpush1.bf16.msra.mxu0 0
    %1740 = vmatprep.subr.bf16.mxu0 0
    %1741 = vmatpush1.bf16.msra.mxu0 0
    %1742 = vmatprep.subr.bf16.mxu0 0
    %1743 = vmatpush1.bf16.msra.mxu0 0
    %1744 = vmatprep.subr.bf16.mxu0 0
    %1745 = vmatpush1.bf16.msra.mxu0 0
    %1746 = vmatprep.subr.bf16.mxu0 0
    %1747 = vmatpush1.bf16.msra.mxu0 0
    %1748 = vmatprep.subr.bf16.mxu0 0
    %1749 = vmatpush1.bf16.msra.mxu0 0
    %1750 = vmatprep.subr.bf16.mxu0 0
    %1751 = vmatpush1.bf16.msra.mxu0 0
    %1752 = vmatprep.subr.bf16.mxu0 0
    %1753 = vmatpush1.bf16.msra.mxu0 0
    %1754 = vmatprep.mubr.bf16.mxu0 0
    %1755 = vmatmul.mubr.bf16.gmra.mrb[0].mxu0 %v1529
    %v1756 = vpop.f32.mrb[0].mxu0
    %v1757 = vadd.f32 0.0, %v1756
    %v1758 = vpop.f32.mrb[0].mxu0
    %v1759 = vadd.f32 0.0, %v1758
    %v1760 = vpop.f32.mrb[0].mxu0
    %v1761 = vpop.f32.mrb[0].mxu0
    %1762 = vdwg.mxu0
    %1763 = vmatprep.subr.bf16.mxu0 %v1661
    %1764 = vmatpush1.bf16.msra.mxu0 %v1660
    %1765 = vmatprep.subr.bf16.mxu0 %v1665
    %1766 = vmatpush1.bf16.msra.mxu0 %v1664
    %1767 = vmatprep.subr.bf16.mxu0 %v1669
    %1768 = vmatpush1.bf16.msra.mxu0 %v1668
    %1769 = vmatprep.subr.bf16.mxu0 %v1673
    %1770 = vmatpush1.bf16.msra.mxu0 %v1672
    %1771 = vmatprep.subr.bf16.mxu0 %v1677
    %1772 = vmatpush1.bf16.msra.mxu0 %v1676
    %1773 = vmatprep.subr.bf16.mxu0 %v1681
    %1774 = vmatpush1.bf16.msra.mxu0 %v1680
    %1775 = vmatprep.subr.bf16.mxu0 %v1685
    %1776 = vmatpush1.bf16.msra.mxu0 %v1684
    %1777 = vmatprep.subr.bf16.mxu0 %v1689
    %1778 = vmatpush1.bf16.msra.mxu0 %v1688
    %1779 = vmatprep.subr.bf16.mxu0 0
    %1780 = vmatpush1.bf16.msra.mxu0 0
    %1781 = vmatprep.subr.bf16.mxu0 0
    %1782 = vmatpush1.bf16.msra.mxu0 0
    %1783 = vmatprep.subr.bf16.mxu0 0
    %1784 = vmatpush1.bf16.msra.mxu0 0
    %1785 = vmatprep.subr.bf16.mxu0 0
    %1786 = vmatpush1.bf16.msra.mxu0 0
    %1787 = vmatprep.subr.bf16.mxu0 0
    %1788 = vmatpush1.bf16.msra.mxu0 0
    %1789 = vmatprep.subr.bf16.mxu0 0
    %1790 = vmatpush1.bf16.msra.mxu0 0
    %1791 = vmatprep.subr.bf16.mxu0 0
    %1792 = vmatpush1.bf16.msra.mxu0 0
    %1793 = vmatprep.subr.bf16.mxu0 0
    %1794 = vmatpush1.bf16.msra.mxu0 0
    %1795 = vmatprep.mubr.bf16.mxu0 0
    %1796 = vmatmul.mubr.bf16.gmra.mrb[0].mxu0 %v1529
    %v1797 = vpop.f32.mrb[0].mxu0
    %v1798 = vadd.f32 0.0, %v1797
    %v1799 = vpop.f32.mrb[0].mxu0
    %v1800 = vadd.f32 0.0, %v1799
    %v1801 = vpop.f32.mrb[0].mxu0
    %v1802 = vpop.f32.mrb[0].mxu0
    %1803 = vdwg.mxu0
    %v1804 = vadd.f32 %v1525, %v1757
    %v1805 = vadd.f32 %v1526, %v1759
    %v1806 = vadd.f32 %v1527, %v1798
    %v1807 = vadd.f32 %v1528, %v1800
    %v1808 = vmul.f32 %v1804, 0.5
    %v1809 = vtanh.pop %v1808
    %v1810 = vmul.f32 %v1809, 0.5
    %v1811 = vadd.f32 %v1810, 0.5
    %v1812 = vmul.f32 %v1805, 0.5
    %v1813 = vtanh.pop %v1812
    %v1814 = vmul.f32 %v1813, 0.5
    %v1815 = vadd.f32 %v1814, 0.5
    %v1816 = vtanh.pop %v1806
    %v1817 = vmul.f32 %v1807, 0.5
    %v1818 = vtanh.pop %v1817
    %v1819 = vmul.f32 %v1818, 0.5
    %v1820 = vadd.f32 %v1819, 0.5
    %v1821 = vmul.f32 %v1815, %v1522
    %v1822 = vmul.f32 %v1811, %v1816
    %v1823 = vadd.f32 %v1821, %v1822
    %v1824 = vtanh.pop %v1823
    %v1825 = vmul.f32 %v1820, %v1824
    %v1826 = vld [vmem:[%s2] sm:$0xf]
    %v1827 = vunpack.c.l.bf16 %v1826
    %v1828 = vsub.f32 %v1825, %v1519
    %v1829 = vmul.f32 %v1827, %v1828
    %v1830 = vadd.f32 %v1519, %v1829
    %v1831 = vsub.f32 %v1823, %v1522
    %v1832 = vmul.f32 %v1827, %v1831
    %v1833 = vadd.f32 %v1522, %v1832
    %s1834 = smul.addr %s918, 8
    %s1835 = scalar_lea.vmem [#allocation3], %s1834
    %v1836 = vld [vmem:[%s1835] sm:$0xff]
    %v1837 = vld [vmem:[%s1835 + $0x8] sm:$0xff]
    %v1838 = vld [vmem:[%s1835 + $0x10] sm:$0xff]
    %v1839 = vld [vmem:[%s1835 + $0x18] sm:$0xff]
    %v1840 = vpack.c.bf16 %v1830, %v1830
    %1841 = vmatprep.subr.bf16.mxu0 %v1659
    %1842 = vmatpush1.bf16.msra.mxu0 %v1658
    %1843 = vmatprep.subr.bf16.mxu0 %v1663
    %1844 = vmatpush1.bf16.msra.mxu0 %v1662
    %1845 = vmatprep.subr.bf16.mxu0 %v1667
    %1846 = vmatpush1.bf16.msra.mxu0 %v1666
    %1847 = vmatprep.subr.bf16.mxu0 %v1671
    %1848 = vmatpush1.bf16.msra.mxu0 %v1670
    %1849 = vmatprep.subr.bf16.mxu0 %v1675
    %1850 = vmatpush1.bf16.msra.mxu0 %v1674
    %1851 = vmatprep.subr.bf16.mxu0 %v1679
    %1852 = vmatpush1.bf16.msra.mxu0 %v1678
    %1853 = vmatprep.subr.bf16.mxu0 %v1683
    %1854 = vmatpush1.bf16.msra.mxu0 %v1682
    %1855 = vmatprep.subr.bf16.mxu0 %v1687
    %1856 = vmatpush1.bf16.msra.mxu0 %v1686
    %1857 = vmatprep.subr.bf16.mxu0 0
    %1858 = vmatpush1.bf16.msra.mxu0 0
    %1859 = vmatprep.subr.bf16.mxu0 0
    %1860 = vmatpush1.bf16.msra.mxu0 0
    %1861 = vmatprep.subr.bf16.mxu0 0
    %1862 = vmatpush1.bf16.msra.mxu0 0
    %1863 = vmatprep.subr.bf16.mxu0 0
    %1864 = vmatpush1.bf16.msra.mxu0 0
    %1865 = vmatprep.subr.bf16.mxu0 0
    %1866 = vmatpush1.bf16.msra.mxu0 0
    %1867 = vmatprep.subr.bf16.mxu0 0
    %1868 = vmatpush1.bf16.msra.mxu0 0
    %1869 = vmatprep.subr.bf16.mxu0 0
    %1870 = vmatpush1.bf16.msra.mxu0 0
    %1871 = vmatprep.subr.bf16.mxu0 0
    %1872 = vmatpush1.bf16.msra.mxu0 0
    %1873 = vmatprep.mubr.bf16.mxu0 0
    %1874 = vmatmul.mubr.bf16.gmra.mrb[0].mxu0 %v1840
    %v1875 = vpop.f32.mrb[0].mxu0
    %v1876 = vadd.f32 0.0, %v1875
    %v1877 = vpop.f32.mrb[0].mxu0
    %v1878 = vadd.f32 0.0, %v1877
    %v1879 = vpop.f32.mrb[0].mxu0
    %v1880 = vpop.f32.mrb[0].mxu0
    %1881 = vdwg.mxu0
    %1882 = vmatprep.subr.bf16.mxu0 %v1661
    %1883 = vmatpush1.bf16.msra.mxu0 %v1660
    %1884 = vmatprep.subr.bf16.mxu0 %v1665
    %1885 = vmatpush1.bf16.msra.mxu0 %v1664
    %1886 = vmatprep.subr.bf16.mxu0 %v1669
    %1887 = vmatpush1.bf16.msra.mxu0 %v1668
    %1888 = vmatprep.subr.bf16.mxu0 %v1673
    %1889 = vmatpush1.bf16.msra.mxu0 %v1672
    %1890 = vmatprep.subr.bf16.mxu0 %v1677
    %1891 = vmatpush1.bf16.msra.mxu0 %v1676
    %1892 = vmatprep.subr.bf16.mxu0 %v1681
    %1893 = vmatpush1.bf16.msra.mxu0 %v1680
    %1894 = vmatprep.subr.bf16.mxu0 %v1685
    %1895 = vmatpush1.bf16.msra.mxu0 %v1684
    %1896 = vmatprep.subr.bf16.mxu0 %v1689
    %1897 = vmatpush1.bf16.msra.mxu0 %v1688
    %1898 = vmatprep.subr.bf16.mxu0 0
    %1899 = vmatpush1.bf16.msra.mxu0 0
    %1900 = vmatprep.subr.bf16.mxu0 0
    %1901 = vmatpush1.bf16.msra.mxu0 0
    %1902 = vmatprep.subr.bf16.mxu0 0
    %1903 = vmatpush1.bf16.msra.mxu0 0
    %1904 = vmatprep.subr.bf16.mxu0 0
    %1905 = vmatpush1.bf16.msra.mxu0 0
    %1906 = vmatprep.subr.bf16.mxu0 0
    %1907 = vmatpush1.bf16.msra.mxu0 0
    %1908 = vmatprep.subr.bf16.mxu0 0
    %1909 = vmatpush1.bf16.msra.mxu0 0
    %1910 = vmatprep.subr.bf16.mxu0 0
    %1911 = vmatpush1.bf16.msra.mxu0 0
    %1912 = vmatprep.subr.bf16.mxu0 0
    %1913 = vmatpush1.bf16.msra.mxu0 0
    %1914 = vmatprep.mubr.bf16.mxu0 0
    %1915 = vmatmul.mubr.bf16.gmra.mrb[0].mxu0 %v1840
    %v1916 = vpop.f32.mrb[0].mxu0
    %v1917 = vadd.f32 0.0, %v1916
    %v1918 = vpop.f32.mrb[0].mxu0
    %v1919 = vadd.f32 0.0, %v1918
    %v1920 = vpop.f32.mrb[0].mxu0
    %v1921 = vpop.f32.mrb[0].mxu0
    %1922 = vdwg.mxu0
    %v1923 = vadd.f32 %v1836, %v1876
    %v1924 = vadd.f32 %v1837, %v1878
    %v1925 = vadd.f32 %v1838, %v1917
    %v1926 = vadd.f32 %v1839, %v1919
    %v1927 = vmul.f32 %v1923, 0.5
    %v1928 = vtanh.pop %v1927
    %v1929 = vmul.f32 %v1928, 0.5
    %v1930 = vadd.f32 %v1929, 0.5
    %v1931 = vmul.f32 %v1924, 0.5
    %v1932 = vtanh.pop %v1931
    %v1933 = vmul.f32 %v1932, 0.5
    %v1934 = vadd.f32 %v1933, 0.5
    %v1935 = vtanh.pop %v1925
    %v1936 = vmul.f32 %v1926, 0.5
    %v1937 = vtanh.pop %v1936
    %v1938 = vmul.f32 %v1937, 0.5
    %v1939 = vadd.f32 %v1938, 0.5
    %v1940 = vmul.f32 %v1934, %v1833
    %v1941 = vmul.f32 %v1930, %v1935
    %v1942 = vadd.f32 %v1940, %v1941
    %v1943 = vtanh.pop %v1942
    %v1944 = vmul.f32 %v1939, %v1943
    %s1945 = scalar_lea.vmem %s2, 4
    %v1946 = vld [vmem:[%s1945] sm:$0xf]
    %v1947 = vunpack.c.l.bf16 %v1946
    %v1948 = vsub.f32 %v1944, %v1830
    %v1949 = vmul.f32 %v1947, %v1948
    %v1950 = vadd.f32 %v1830, %v1949
    %v1951 = vsub.f32 %v1942, %v1833
    %v1952 = vmul.f32 %v1947, %v1951
    %v1953 = vadd.f32 %v1833, %v1952
    %s1954 = smul.addr %s1039, 8
    %s1955 = scalar_lea.vmem [#allocation3], %s1954
    %v1956 = vld [vmem:[%s1955] sm:$0xff]
    %v1957 = vld [vmem:[%s1955 + $0x8] sm:$0xff]
    %v1958 = vld [vmem:[%s1955 + $0x10] sm:$0xff]
    %v1959 = vld [vmem:[%s1955 + $0x18] sm:$0xff]
    %v1960 = vpack.c.bf16 %v1950, %v1950
    %1961 = vmatprep.subr.bf16.mxu0 %v1659
    %1962 = vmatpush1.bf16.msra.mxu0 %v1658
    %1963 = vmatprep.subr.bf16.mxu0 %v1663
    %1964 = vmatpush1.bf16.msra.mxu0 %v1662
    %1965 = vmatprep.subr.bf16.mxu0 %v1667
    %1966 = vmatpush1.bf16.msra.mxu0 %v1666
    %1967 = vmatprep.subr.bf16.mxu0 %v1671
    %1968 = vmatpush1.bf16.msra.mxu0 %v1670
    %1969 = vmatprep.subr.bf16.mxu0 %v1675
    %1970 = vmatpush1.bf16.msra.mxu0 %v1674
    %1971 = vmatprep.subr.bf16.mxu0 %v1679
    %1972 = vmatpush1.bf16.msra.mxu0 %v1678
    %1973 = vmatprep.subr.bf16.mxu0 %v1683
    %1974 = vmatpush1.bf16.msra.mxu0 %v1682
    %1975 = vmatprep.subr.bf16.mxu0 %v1687
    %1976 = vmatpush1.bf16.msra.mxu0 %v1686
    %1977 = vmatprep.subr.bf16.mxu0 0
    %1978 = vmatpush1.bf16.msra.mxu0 0
    %1979 = vmatprep.subr.bf16.mxu0 0
    %1980 = vmatpush1.bf16.msra.mxu0 0
    %1981 = vmatprep.subr.bf16.mxu0 0
    %1982 = vmatpush1.bf16.msra.mxu0 0
    %1983 = vmatprep.subr.bf16.mxu0 0
    %1984 = vmatpush1.bf16.msra.mxu0 0
    %1985 = vmatprep.subr.bf16.mxu0 0
    %1986 = vmatpush1.bf16.msra.mxu0 0
    %1987 = vmatprep.subr.bf16.mxu0 0
    %1988 = vmatpush1.bf16.msra.mxu0 0
    %1989 = vmatprep.subr.bf16.mxu0 0
    %1990 = vmatpush1.bf16.msra.mxu0 0
    %1991 = vmatprep.subr.bf16.mxu0 0
    %1992 = vmatpush1.bf16.msra.mxu0 0
    %1993 = vmatprep.mubr.bf16.mxu0 0
    %1994 = vmatmul.mubr.bf16.gmra.mrb[0].mxu0 %v1960
    %v1995 = vpop.f32.mrb[0].mxu0
    %v1996 = vadd.f32 0.0, %v1995
    %v1997 = vpop.f32.mrb[0].mxu0
    %v1998 = vadd.f32 0.0, %v1997
    %v1999 = vpop.f32.mrb[0].mxu0
    %v2000 = vpop.f32.mrb[0].mxu0
    %2001 = vdwg.mxu0
    %2002 = vmatprep.subr.bf16.mxu0 %v1661
    %2003 = vmatpush1.bf16.msra.mxu0 %v1660
    %2004 = vmatprep.subr.bf16.mxu0 %v1665
    %2005 = vmatpush1.bf16.msra.mxu0 %v1664
    %2006 = vmatprep.subr.bf16.mxu0 %v1669
    %2007 = vmatpush1.bf16.msra.mxu0 %v1668
    %2008 = vmatprep.subr.bf16.mxu0 %v1673
    %2009 = vmatpush1.bf16.msra.mxu0 %v1672
    %2010 = vmatprep.subr.bf16.mxu0 %v1677
    %2011 = vmatpush1.bf16.msra.mxu0 %v1676
    %2012 = vmatprep.subr.bf16.mxu0 %v1681
    %2013 = vmatpush1.bf16.msra.mxu0 %v1680
    %2014 = vmatprep.subr.bf16.mxu0 %v1685
    %2015 = vmatpush1.bf16.msra.mxu0 %v1684
    %2016 = vmatprep.subr.bf16.mxu0 %v1689
    %2017 = vmatpush1.bf16.msra.mxu0 %v1688
    %2018 = vmatprep.subr.bf16.mxu0 0
    %2019 = vmatpush1.bf16.msra.mxu0 0
    %2020 = vmatprep.subr.bf16.mxu0 0
    %2021 = vmatpush1.bf16.msra.mxu0 0
    %2022 = vmatprep.subr.bf16.mxu0 0
    %2023 = vmatpush1.bf16.msra.mxu0 0
    %2024 = vmatprep.subr.bf16.mxu0 0
    %2025 = vmatpush1.bf16.msra.mxu0 0
    %2026 = vmatprep.subr.bf16.mxu0 0
    %2027 = vmatpush1.bf16.msra.mxu0 0
    %2028 = vmatprep.subr.bf16.mxu0 0
    %2029 = vmatpush1.bf16.msra.mxu0 0
    %2030 = vmatprep.subr.bf16.mxu0 0
    %2031 = vmatpush1.bf16.msra.mxu0 0
    %2032 = vmatprep.subr.bf16.mxu0 0
    %2033 = vmatpush1.bf16.msra.mxu0 0
    %2034 = vmatprep.mubr.bf16.mxu0 0
    %2035 = vmatmul.mubr.bf16.gmra.mrb[0].mxu0 %v1960
    %v2036 = vpop.f32.mrb[0].mxu0
    %v2037 = vadd.f32 0.0, %v2036
    %v2038 = vpop.f32.mrb[0].mxu0
    %v2039 = vadd.f32 0.0, %v2038
    %v2040 = vpop.f32.mrb[0].mxu0
    %v2041 = vpop.f32.mrb[0].mxu0
    %2042 = vdwg.mxu0
    %v2043 = vadd.f32 %v1956, %v1996
    %v2044 = vadd.f32 %v1957, %v1998
    %v2045 = vadd.f32 %v1958, %v2037
    %v2046 = vadd.f32 %v1959, %v2039
    %v2047 = vmul.f32 %v2043, 0.5
    %v2048 = vtanh.pop %v2047
    %v2049 = vmul.f32 %v2048, 0.5
    %v2050 = vadd.f32 %v2049, 0.5
    %v2051 = vmul.f32 %v2044, 0.5
    %v2052 = vtanh.pop %v2051
    %v2053 = vmul.f32 %v2052, 0.5
    %v2054 = vadd.f32 %v2053, 0.5
    %v2055 = vtanh.pop %v2045
    %v2056 = vmul.f32 %v2046, 0.5
    %v2057 = vtanh.pop %v2056
    %v2058 = vmul.f32 %v2057, 0.5
    %v2059 = vadd.f32 %v2058, 0.5
    %v2060 = vmul.f32 %v2054, %v1953
    %v2061 = vmul.f32 %v2050, %v2055
    %v2062 = vadd.f32 %v2060, %v2061
    %v2063 = vtanh.pop %v2062
    %v2064 = vmul.f32 %v2059, %v2063
    %s2065 = scalar_lea.vmem %s2, 8
    %v2066 = vld [vmem:[%s2065] sm:$0xf]
    %v2067 = vunpack.c.l.bf16 %v2066
    %v2068 = vsub.f32 %v2064, %v1950
    %v2069 = vmul.f32 %v2067, %v2068
    %v2070 = vadd.f32 %v1950, %v2069
    %v2071 = vsub.f32 %v2062, %v1953
    %v2072 = vmul.f32 %v2067, %v2071
    %v2073 = vadd.f32 %v1953, %v2072
    %s2074 = smul.addr %s1160, 8
    %s2075 = scalar_lea.vmem [#allocation3], %s2074
    %v2076 = vld [vmem:[%s2075] sm:$0xff]
    %v2077 = vld [vmem:[%s2075 + $0x8] sm:$0xff]
    %v2078 = vld [vmem:[%s2075 + $0x10] sm:$0xff]
    %v2079 = vld [vmem:[%s2075 + $0x18] sm:$0xff]
    %v2080 = vpack.c.bf16 %v2070, %v2070
    %2081 = vmatprep.subr.bf16.mxu0 %v1659
    %2082 = vmatpush1.bf16.msra.mxu0 %v1658
    %2083 = vmatprep.subr.bf16.mxu0 %v1663
    %2084 = vmatpush1.bf16.msra.mxu0 %v1662
    %2085 = vmatprep.subr.bf16.mxu0 %v1667
    %2086 = vmatpush1.bf16.msra.mxu0 %v1666
    %2087 = vmatprep.subr.bf16.mxu0 %v1671
    %2088 = vmatpush1.bf16.msra.mxu0 %v1670
    %2089 = vmatprep.subr.bf16.mxu0 %v1675
    %2090 = vmatpush1.bf16.msra.mxu0 %v1674
    %2091 = vmatprep.subr.bf16.mxu0 %v1679
    %2092 = vmatpush1.bf16.msra.mxu0 %v1678
    %2093 = vmatprep.subr.bf16.mxu0 %v1683
    %2094 = vmatpush1.bf16.msra.mxu0 %v1682
    %2095 = vmatprep.subr.bf16.mxu0 %v1687
    %2096 = vmatpush1.bf16.msra.mxu0 %v1686
    %2097 = vmatprep.subr.bf16.mxu0 0
    %2098 = vmatpush1.bf16.msra.mxu0 0
    %2099 = vmatprep.subr.bf16.mxu0 0
    %2100 = vmatpush1.bf16.msra.mxu0 0
    %2101 = vmatprep.subr.bf16.mxu0 0
    %2102 = vmatpush1.bf16.msra.mxu0 0
    %2103 = vmatprep.subr.bf16.mxu0 0
    %2104 = vmatpush1.bf16.msra.mxu0 0
    %2105 = vmatprep.subr.bf16.mxu0 0
    %2106 = vmatpush1.bf16.msra.mxu0 0
    %2107 = vmatprep.subr.bf16.mxu0 0
    %2108 = vmatpush1.bf16.msra.mxu0 0
    %2109 = vmatprep.subr.bf16.mxu0 0
    %2110 = vmatpush1.bf16.msra.mxu0 0
    %2111 = vmatprep.subr.bf16.mxu0 0
    %2112 = vmatpush1.bf16.msra.mxu0 0
    %2113 = vmatprep.mubr.bf16.mxu0 0
    %2114 = vmatmul.mubr.bf16.gmra.mrb[0].mxu0 %v2080
    %v2115 = vpop.f32.mrb[0].mxu0
    %v2116 = vadd.f32 0.0, %v2115
    %v2117 = vpop.f32.mrb[0].mxu0
    %v2118 = vadd.f32 0.0, %v2117
    %v2119 = vpop.f32.mrb[0].mxu0
    %v2120 = vpop.f32.mrb[0].mxu0
    %2121 = vdwg.mxu0
    %2122 = vmatprep.subr.bf16.mxu0 %v1661
    %2123 = vmatpush1.bf16.msra.mxu0 %v1660
    %2124 = vmatprep.subr.bf16.mxu0 %v1665
    %2125 = vmatpush1.bf16.msra.mxu0 %v1664
    %2126 = vmatprep.subr.bf16.mxu0 %v1669
    %2127 = vmatpush1.bf16.msra.mxu0 %v1668
    %2128 = vmatprep.subr.bf16.mxu0 %v1673
    %2129 = vmatpush1.bf16.msra.mxu0 %v1672
    %2130 = vmatprep.subr.bf16.mxu0 %v1677
    %2131 = vmatpush1.bf16.msra.mxu0 %v1676
    %2132 = vmatprep.subr.bf16.mxu0 %v1681
    %2133 = vmatpush1.bf16.msra.mxu0 %v1680
    %2134 = vmatprep.subr.bf16.mxu0 %v1685
    %2135 = vmatpush1.bf16.msra.mxu0 %v1684
    %2136 = vmatprep.subr.bf16.mxu0 %v1689
    %2137 = vmatpush1.bf16.msra.mxu0 %v1688
    %2138 = vmatprep.subr.bf16.mxu0 0
    %2139 = vmatpush1.bf16.msra.mxu0 0
    %2140 = vmatprep.subr.bf16.mxu0 0
    %2141 = vmatpush1.bf16.msra.mxu0 0
    %2142 = vmatprep.subr.bf16.mxu0 0
    %2143 = vmatpush1.bf16.msra.mxu0 0
    %2144 = vmatprep.subr.bf16.mxu0 0
    %2145 = vmatpush1.bf16.msra.mxu0 0
    %2146 = vmatprep.subr.bf16.mxu0 0
    %2147 = vmatpush1.bf16.msra.mxu0 0
    %2148 = vmatprep.subr.bf16.mxu0 0
    %2149 = vmatpush1.bf16.msra.mxu0 0
    %2150 = vmatprep.subr.bf16.mxu0 0
    %2151 = vmatpush1.bf16.msra.mxu0 0
    %2152 = vmatprep.subr.bf16.mxu0 0
    %2153 = vmatpush1.bf16.msra.mxu0 0
    %2154 = vmatprep.mubr.bf16.mxu0 0
    %2155 = vmatmul.mubr.bf16.gmra.mrb[0].mxu0 %v2080
    %v2156 = vpop.f32.mrb[0].mxu0
    %v2157 = vadd.f32 0.0, %v2156
    %v2158 = vpop.f32.mrb[0].mxu0
    %v2159 = vadd.f32 0.0, %v2158
    %v2160 = vpop.f32.mrb[0].mxu0
    %v2161 = vpop.f32.mrb[0].mxu0
    %2162 = vdwg.mxu0
    %v2163 = vadd.f32 %v2076, %v2116
    %v2164 = vadd.f32 %v2077, %v2118
    %v2165 = vadd.f32 %v2078, %v2157
    %v2166 = vadd.f32 %v2079, %v2159
    %v2167 = vmul.f32 %v2163, 0.5
    %v2168 = vtanh.pop %v2167
    %v2169 = vmul.f32 %v2168, 0.5
    %v2170 = vadd.f32 %v2169, 0.5
    %v2171 = vmul.f32 %v2164, 0.5
    %v2172 = vtanh.pop %v2171
    %v2173 = vmul.f32 %v2172, 0.5
    %v2174 = vadd.f32 %v2173, 0.5
    %v2175 = vtanh.pop %v2165
    %v2176 = vmul.f32 %v2166, 0.5
    %v2177 = vtanh.pop %v2176
    %v2178 = vmul.f32 %v2177, 0.5
    %v2179 = vadd.f32 %v2178, 0.5
    %v2180 = vmul.f32 %v2174, %v2073
    %v2181 = vmul.f32 %v2170, %v2175
    %v2182 = vadd.f32 %v2180, %v2181
    %v2183 = vtanh.pop %v2182
    %v2184 = vmul.f32 %v2179, %v2183
    %s2185 = scalar_lea.vmem %s2, 12
    %v2186 = vld [vmem:[%s2185] sm:$0xf]
    %v2187 = vunpack.c.l.bf16 %v2186
    %v2188 = vsub.f32 %v2184, %v2070
    %v2189 = vmul.f32 %v2187, %v2188
    %v2190 = vadd.f32 %v2070, %v2189
    %v2191 = vsub.f32 %v2182, %v2073
    %v2192 = vmul.f32 %v2187, %v2191
    %v2193 = vadd.f32 %v2073, %v2192
    %s2194 = smul.addr %s1281, 8
    %s2195 = scalar_lea.vmem [#allocation3], %s2194
    %v2196 = vld [vmem:[%s2195] sm:$0xff]
    %v2197 = vld [vmem:[%s2195 + $0x8] sm:$0xff]
    %v2198 = vld [vmem:[%s2195 + $0x10] sm:$0xff]
    %v2199 = vld [vmem:[%s2195 + $0x18] sm:$0xff]
    %v2200 = vpack.c.bf16 %v2190, %v2190
    %2201 = vmatprep.subr.bf16.mxu0 %v1659
    %2202 = vmatpush1.bf16.msra.mxu0 %v1658
    %2203 = vmatprep.subr.bf16.mxu0 %v1663
    %2204 = vmatpush1.bf16.msra.mxu0 %v1662
    %2205 = vmatprep.subr.bf16.mxu0 %v1667
    %2206 = vmatpush1.bf16.msra.mxu0 %v1666
    %2207 = vmatprep.subr.bf16.mxu0 %v1671
    %2208 = vmatpush1.bf16.msra.mxu0 %v1670
    %2209 = vmatprep.subr.bf16.mxu0 %v1675
    %2210 = vmatpush1.bf16.msra.mxu0 %v1674
    %2211 = vmatprep.subr.bf16.mxu0 %v1679
    %2212 = vmatpush1.bf16.msra.mxu0 %v1678
    %2213 = vmatprep.subr.bf16.mxu0 %v1683
    %2214 = vmatpush1.bf16.msra.mxu0 %v1682
    %2215 = vmatprep.subr.bf16.mxu0 %v1687
    %2216 = vmatpush1.bf16.msra.mxu0 %v1686
    %2217 = vmatprep.subr.bf16.mxu0 0
    %2218 = vmatpush1.bf16.msra.mxu0 0
    %2219 = vmatprep.subr.bf16.mxu0 0
    %2220 = vmatpush1.bf16.msra.mxu0 0
    %2221 = vmatprep.subr.bf16.mxu0 0
    %2222 = vmatpush1.bf16.msra.mxu0 0
    %2223 = vmatprep.subr.bf16.mxu0 0
    %2224 = vmatpush1.bf16.msra.mxu0 0
    %2225 = vmatprep.subr.bf16.mxu0 0
    %2226 = vmatpush1.bf16.msra.mxu0 0
    %2227 = vmatprep.subr.bf16.mxu0 0
    %2228 = vmatpush1.bf16.msra.mxu0 0
    %2229 = vmatprep.subr.bf16.mxu0 0
    %2230 = vmatpush1.bf16.msra.mxu0 0
    %2231 = vmatprep.subr.bf16.mxu0 0
    %2232 = vmatpush1.bf16.msra.mxu0 0
    %2233 = vmatprep.mubr.bf16.mxu0 0
    %2234 = vmatmul.mubr.bf16.gmra.mrb[0].mxu0 %v2200
    %v2235 = vpop.f32.mrb[0].mxu0
    %v2236 = vadd.f32 0.0, %v2235
    %v2237 = vpop.f32.mrb[0].mxu0
    %v2238 = vadd.f32 0.0, %v2237
    %v2239 = vpop.f32.mrb[0].mxu0
    %v2240 = vpop.f32.mrb[0].mxu0
    %2241 = vdwg.mxu0
    %2242 = vmatprep.subr.bf16.mxu0 %v1661
    %2243 = vmatpush1.bf16.msra.mxu0 %v1660
    %2244 = vmatprep.subr.bf16.mxu0 %v1665
    %2245 = vmatpush1.bf16.msra.mxu0 %v1664
    %2246 = vmatprep.subr.bf16.mxu0 %v1669
    %2247 = vmatpush1.bf16.msra.mxu0 %v1668
    %2248 = vmatprep.subr.bf16.mxu0 %v1673
    %2249 = vmatpush1.bf16.msra.mxu0 %v1672
    %2250 = vmatprep.subr.bf16.mxu0 %v1677
    %2251 = vmatpush1.bf16.msra.mxu0 %v1676
    %2252 = vmatprep.subr.bf16.mxu0 %v1681
    %2253 = vmatpush1.bf16.msra.mxu0 %v1680
    %2254 = vmatprep.subr.bf16.mxu0 %v1685
    %2255 = vmatpush1.bf16.msra.mxu0 %v1684
    %2256 = vmatprep.subr.bf16.mxu0 %v1689
    %2257 = vmatpush1.bf16.msra.mxu0 %v1688
    %2258 = vmatprep.subr.bf16.mxu0 0
    %2259 = vmatpush1.bf16.msra.mxu0 0
    %2260 = vmatprep.subr.bf16.mxu0 0
    %2261 = vmatpush1.bf16.msra.mxu0 0
    %2262 = vmatprep.subr.bf16.mxu0 0
    %2263 = vmatpush1.bf16.msra.mxu0 0
    %2264 = vmatprep.subr.bf16.mxu0 0
    %2265 = vmatpush1.bf16.msra.mxu0 0
    %2266 = vmatprep.subr.bf16.mxu0 0
    %2267 = vmatpush1.bf16.msra.mxu0 0
    %2268 = vmatprep.subr.bf16.mxu0 0
    %2269 = vmatpush1.bf16.msra.mxu0 0
    %2270 = vmatprep.subr.bf16.mxu0 0
    %2271 = vmatpush1.bf16.msra.mxu0 0
    %2272 = vmatprep.subr.bf16.mxu0 0
    %2273 = vmatpush1.bf16.msra.mxu0 0
    %2274 = vmatprep.mubr.bf16.mxu0 0
    %2275 = vmatmul.mubr.bf16.gmra.mrb[0].mxu0 %v2200
    %v2276 = vpop.f32.mrb[0].mxu0
    %v2277 = vadd.f32 0.0, %v2276
    %v2278 = vpop.f32.mrb[0].mxu0
    %v2279 = vadd.f32 0.0, %v2278
    %v2280 = vpop.f32.mrb[0].mxu0
    %v2281 = vpop.f32.mrb[0].mxu0
    %2282 = vdwg.mxu0
    %v2283 = vadd.f32 %v2196, %v2236
    %v2284 = vadd.f32 %v2197, %v2238
    %v2285 = vadd.f32 %v2198, %v2277
    %v2286 = vadd.f32 %v2199, %v2279
    %v2287 = vmul.f32 %v2283, 0.5
    %v2288 = vtanh.pop %v2287
    %v2289 = vmul.f32 %v2288, 0.5
    %v2290 = vadd.f32 %v2289, 0.5
    %v2291 = vmul.f32 %v2284, 0.5
    %v2292 = vtanh.pop %v2291
    %v2293 = vmul.f32 %v2292, 0.5
    %v2294 = vadd.f32 %v2293, 0.5
    %v2295 = vtanh.pop %v2285
    %v2296 = vmul.f32 %v2286, 0.5
    %v2297 = vtanh.pop %v2296
    %v2298 = vmul.f32 %v2297, 0.5
    %v2299 = vadd.f32 %v2298, 0.5
    %v2300 = vmul.f32 %v2294, %v2193
    %v2301 = vmul.f32 %v2290, %v2295
    %v2302 = vadd.f32 %v2300, %v2301
    %v2303 = vtanh.pop %v2302
    %v2304 = vmul.f32 %v2299, %v2303
    %s2305 = scalar_lea.vmem %s2, 16
    %v2306 = vld [vmem:[%s2305] sm:$0xf]
    %v2307 = vunpack.c.l.bf16 %v2306
    %v2308 = vsub.f32 %v2304, %v2190
    %v2309 = vmul.f32 %v2307, %v2308
    %v2310 = vadd.f32 %v2190, %v2309
    %v2311 = vsub.f32 %v2302, %v2193
    %v2312 = vmul.f32 %v2307, %v2311
    %v2313 = vadd.f32 %v2193, %v2312
    %s2314 = smul.addr %s1402, 8
    %s2315 = scalar_lea.vmem [#allocation3], %s2314
    %v2316 = vld [vmem:[%s2315] sm:$0xff]
    %v2317 = vld [vmem:[%s2315 + $0x8] sm:$0xff]
    %v2318 = vld [vmem:[%s2315 + $0x10] sm:$0xff]
    %v2319 = vld [vmem:[%s2315 + $0x18] sm:$0xff]
    %v2320 = vpack.c.bf16 %v2310, %v2310
    %2321 = vmatprep.subr.bf16.mxu0 %v1659
    %2322 = vmatpush1.bf16.msra.mxu0 %v1658
    %2323 = vmatprep.subr.bf16.mxu0 %v1663
    %2324 = vmatpush1.bf16.msra.mxu0 %v1662
    %2325 = vmatprep.subr.bf16.mxu0 %v1667
    %2326 = vmatpush1.bf16.msra.mxu0 %v1666
    %2327 = vmatprep.subr.bf16.mxu0 %v1671
    %2328 = vmatpush1.bf16.msra.mxu0 %v1670
    %2329 = vmatprep.subr.bf16.mxu0 %v1675
    %2330 = vmatpush1.bf16.msra.mxu0 %v1674
    %2331 = vmatprep.subr.bf16.mxu0 %v1679
    %2332 = vmatpush1.bf16.msra.mxu0 %v1678
    %2333 = vmatprep.subr.bf16.mxu0 %v1683
    %2334 = vmatpush1.bf16.msra.mxu0 %v1682
    %2335 = vmatprep.subr.bf16.mxu0 %v1687
    %2336 = vmatpush1.bf16.msra.mxu0 %v1686
    %2337 = vmatprep.subr.bf16.mxu0 0
    %2338 = vmatpush1.bf16.msra.mxu0 0
    %2339 = vmatprep.subr.bf16.mxu0 0
    %2340 = vmatpush1.bf16.msra.mxu0 0
    %2341 = vmatprep.subr.bf16.mxu0 0
    %2342 = vmatpush1.bf16.msra.mxu0 0
    %2343 = vmatprep.subr.bf16.mxu0 0
    %2344 = vmatpush1.bf16.msra.mxu0 0
    %2345 = vmatprep.subr.bf16.mxu0 0
    %2346 = vmatpush1.bf16.msra.mxu0 0
    %2347 = vmatprep.subr.bf16.mxu0 0
    %2348 = vmatpush1.bf16.msra.mxu0 0
    %2349 = vmatprep.subr.bf16.mxu0 0
    %2350 = vmatpush1.bf16.msra.mxu0 0
    %2351 = vmatprep.subr.bf16.mxu0 0
    %2352 = vmatpush1.bf16.msra.mxu0 0
    %2353 = vmatprep.mubr.bf16.mxu0 0
    %2354 = vmatmul.mubr.bf16.gmra.mrb[0].mxu0 %v2320
    %v2355 = vpop.f32.mrb[0].mxu0
    %v2356 = vadd.f32 0.0, %v2355
    %v2357 = vpop.f32.mrb[0].mxu0
    %v2358 = vadd.f32 0.0, %v2357
    %v2359 = vpop.f32.mrb[0].mxu0
    %v2360 = vpop.f32.mrb[0].mxu0
    %2361 = vdwg.mxu0
    %2362 = vmatprep.subr.bf16.mxu0 %v1661
    %2363 = vmatpush1.bf16.msra.mxu0 %v1660
    %2364 = vmatprep.subr.bf16.mxu0 %v1665
    %2365 = vmatpush1.bf16.msra.mxu0 %v1664
    %2366 = vmatprep.subr.bf16.mxu0 %v1669
    %2367 = vmatpush1.bf16.msra.mxu0 %v1668
    %2368 = vmatprep.subr.bf16.mxu0 %v1673
    %2369 = vmatpush1.bf16.msra.mxu0 %v1672
    %2370 = vmatprep.subr.bf16.mxu0 %v1677
    %2371 = vmatpush1.bf16.msra.mxu0 %v1676
    %2372 = vmatprep.subr.bf16.mxu0 %v1681
    %2373 = vmatpush1.bf16.msra.mxu0 %v1680
    %2374 = vmatprep.subr.bf16.mxu0 %v1685
    %2375 = vmatpush1.bf16.msra.mxu0 %v1684
    %2376 = vmatprep.subr.bf16.mxu0 %v1689
    %2377 = vmatpush1.bf16.msra.mxu0 %v1688
    %2378 = vmatprep.subr.bf16.mxu0 0
    %2379 = vmatpush1.bf16.msra.mxu0 0
    %2380 = vmatprep.subr.bf16.mxu0 0
    %2381 = vmatpush1.bf16.msra.mxu0 0
    %2382 = vmatprep.subr.bf16.mxu0 0
    %2383 = vmatpush1.bf16.msra.mxu0 0
    %2384 = vmatprep.subr.bf16.mxu0 0
    %2385 = vmatpush1.bf16.msra.mxu0 0
    %2386 = vmatprep.subr.bf16.mxu0 0
    %2387 = vmatpush1.bf16.msra.mxu0 0
    %2388 = vmatprep.subr.bf16.mxu0 0
    %2389 = vmatpush1.bf16.msra.mxu0 0
    %2390 = vmatprep.subr.bf16.mxu0 0
    %2391 = vmatpush1.bf16.msra.mxu0 0
    %2392 = vmatprep.subr.bf16.mxu0 0
    %2393 = vmatpush1.bf16.msra.mxu0 0
    %2394 = vmatprep.mubr.bf16.mxu0 0
    %2395 = vmatmul.mubr.bf16.gmra.mrb[0].mxu0 %v2320
    %v2396 = vpop.f32.mrb[0].mxu0
    %v2397 = vadd.f32 0.0, %v2396
    %v2398 = vpop.f32.mrb[0].mxu0
    %v2399 = vadd.f32 0.0, %v2398
    %v2400 = vpop.f32.mrb[0].mxu0
    %v2401 = vpop.f32.mrb[0].mxu0
    %2402 = vdwg.mxu0
    %v2403 = vadd.f32 %v2316, %v2356
    %v2404 = vadd.f32 %v2317, %v2358
    %v2405 = vadd.f32 %v2318, %v2397
    %v2406 = vadd.f32 %v2319, %v2399
    %v2407 = vmul.f32 %v2403, 0.5
    %v2408 = vtanh.pop %v2407
    %v2409 = vmul.f32 %v2408, 0.5
    %v2410 = vadd.f32 %v2409, 0.5
    %v2411 = vmul.f32 %v2404, 0.5
    %v2412 = vtanh.pop %v2411
    %v2413 = vmul.f32 %v2412, 0.5
    %v2414 = vadd.f32 %v2413, 0.5
    %v2415 = vtanh.pop %v2405
    %v2416 = vmul.f32 %v2406, 0.5
    %v2417 = vtanh.pop %v2416
    %v2418 = vmul.f32 %v2417, 0.5
    %v2419 = vadd.f32 %v2418, 0.5
    %v2420 = vmul.f32 %v2414, %v2313
    %v2421 = vmul.f32 %v2410, %v2415
    %v2422 = vadd.f32 %v2420, %v2421
    %v2423 = vtanh.pop %v2422
    %v2424 = vmul.f32 %v2419, %v2423
    %s2425 = scalar_lea.vmem %s2, 20
    %v2426 = vld [vmem:[%s2425] sm:$0xf]
    %v2427 = vunpack.c.l.bf16 %v2426
    %v2428 = vsub.f32 %v2424, %v2310
    %v2429 = vmul.f32 %v2427, %v2428
    %v2430 = vadd.f32 %v2310, %v2429
    %v2431 = vsub.f32 %v2422, %v2313
    %v2432 = vmul.f32 %v2427, %v2431
    %v2433 = vadd.f32 %v2313, %v2432
    %s2434 = smul.u32 6, 4
    %s2435 = smul.addr %s2434, 8
    %s2436 = scalar_lea.vmem [#allocation3], %s2435
    %v2437 = vld [vmem:[%s2436] sm:$0xff]
    %v2438 = vld [vmem:[%s2436 + $0x8] sm:$0xff]
    %v2439 = vld [vmem:[%s2436 + $0x10] sm:$0xff]
    %v2440 = vld [vmem:[%s2436 + $0x18] sm:$0xff]
    %v2441 = vpack.c.bf16 %v2430, %v2430
    %2442 = vmatprep.subr.bf16.mxu0 %v1659
    %2443 = vmatpush1.bf16.msra.mxu0 %v1658
    %2444 = vmatprep.subr.bf16.mxu0 %v1663
    %2445 = vmatpush1.bf16.msra.mxu0 %v1662
    %2446 = vmatprep.subr.bf16.mxu0 %v1667
    %2447 = vmatpush1.bf16.msra.mxu0 %v1666
    %2448 = vmatprep.subr.bf16.mxu0 %v1671
    %2449 = vmatpush1.bf16.msra.mxu0 %v1670
    %2450 = vmatprep.subr.bf16.mxu0 %v1675
    %2451 = vmatpush1.bf16.msra.mxu0 %v1674
    %2452 = vmatprep.subr.bf16.mxu0 %v1679
    %2453 = vmatpush1.bf16.msra.mxu0 %v1678
    %2454 = vmatprep.subr.bf16.mxu0 %v1683
    %2455 = vmatpush1.bf16.msra.mxu0 %v1682
    %2456 = vmatprep.subr.bf16.mxu0 %v1687
    %2457 = vmatpush1.bf16.msra.mxu0 %v1686
    %2458 = vmatprep.subr.bf16.mxu0 0
    %2459 = vmatpush1.bf16.msra.mxu0 0
    %2460 = vmatprep.subr.bf16.mxu0 0
    %2461 = vmatpush1.bf16.msra.mxu0 0
    %2462 = vmatprep.subr.bf16.mxu0 0
    %2463 = vmatpush1.bf16.msra.mxu0 0
    %2464 = vmatprep.subr.bf16.mxu0 0
    %2465 = vmatpush1.bf16.msra.mxu0 0
    %2466 = vmatprep.subr.bf16.mxu0 0
    %2467 = vmatpush1.bf16.msra.mxu0 0
    %2468 = vmatprep.subr.bf16.mxu0 0
    %2469 = vmatpush1.bf16.msra.mxu0 0
    %2470 = vmatprep.subr.bf16.mxu0 0
    %2471 = vmatpush1.bf16.msra.mxu0 0
    %2472 = vmatprep.subr.bf16.mxu0 0
    %2473 = vmatpush1.bf16.msra.mxu0 0
    %2474 = vmatprep.mubr.bf16.mxu0 0
    %2475 = vmatmul.mubr.bf16.gmra.mrb[0].mxu0 %v2441
    %v2476 = vpop.f32.mrb[0].mxu0
    %v2477 = vadd.f32 0.0, %v2476
    %v2478 = vpop.f32.mrb[0].mxu0
    %v2479 = vadd.f32 0.0, %v2478
    %v2480 = vpop.f32.mrb[0].mxu0
    %v2481 = vpop.f32.mrb[0].mxu0
    %2482 = vdwg.mxu0
    %2483 = vmatprep.subr.bf16.mxu0 %v1661
    %2484 = vmatpush1.bf16.msra.mxu0 %v1660
    %2485 = vmatprep.subr.bf16.mxu0 %v1665
    %2486 = vmatpush1.bf16.msra.mxu0 %v1664
    %2487 = vmatprep.subr.bf16.mxu0 %v1669
    %2488 = vmatpush1.bf16.msra.mxu0 %v1668
    %2489 = vmatprep.subr.bf16.mxu0 %v1673
    %2490 = vmatpush1.bf16.msra.mxu0 %v1672
    %2491 = vmatprep.subr.bf16.mxu0 %v1677
    %2492 = vmatpush1.bf16.msra.mxu0 %v1676
    %2493 = vmatprep.subr.bf16.mxu0 %v1681
    %2494 = vmatpush1.bf16.msra.mxu0 %v1680
    %2495 = vmatprep.subr.bf16.mxu0 %v1685
    %2496 = vmatpush1.bf16.msra.mxu0 %v1684
    %2497 = vmatprep.subr.bf16.mxu0 %v1689
    %2498 = vmatpush1.bf16.msra.mxu0 %v1688
    %2499 = vmatprep.subr.bf16.mxu0 0
    %2500 = vmatpush1.bf16.msra.mxu0 0
    %2501 = vmatprep.subr.bf16.mxu0 0
    %2502 = vmatpush1.bf16.msra.mxu0 0
    %2503 = vmatprep.subr.bf16.mxu0 0
    %2504 = vmatpush1.bf16.msra.mxu0 0
    %2505 = vmatprep.subr.bf16.mxu0 0
    %2506 = vmatpush1.bf16.msra.mxu0 0
    %2507 = vmatprep.subr.bf16.mxu0 0
    %2508 = vmatpush1.bf16.msra.mxu0 0
    %2509 = vmatprep.subr.bf16.mxu0 0
    %2510 = vmatpush1.bf16.msra.mxu0 0
    %2511 = vmatprep.subr.bf16.mxu0 0
    %2512 = vmatpush1.bf16.msra.mxu0 0
    %2513 = vmatprep.subr.bf16.mxu0 0
    %2514 = vmatpush1.bf16.msra.mxu0 0
    %2515 = vmatprep.mubr.bf16.mxu0 0
    %2516 = vmatmul.mubr.bf16.gmra.mrb[0].mxu0 %v2441
    %v2517 = vpop.f32.mrb[0].mxu0
    %v2518 = vadd.f32 0.0, %v2517
    %v2519 = vpop.f32.mrb[0].mxu0
    %v2520 = vadd.f32 0.0, %v2519
    %v2521 = vpop.f32.mrb[0].mxu0
    %v2522 = vpop.f32.mrb[0].mxu0
    %2523 = vdwg.mxu0
    %v2524 = vadd.f32 %v2437, %v2477
    %v2525 = vadd.f32 %v2438, %v2479
    %v2526 = vadd.f32 %v2439, %v2518
    %v2527 = vadd.f32 %v2440, %v2520
    %v2528 = vmul.f32 %v2524, 0.5
    %v2529 = vtanh.pop %v2528
    %v2530 = vmul.f32 %v2529, 0.5
    %v2531 = vadd.f32 %v2530, 0.5
    %v2532 = vmul.f32 %v2525, 0.5
    %v2533 = vtanh.pop %v2532
    %v2534 = vmul.f32 %v2533, 0.5
    %v2535 = vadd.f32 %v2534, 0.5
    %v2536 = vtanh.pop %v2526
    %v2537 = vmul.f32 %v2527, 0.5
    %v2538 = vtanh.pop %v2537
    %v2539 = vmul.f32 %v2538, 0.5
    %v2540 = vadd.f32 %v2539, 0.5
    %v2541 = vmul.f32 %v2535, %v2433
    %v2542 = vmul.f32 %v2531, %v2536
    %v2543 = vadd.f32 %v2541, %v2542
    %v2544 = vtanh.pop %v2543
    %v2545 = vmul.f32 %v2540, %v2544
    %s2546 = scalar_lea.vmem %s2, 24
    %v2547 = vld [vmem:[%s2546] sm:$0xf]
    %v2548 = vunpack.c.l.bf16 %v2547
    %v2549 = vsub.f32 %v2545, %v2430
    %v2550 = vmul.f32 %v2548, %v2549
    %v2551 = vadd.f32 %v2430, %v2550
    %v2552 = vsub.f32 %v2543, %v2433
    %v2553 = vmul.f32 %v2548, %v2552
    %v2554 = vadd.f32 %v2433, %v2553
    %s2555 = smul.u32 7, 4
    %s2556 = smul.addr %s2555, 8
    %s2557 = scalar_lea.vmem [#allocation3], %s2556
    %v2558 = vld [vmem:[%s2557] sm:$0xff]
    %v2559 = vld [vmem:[%s2557 + $0x8] sm:$0xff]
    %v2560 = vld [vmem:[%s2557 + $0x10] sm:$0xff]
    %v2561 = vld [vmem:[%s2557 + $0x18] sm:$0xff]
    %v2562 = vpack.c.bf16 %v2551, %v2551
    %2563 = vmatprep.subr.bf16.mxu0 %v1659
    %2564 = vmatpush1.bf16.msra.mxu0 %v1658
    %2565 = vmatprep.subr.bf16.mxu0 %v1663
    %2566 = vmatpush1.bf16.msra.mxu0 %v1662
    %2567 = vmatprep.subr.bf16.mxu0 %v1667
    %2568 = vmatpush1.bf16.msra.mxu0 %v1666
    %2569 = vmatprep.subr.bf16.mxu0 %v1671
    %2570 = vmatpush1.bf16.msra.mxu0 %v1670
    %2571 = vmatprep.subr.bf16.mxu0 %v1675
    %2572 = vmatpush1.bf16.msra.mxu0 %v1674
    %2573 = vmatprep.subr.bf16.mxu0 %v1679
    %2574 = vmatpush1.bf16.msra.mxu0 %v1678
    %2575 = vmatprep.subr.bf16.mxu0 %v1683
    %2576 = vmatpush1.bf16.msra.mxu0 %v1682
    %2577 = vmatprep.subr.bf16.mxu0 %v1687
    %2578 = vmatpush1.bf16.msra.mxu0 %v1686
    %2579 = vmatprep.subr.bf16.mxu0 0
    %2580 = vmatpush1.bf16.msra.mxu0 0
    %2581 = vmatprep.subr.bf16.mxu0 0
    %2582 = vmatpush1.bf16.msra.mxu0 0
    %2583 = vmatprep.subr.bf16.mxu0 0
    %2584 = vmatpush1.bf16.msra.mxu0 0
    %2585 = vmatprep.subr.bf16.mxu0 0
    %2586 = vmatpush1.bf16.msra.mxu0 0
    %2587 = vmatprep.subr.bf16.mxu0 0
    %2588 = vmatpush1.bf16.msra.mxu0 0
    %2589 = vmatprep.subr.bf16.mxu0 0
    %2590 = vmatpush1.bf16.msra.mxu0 0
    %2591 = vmatprep.subr.bf16.mxu0 0
    %2592 = vmatpush1.bf16.msra.mxu0 0
    %2593 = vmatprep.subr.bf16.mxu0 0
    %2594 = vmatpush1.bf16.msra.mxu0 0
    %2595 = vmatprep.mubr.bf16.mxu0 0
    %2596 = vmatmul.mubr.bf16.gmra.mrb[0].mxu0 %v2562
    %v2597 = vpop.f32.mrb[0].mxu0
    %v2598 = vadd.f32 0.0, %v2597
    %v2599 = vpop.f32.mrb[0].mxu0
    %v2600 = vadd.f32 0.0, %v2599
    %v2601 = vpop.f32.mrb[0].mxu0
    %v2602 = vpop.f32.mrb[0].mxu0
    %2603 = vdwg.mxu0
    %2604 = vmatprep.subr.bf16.mxu0 %v1661
    %2605 = vmatpush1.bf16.msra.mxu0 %v1660
    %2606 = vmatprep.subr.bf16.mxu0 %v1665
    %2607 = vmatpush1.bf16.msra.mxu0 %v1664
    %2608 = vmatprep.subr.bf16.mxu0 %v1669
    %2609 = vmatpush1.bf16.msra.mxu0 %v1668
    %2610 = vmatprep.subr.bf16.mxu0 %v1673
    %2611 = vmatpush1.bf16.msra.mxu0 %v1672
    %2612 = vmatprep.subr.bf16.mxu0 %v1677
    %2613 = vmatpush1.bf16.msra.mxu0 %v1676
    %2614 = vmatprep.subr.bf16.mxu0 %v1681
    %2615 = vmatpush1.bf16.msra.mxu0 %v1680
    %2616 = vmatprep.subr.bf16.mxu0 %v1685
    %2617 = vmatpush1.bf16.msra.mxu0 %v1684
    %2618 = vmatprep.subr.bf16.mxu0 %v1689
    %2619 = vmatpush1.bf16.msra.mxu0 %v1688
    %2620 = vmatprep.subr.bf16.mxu0 0
    %2621 = vmatpush1.bf16.msra.mxu0 0
    %2622 = vmatprep.subr.bf16.mxu0 0
    %2623 = vmatpush1.bf16.msra.mxu0 0
    %2624 = vmatprep.subr.bf16.mxu0 0
    %2625 = vmatpush1.bf16.msra.mxu0 0
    %2626 = vmatprep.subr.bf16.mxu0 0
    %2627 = vmatpush1.bf16.msra.mxu0 0
    %2628 = vmatprep.subr.bf16.mxu0 0
    %2629 = vmatpush1.bf16.msra.mxu0 0
    %2630 = vmatprep.subr.bf16.mxu0 0
    %2631 = vmatpush1.bf16.msra.mxu0 0
    %2632 = vmatprep.subr.bf16.mxu0 0
    %2633 = vmatpush1.bf16.msra.mxu0 0
    %2634 = vmatprep.subr.bf16.mxu0 0
    %2635 = vmatpush1.bf16.msra.mxu0 0
    %2636 = vmatprep.mubr.bf16.mxu0 0
    %2637 = vmatmul.mubr.bf16.gmra.mrb[0].mxu0 %v2562
    %v2638 = vpop.f32.mrb[0].mxu0
    %v2639 = vadd.f32 0.0, %v2638
    %v2640 = vpop.f32.mrb[0].mxu0
    %v2641 = vadd.f32 0.0, %v2640
    %v2642 = vpop.f32.mrb[0].mxu0
    %v2643 = vpop.f32.mrb[0].mxu0
    %2644 = vdwg.mxu0
    %v2645 = vadd.f32 %v2558, %v2598
    %v2646 = vadd.f32 %v2559, %v2600
    %v2647 = vadd.f32 %v2560, %v2639
    %v2648 = vadd.f32 %v2561, %v2641
    %v2649 = vmul.f32 %v2645, 0.5
    %v2650 = vtanh.pop %v2649
    %v2651 = vmul.f32 %v2650, 0.5
    %v2652 = vadd.f32 %v2651, 0.5
    %v2653 = vmul.f32 %v2646, 0.5
    %v2654 = vtanh.pop %v2653
    %v2655 = vmul.f32 %v2654, 0.5
    %v2656 = vadd.f32 %v2655, 0.5
    %v2657 = vtanh.pop %v2647
    %v2658 = vmul.f32 %v2648, 0.5
    %v2659 = vtanh.pop %v2658
    %v2660 = vmul.f32 %v2659, 0.5
    %v2661 = vadd.f32 %v2660, 0.5
    %v2662 = vmul.f32 %v2656, %v2554
    %v2663 = vmul.f32 %v2652, %v2657
    %v2664 = vadd.f32 %v2662, %v2663
    %v2665 = vtanh.pop %v2664
    %v2666 = vmul.f32 %v2661, %v2665
    %s2667 = scalar_lea.vmem %s2, 28
    %v2668 = vld [vmem:[%s2667] sm:$0xf]
    %v2669 = vunpack.c.l.bf16 %v2668
    %v2670 = vsub.f32 %v2666, %v2551
    %v2671 = vmul.f32 %v2669, %v2670
    %v2672 = vadd.f32 %v2551, %v2671
    %v2673 = vld [vmem:[%s10] sm:$0xff]
    %v2674 = vld [vmem:[%s10 + $0x8] sm:$0xff]
    %v2675 = vld [vmem:[%s10 + $0x10] sm:$0xff]
    %v2676 = vld [vmem:[%s10 + $0x18] sm:$0xff]
    %v2677 = vld [vmem:[%s10 + $0x20] sm:$0xff]
    %v2678 = vld [vmem:[%s10 + $0x28] sm:$0xff]
    %v2679 = vld [vmem:[%s10 + $0x30] sm:$0xff]
    %v2680 = vld [vmem:[%s10 + $0x38] sm:$0xff]
    %v2681 = vld [vmem:[%s10 + $0x40] sm:$0xff]
    %v2682 = vld [vmem:[%s10 + $0x48] sm:$0xff]
    %v2683 = vld [vmem:[%s10 + $0x50] sm:$0xff]
    %v2684 = vld [vmem:[%s10 + $0x58] sm:$0xff]
    %v2685 = vld [vmem:[%s10 + $0x60] sm:$0xff]
    %v2686 = vld [vmem:[%s10 + $0x68] sm:$0xff]
    %v2687 = vld [vmem:[%s10 + $0x70] sm:$0xff]
    %v2688 = vld [vmem:[%s10 + $0x78] sm:$0xff]
    %v2689 = vld [vmem:[%s11] sm:$0x1]
    %v2691 = vlaneseq
    %v2692 = vshrl.u32 %v2691, 7
    %v2693 = vsub.s32 0, %v2692
    %v2694 = vrot.slane %v2689, %v2693
    %2696 = vmatprep.subr.mxu0 0.0
    %2697 = vmatpush1.msra.mxu0 %v2673
    %2698 = vmatprep.subr.mxu0 0.0
    %2699 = vmatpush1.msra.mxu0 %v2674
    %2700 = vmatprep.subr.mxu0 0.0
    %2701 = vmatpush1.msra.mxu0 %v2675
    %2702 = vmatprep.subr.mxu0 0.0
    %2703 = vmatpush1.msra.mxu0 %v2676
    %2704 = vmatprep.subr.mxu0 0.0
    %2705 = vmatpush1.msra.mxu0 %v2677
    %2706 = vmatprep.subr.mxu0 0.0
    %2707 = vmatpush1.msra.mxu0 %v2678
    %2708 = vmatprep.subr.mxu0 0.0
    %2709 = vmatpush1.msra.mxu0 %v2679
    %2710 = vmatprep.subr.mxu0 0.0
    %2711 = vmatpush1.msra.mxu0 %v2680
    %2712 = vmatprep.subr.mxu0 0.0
    %2713 = vmatpush1.msra.mxu0 %v2681
    %2714 = vmatprep.subr.mxu0 0.0
    %2715 = vmatpush1.msra.mxu0 %v2682
    %2716 = vmatprep.subr.mxu0 0.0
    %2717 = vmatpush1.msra.mxu0 %v2683
    %2718 = vmatprep.subr.mxu0 0.0
    %2719 = vmatpush1.msra.mxu0 %v2684
    %2720 = vmatprep.subr.mxu0 0.0
    %2721 = vmatpush1.msra.mxu0 %v2685
    %2722 = vmatprep.subr.mxu0 0.0
    %2723 = vmatpush1.msra.mxu0 %v2686
    %2724 = vmatprep.subr.mxu0 0.0
    %2725 = vmatpush1.msra.mxu0 %v2687
    %2726 = vmatprep.subr.mxu0 0.0
    %2727 = vmatpush1.msra.mxu0 %v2688
    %2728 = vmatprep.subr.mxu0 0.0
    %2729 = vmatpush1.msra.mxu0 0.0
    %2730 = vmatprep.subr.mxu0 0.0
    %2731 = vmatpush1.msra.mxu0 0.0
    %2732 = vmatprep.subr.mxu0 0.0
    %2733 = vmatpush1.msra.mxu0 0.0
    %2734 = vmatprep.subr.mxu0 0.0
    %2735 = vmatpush1.msra.mxu0 0.0
    %2736 = vmatprep.subr.mxu0 0.0
    %2737 = vmatpush1.msra.mxu0 0.0
    %2738 = vmatprep.subr.mxu0 0.0
    %2739 = vmatpush1.msra.mxu0 0.0
    %2740 = vmatprep.subr.mxu0 0.0
    %2741 = vmatpush1.msra.mxu0 0.0
    %2742 = vmatprep.subr.mxu0 0.0
    %2743 = vmatpush1.msra.mxu0 0.0
    %2744 = vmatprep.subr.mxu0 0.0
    %2745 = vmatpush1.msra.mxu0 0.0
    %2746 = vmatprep.subr.mxu0 0.0
    %2747 = vmatpush1.msra.mxu0 0.0
    %2748 = vmatprep.subr.mxu0 0.0
    %2749 = vmatpush1.msra.mxu0 0.0
    %2750 = vmatprep.subr.mxu0 0.0
    %2751 = vmatpush1.msra.mxu0 0.0
    %2752 = vmatprep.subr.mxu0 0.0
    %2753 = vmatpush1.msra.mxu0 0.0
    %2754 = vmatprep.subr.mxu0 0.0
    %2755 = vmatpush1.msra.mxu0 0.0
    %2756 = vmatprep.subr.mxu0 0.0
    %2757 = vmatpush1.msra.mxu0 0.0
    %2758 = vmatprep.subr.mxu0 0.0
    %2759 = vmatpush1.msra.mxu0 0.0
    %2760 = vmatprep.mubr.f32.mxu0 0.0
    %2761 = vmatmul.mubr.f32.gmra.mrb[0].mxu0 %v2672
    %v2762 = vpop.f32.mrb[0].mxu0
    %v2763 = vadd.f32 %v2694, %v2762
    %v2764 = vpop.f32.mrb[0].mxu0
    %2765 = vdwg.mxu0
    %vm2766 = vcmask 23552
    %2767 = vst.msk [vmem:[%s12] sm:$0xff] %vm2766, %v2763
    // Predicated region
    $region58: #{tpu_custom_call.1} parent=1 // pred_check
      _
    $region59: #{tpu_custom_call.1} parent=1 // pred_check_branch
      %2769 = sbr.rel (0) target = $region61
    $region60: #{tpu_custom_call.1} parent=1 // pred_region
      _
    $region61: #{tpu_custom_call.1} parent=1 // pred_fallthru
      _
    // Predicated region
    $region62: #{tpu_custom_call.1} parent=1 // pred_check
      _
    $region63: #{tpu_custom_call.1} parent=1 // pred_check_branch
      %2771 = sbr.rel (0) target = $region65
    $region64: #{tpu_custom_call.1} parent=1 // pred_region
      _
    $region65: #{tpu_custom_call.1} parent=1 // pred_fallthru
      _
    %2772 = vsyncpa [#allocation5], 1
    %2773 = vsyncpa [#allocation7], 1

</llo_original>
